<compile_context>
chip_gen: v7x
topology: tpu7x:2x2x1
jax: 0.10.0
libtpu: 0.0.40
codegen_flags: <defaults>
</compile_context>

<pallas_src>
import jax
import jax.numpy as jnp
from jax.experimental import pallas as pl
from jax.experimental.pallas import tpu as pltpu


def _round_up(n, m):
    return ((n + m - 1) // m) * m


def _random_u32(shape, salt_u32):
    """Counter-based PRNG: per-element counter + salt, splitmix32-style mixing.

    Pure integer VPU ops -> lowers on TPU (Mosaic) and in interpret mode.
    """
    r = jax.lax.broadcasted_iota(jnp.int32, shape, 0).astype(jnp.uint32)
    c = jax.lax.broadcasted_iota(jnp.int32, shape, 1).astype(jnp.uint32)
    x = r * jnp.uint32(shape[1]) + c
    x = x + salt_u32 * jnp.uint32(0x9E3779B9)
    x = x ^ (x >> 16)
    x = x * jnp.uint32(0x7FEB352D)
    x = x ^ (x >> 15)
    x = x * jnp.uint32(0x846CA68B)
    x = x ^ (x >> 16)
    return x


def _dropout(h, rate, salt_u32):
    """Inverted dropout via integer threshold on raw bits: P(keep) = 1 - rate."""
    threshold = jnp.uint32(int(round(rate * 4294967296.0)))
    bits = _random_u32(h.shape, salt_u32)
    keep = bits >= threshold
    return jnp.where(keep, h * (1.0 / (1.0 - rate)), jnp.zeros_like(h))


def _make_kernel(p1, p2, training):
    def kernel(seed_ref,                     # SMEM (1,) int32
               x_ref,                        # (TB, 896) bf16
               w1_ref, b1_ref,               # (896,256) bf16, (1,256) f32
               w2_ref, b2_ref,               # (256,256) bf16, (1,256) f32
               w3_ref, b3_ref,               # (256,128) bf16, (1,128) f32
               o_ref):                       # (TB, 128) f32
        # Fold the grid index into the seed so each batch tile draws an
        # independent dropout mask.
        salt = (seed_ref[0].astype(jnp.uint32)
                + pl.program_id(0).astype(jnp.uint32) * jnp.uint32(0x85EBCA6B))

        x = x_ref[...]

        # Linear(784->256) + ReLU + Dropout(0.2)   (K zero-padded 784 -> 896)
        h1 = jnp.dot(x, w1_ref[...], preferred_element_type=jnp.float32) + b1_ref[...]
        h1 = jnp.maximum(h1, 0.0)
        if training:
            h1 = _dropout(h1, p1, salt ^ jnp.uint32(0x51ED2701))

        # Linear(256->256) + ReLU + Dropout(0.5)
        h2 = jnp.dot(h1.astype(jnp.bfloat16), w2_ref[...],
                     preferred_element_type=jnp.float32) + b2_ref[...]
        h2 = jnp.maximum(h2, 0.0)
        if training:
            h2 = _dropout(h2, p2, salt ^ jnp.uint32(0xA3D95E1B))

        # Linear(256->10), output zero-padded to 128 lanes (lane-dense stores).
        o_ref[...] = (jnp.dot(h2.astype(jnp.bfloat16), w3_ref[...],
                              preferred_element_type=jnp.float32) + b3_ref[...])
    return kernel


def dropout_model2_forward(x_nchw, params, seed, *, training=True):
    """x_nchw: (B, 1, 28, 28) float32. Returns (B, 10) float32 logits."""
    w1, b1, w2, b2, w3, b3 = params
    B = x_nchw.shape[0]
    IN, H = w1.shape            # 784, 256
    OUT = w3.shape[1]           # 10

    K_PAD = _round_up(IN, 128)      # 896 = 7*128 -> clean lane / MXU-K tiles
    OUT_PAD = _round_up(OUT, 128)   # 128 -> lane-dense output stores
    TB = 256                        # batch tile: multiple of 256 (MXU M dim)
    B_PAD = _round_up(B, TB)

    # Flatten + pad batch and K, cast MXU operands to bf16 (f32 accumulation).
    x = x_nchw.reshape(B, IN).astype(jnp.float32)
    x = jnp.pad(x, ((0, B_PAD - B), (0, K_PAD - IN))).astype(jnp.bfloat16)

    w1p = jnp.pad(w1, ((0, K_PAD - IN), (0, 0))).astype(jnp.bfloat16)
    w2p = w2.astype(jnp.bfloat16)
    w3p = jnp.pad(w3, ((0, 0), (0, OUT_PAD - OUT))).astype(jnp.bfloat16)
    b3p = jnp.pad(b3, ((0, 0), (0, OUT_PAD - OUT)))

    seed_arr = jnp.asarray([seed], dtype=jnp.int32)
    grid = (B_PAD // TB,)

    out = pl.pallas_call(
        _make_kernel(0.2, 0.5, training),
        out_shape=jax.ShapeDtypeStruct((B_PAD, OUT_PAD), jnp.float32),
        grid=grid,
        in_specs=[
            pl.BlockSpec(memory_space=pltpu.MemorySpace.SMEM),      # seed
            pl.BlockSpec((TB, K_PAD), lambda i: (i, 0)),            # x tile
            pl.BlockSpec((K_PAD, H), lambda i: (0, 0)),             # w1 (resident)
            pl.BlockSpec((1, H), lambda i: (0, 0)),                 # b1
            pl.BlockSpec((H, H), lambda i: (0, 0)),                 # w2
            pl.BlockSpec((1, H), lambda i: (0, 0)),                 # b2
            pl.BlockSpec((H, OUT_PAD), lambda i: (0, 0)),           # w3 (padded)
            pl.BlockSpec((1, OUT_PAD), lambda i: (0, 0)),           # b3 (padded)
        ],
        out_specs=pl.BlockSpec((TB, OUT_PAD), lambda i: (i, 0)),
        compiler_params=pltpu.CompilerParams(
            dimension_semantics=("parallel",)),
    )(seed_arr, x, w1p, b1, w2p, b2, w3p, b3p)

    return out[:B, :OUT]


def init_params(key):
    """PyTorch nn.Linear-style uniform(-1/sqrt(fan_in), +) init.

    Weights stored as (in, out) — transposed vs PyTorch — so the kernel does
    plain x @ W + b on the MXU.
    """
    def linear(key, fan_in, fan_out):
        kw, kb = jax.random.split(key)
        bound = 1.0 / (fan_in ** 0.5)
        w = jax.random.uniform(kw, (fan_in, fan_out), jnp.float32, -bound, bound)
        b = jax.random.uniform(kb, (1, fan_out), jnp.float32, -bound, bound)
        return w, b

    k1, k2, k3 = jax.random.split(key, 3)
    w1, b1 = linear(k1, 784, 256)
    w2, b2 = linear(k2, 256, 256)
    w3, b3 = linear(k3, 256, 10)
    return (w1, b1, w2, b2, w3, b3)


if __name__ == "__main__":
    key = jax.random.PRNGKey(0)
    k_param, k_x = jax.random.split(key)

    params = init_params(k_param)

    # MNIST-like input implied by Linear(784, ...): (B, 1, 28, 28)
    B = 8
    x = jax.random.normal(k_x, (B, 1, 28, 28), dtype=jnp.float32)

    logits = dropout_model2_forward(x, params, seed=42, training=True)
    logits = jax.block_until_ready(logits)

    assert logits.shape == (B, 10), logits.shape
    assert logits.dtype == jnp.float32, logits.dtype
    print("KERNEL_OK")
</pallas_src>

<mosaic_0001>
module attributes {stable_mosaic.version = 11 : i64} {
  func.func @kernel(%arg0: i32, %arg1: memref<1xi32, #tpu.memory_space<smem>>, %arg2: memref<256x896xbf16, #tpu.memory_space<vmem>>, %arg3: memref<896x256xbf16, #tpu.memory_space<vmem>>, %arg4: memref<1x256xf32, #tpu.memory_space<vmem>>, %arg5: memref<256x256xbf16, #tpu.memory_space<vmem>>, %arg6: memref<1x256xf32, #tpu.memory_space<vmem>>, %arg7: memref<256x128xbf16, #tpu.memory_space<vmem>>, %arg8: memref<1x128xf32, #tpu.memory_space<vmem>>, %arg9: memref<256x128xf32, #tpu.memory_space<vmem>>) attributes {dimension_semantics = [#tpu.dimension_semantics<parallel>], iteration_bounds = array<i64: 1>, scalar_prefetch = 0 : i64, scratch_operands = 0 : i64, tpu.core_type = #tpu.core_type<tc>, window_params = [{transform_indices = @transform_0, window_bounds = array<i64: 1>}, {transform_indices = @transform_1, window_bounds = array<i64: 256, 896>}, {pipeline_mode = #tpu.pipeline_mode<synchronous>, transform_indices = @transform_2, window_bounds = array<i64: 896, 256>}, {pipeline_mode = #tpu.pipeline_mode<synchronous>, transform_indices = @transform_3, window_bounds = array<i64: 1, 256>}, {pipeline_mode = #tpu.pipeline_mode<synchronous>, transform_indices = @transform_4, window_bounds = array<i64: 256, 256>}, {pipeline_mode = #tpu.pipeline_mode<synchronous>, transform_indices = @transform_5, window_bounds = array<i64: 1, 256>}, {pipeline_mode = #tpu.pipeline_mode<synchronous>, transform_indices = @transform_6, window_bounds = array<i64: 256, 128>}, {pipeline_mode = #tpu.pipeline_mode<synchronous>, transform_indices = @transform_7, window_bounds = array<i64: 1, 128>}, {transform_indices = @transform_8, window_bounds = array<i64: 256, 128>}]} {
    %c0 = arith.constant 0 : index
    %0 = memref.load %arg1[%c0] : memref<1xi32, #tpu.memory_space<smem>>
    %c-2048144789_i32 = arith.constant -2048144789 : i32
    %1 = arith.muli %arg0, %c-2048144789_i32 : i32
    %2 = arith.addi %0, %1 : i32
    %c0_0 = arith.constant 0 : index
    %c0_1 = arith.constant 0 : index
    %3 = vector.load %arg2[%c0_0, %c0_1] : memref<256x896xbf16, #tpu.memory_space<vmem>>, vector<256x896xbf16>
    %c0_2 = arith.constant 0 : index
    %c0_3 = arith.constant 0 : index
    %4 = vector.load %arg3[%c0_2, %c0_3] : memref<896x256xbf16, #tpu.memory_space<vmem>>, vector<896x256xbf16>
    %cst = arith.constant dense<0.000000e+00> : vector<256x256xf32>
    %5 = tpu.matmul %3, %4, %cst {dimension_numbers = #tpu.dot_dimension_numbers<[1], [0], [0], [1], [0, 0, 1, 1], [], []>} : vector<256x896xbf16>, vector<896x256xbf16>, vector<256x256xf32> -> vector<256x256xf32>
    %c0_4 = arith.constant 0 : index
    %c0_5 = arith.constant 0 : index
    %6 = vector.load %arg4[%c0_4, %c0_5] : memref<1x256xf32, #tpu.memory_space<vmem>>, vector<1x256xf32>
    %7 = vector.broadcast %6 : vector<1x256xf32> to vector<256x256xf32>
    %8 = arith.addf %5, %7 : vector<256x256xf32>
    %cst_6 = arith.constant 0.000000e+00 : f32
    %9 = vector.broadcast %cst_6 : f32 to vector<256x256xf32>
    %10 = arith.maximumf %8, %9 : vector<256x256xf32>
    %c1374496513_i32 = arith.constant 1374496513 : i32
    %11 = arith.xori %2, %c1374496513_i32 : i32
    %12 = tpu.iota {dimensions = array<i32: 0>} : vector<256x256xi32>
    %13 = tpu.iota {dimensions = array<i32: 1>} : vector<256x256xi32>
    %c256_i32 = arith.constant 256 : i32
    %14 = vector.broadcast %c256_i32 : i32 to vector<256x256xi32>
    %15 = arith.muli %12, %14 : vector<256x256xi32>
    %16 = arith.addi %15, %13 : vector<256x256xi32>
    %c-1640531527_i32 = arith.constant -1640531527 : i32
    %17 = arith.muli %11, %c-1640531527_i32 : i32
    %18 = vector.broadcast %17 : i32 to vector<256x256xi32>
    %19 = arith.addi %16, %18 : vector<256x256xi32>
    %c16_i32 = arith.constant 16 : i32
    %20 = vector.broadcast %c16_i32 : i32 to vector<256x256xi32>
    %21 = arith.shrui %19, %20 : vector<256x256xi32>
    %22 = arith.xori %19, %21 : vector<256x256xi32>
    %c2146121005_i32 = arith.constant 2146121005 : i32
    %23 = vector.broadcast %c2146121005_i32 : i32 to vector<256x256xi32>
    %24 = arith.muli %22, %23 : vector<256x256xi32>
    %c15_i32 = arith.constant 15 : i32
    %25 = vector.broadcast %c15_i32 : i32 to vector<256x256xi32>
    %26 = arith.shrui %24, %25 : vector<256x256xi32>
    %27 = arith.xori %24, %26 : vector<256x256xi32>
    %c-2073254261_i32 = arith.constant -2073254261 : i32
    %28 = vector.broadcast %c-2073254261_i32 : i32 to vector<256x256xi32>
    %29 = arith.muli %27, %28 : vector<256x256xi32>
    %c16_i32_7 = arith.constant 16 : i32
    %30 = vector.broadcast %c16_i32_7 : i32 to vector<256x256xi32>
    %31 = arith.shrui %29, %30 : vector<256x256xi32>
    %32 = arith.xori %29, %31 : vector<256x256xi32>
    %c858993459_i32 = arith.constant 858993459 : i32
    %33 = vector.broadcast %c858993459_i32 : i32 to vector<256x256xi32>
    %34 = arith.cmpi uge, %32, %33 : vector<256x256xi32>
    %cst_8 = arith.constant 1.250000e+00 : f32
    %35 = vector.broadcast %cst_8 : f32 to vector<256x256xf32>
    %36 = arith.mulf %10, %35 : vector<256x256xf32>
    %cst_9 = arith.constant 0.000000e+00 : f32
    %37 = vector.broadcast %cst_9 : f32 to vector<256x256xf32>
    %38 = arith.select %34, %36, %37 : vector<256x256xi1>, vector<256x256xf32>
    %39 = arith.truncf %38 : vector<256x256xf32> to vector<256x256xbf16>
    %c0_10 = arith.constant 0 : index
    %c0_11 = arith.constant 0 : index
    %40 = vector.load %arg5[%c0_10, %c0_11] : memref<256x256xbf16, #tpu.memory_space<vmem>>, vector<256x256xbf16>
    %cst_12 = arith.constant dense<0.000000e+00> : vector<256x256xf32>
    %41 = tpu.matmul %39, %40, %cst_12 {dimension_numbers = #tpu.dot_dimension_numbers<[1], [0], [0], [1], [0, 0, 1, 1], [], []>} : vector<256x256xbf16>, vector<256x256xbf16>, vector<256x256xf32> -> vector<256x256xf32>
    %c0_13 = arith.constant 0 : index
    %c0_14 = arith.constant 0 : index
    %42 = vector.load %arg6[%c0_13, %c0_14] : memref<1x256xf32, #tpu.memory_space<vmem>>, vector<1x256xf32>
    %43 = vector.broadcast %42 : vector<1x256xf32> to vector<256x256xf32>
    %44 = arith.addf %41, %43 : vector<256x256xf32>
    %cst_15 = arith.constant 0.000000e+00 : f32
    %45 = vector.broadcast %cst_15 : f32 to vector<256x256xf32>
    %46 = arith.maximumf %44, %45 : vector<256x256xf32>
    %c-1546035685_i32 = arith.constant -1546035685 : i32
    %47 = arith.xori %2, %c-1546035685_i32 : i32
    %48 = tpu.iota {dimensions = array<i32: 0>} : vector<256x256xi32>
    %49 = tpu.iota {dimensions = array<i32: 1>} : vector<256x256xi32>
    %c256_i32_16 = arith.constant 256 : i32
    %50 = vector.broadcast %c256_i32_16 : i32 to vector<256x256xi32>
    %51 = arith.muli %48, %50 : vector<256x256xi32>
    %52 = arith.addi %51, %49 : vector<256x256xi32>
    %c-1640531527_i32_17 = arith.constant -1640531527 : i32
    %53 = arith.muli %47, %c-1640531527_i32_17 : i32
    %54 = vector.broadcast %53 : i32 to vector<256x256xi32>
    %55 = arith.addi %52, %54 : vector<256x256xi32>
    %c16_i32_18 = arith.constant 16 : i32
    %56 = vector.broadcast %c16_i32_18 : i32 to vector<256x256xi32>
    %57 = arith.shrui %55, %56 : vector<256x256xi32>
    %58 = arith.xori %55, %57 : vector<256x256xi32>
    %c2146121005_i32_19 = arith.constant 2146121005 : i32
    %59 = vector.broadcast %c2146121005_i32_19 : i32 to vector<256x256xi32>
    %60 = arith.muli %58, %59 : vector<256x256xi32>
    %c15_i32_20 = arith.constant 15 : i32
    %61 = vector.broadcast %c15_i32_20 : i32 to vector<256x256xi32>
    %62 = arith.shrui %60, %61 : vector<256x256xi32>
    %63 = arith.xori %60, %62 : vector<256x256xi32>
    %c-2073254261_i32_21 = arith.constant -2073254261 : i32
    %64 = vector.broadcast %c-2073254261_i32_21 : i32 to vector<256x256xi32>
    %65 = arith.muli %63, %64 : vector<256x256xi32>
    %c16_i32_22 = arith.constant 16 : i32
    %66 = vector.broadcast %c16_i32_22 : i32 to vector<256x256xi32>
    %67 = arith.shrui %65, %66 : vector<256x256xi32>
    %68 = arith.xori %65, %67 : vector<256x256xi32>
    %c-2147483648_i32 = arith.constant -2147483648 : i32
    %69 = vector.broadcast %c-2147483648_i32 : i32 to vector<256x256xi32>
    %70 = arith.cmpi uge, %68, %69 : vector<256x256xi32>
    %cst_23 = arith.constant 2.000000e+00 : f32
    %71 = vector.broadcast %cst_23 : f32 to vector<256x256xf32>
    %72 = arith.mulf %46, %71 : vector<256x256xf32>
    %cst_24 = arith.constant 0.000000e+00 : f32
    %73 = vector.broadcast %cst_24 : f32 to vector<256x256xf32>
    %74 = arith.select %70, %72, %73 : vector<256x256xi1>, vector<256x256xf32>
    %75 = arith.truncf %74 : vector<256x256xf32> to vector<256x256xbf16>
    %c0_25 = arith.constant 0 : index
    %c0_26 = arith.constant 0 : index
    %76 = vector.load %arg7[%c0_25, %c0_26] : memref<256x128xbf16, #tpu.memory_space<vmem>>, vector<256x128xbf16>
    %cst_27 = arith.constant dense<0.000000e+00> : vector<256x128xf32>
    %77 = tpu.matmul %75, %76, %cst_27 {dimension_numbers = #tpu.dot_dimension_numbers<[1], [0], [0], [1], [0, 0, 1, 1], [], []>} : vector<256x256xbf16>, vector<256x128xbf16>, vector<256x128xf32> -> vector<256x128xf32>
    %c0_28 = arith.constant 0 : index
    %c0_29 = arith.constant 0 : index
    %78 = vector.load %arg8[%c0_28, %c0_29] : memref<1x128xf32, #tpu.memory_space<vmem>>, vector<1x128xf32>
    %79 = vector.broadcast %78 : vector<1x128xf32> to vector<256x128xf32>
    %80 = arith.addf %77, %79 : vector<256x128xf32>
    %c0_30 = arith.constant 0 : index
    %c0_31 = arith.constant 0 : index
    %81 = vector.load %arg9[%c0_30, %c0_31] : memref<256x128xf32, #tpu.memory_space<vmem>>, vector<256x128xf32>
    tpu.vector_store %arg9[%c0_30, %c0_31], %80 {strides = array<i32>} : memref<256x128xf32, #tpu.memory_space<vmem>>, vector<256x128xf32>,
    return
  }
  func.func @transform_0(%arg0: i32) -> i32 {
    %c0_i32 = arith.constant 0 : i32
    %c0_i32_0 = arith.constant 0 : i32
    return %c0_i32 : i32
  }
  func.func @transform_1(%arg0: i32) -> (i32, i32) {
    %c0_i32 = arith.constant 0 : i32
    %c0_i32_0 = arith.constant 0 : i32
    return %arg0, %c0_i32 : i32, i32
  }
  func.func @transform_2(%arg0: i32) -> (i32, i32) {
    %c0_i32 = arith.constant 0 : i32
    %c0_i32_0 = arith.constant 0 : i32
    %c0_i32_1 = arith.constant 0 : i32
    return %c0_i32, %c0_i32_0 : i32, i32
  }
  func.func @transform_3(%arg0: i32) -> (i32, i32) {
    %c0_i32 = arith.constant 0 : i32
    %c0_i32_0 = arith.constant 0 : i32
    %c0_i32_1 = arith.constant 0 : i32
    return %c0_i32, %c0_i32_0 : i32, i32
  }
  func.func @transform_4(%arg0: i32) -> (i32, i32) {
    %c0_i32 = arith.constant 0 : i32
    %c0_i32_0 = arith.constant 0 : i32
    %c0_i32_1 = arith.constant 0 : i32
    return %c0_i32, %c0_i32_0 : i32, i32
  }
  func.func @transform_5(%arg0: i32) -> (i32, i32) {
    %c0_i32 = arith.constant 0 : i32
    %c0_i32_0 = arith.constant 0 : i32
    %c0_i32_1 = arith.constant 0 : i32
    return %c0_i32, %c0_i32_0 : i32, i32
  }
  func.func @transform_6(%arg0: i32) -> (i32, i32) {
    %c0_i32 = arith.constant 0 : i32
    %c0_i32_0 = arith.constant 0 : i32
    %c0_i32_1 = arith.constant 0 : i32
    return %c0_i32, %c0_i32_0 : i32, i32
  }
  func.func @transform_7(%arg0: i32) -> (i32, i32) {
    %c0_i32 = arith.constant 0 : i32
    %c0_i32_0 = arith.constant 0 : i32
    %c0_i32_1 = arith.constant 0 : i32
    return %c0_i32, %c0_i32_0 : i32, i32
  }
  func.func @transform_8(%arg0: i32) -> (i32, i32) {
    %c0_i32 = arith.constant 0 : i32
    %c0_i32_0 = arith.constant 0 : i32
    return %arg0, %c0_i32 : i32, i32
  }
}

</mosaic_0001>

<llo_original>
// kernel: tpu_custom_call.1
$region0: #{tpu_custom_call.1}
  #allocation0 [shape = 'u32[]', space=smem, size = 0x4, offset = 0x4, fixed_abs, tag = 'smem constant byte address 0x4 - core index']
  #allocation1 [shape = 'u32[144,128]{1,0:T(1,128)}', space=vmem, size = 0x12000, scoped, tag = 'internal scratch']
  #allocation2 [shape = 's32[1]{0:T(128)S(6)}', space=smem, size = 0x200, scoped, tag = 'scoped memory for tpu_custom_call.1']
  %s0 = inlined_call_operand.<no memory space> [shape: s32[1], index: 0, kind: input, shape index: {}]
  %s1 = inlined_call_operand.hbm [shape: bf16[256,896], index: 1, kind: input, shape index: {}]
  %s2 = inlined_call_operand.hbm [shape: bf16[896,256], index: 2, kind: input, shape index: {}]
  %s3 = inlined_call_operand.vmem [shape: f32[1,256], index: 3, kind: input, shape index: {}]
  %s4 = inlined_call_operand.hbm [shape: bf16[256,256], index: 4, kind: input, shape index: {}]
  %s5 = inlined_call_operand.vmem [shape: f32[1,256], index: 5, kind: input, shape index: {}]
  %s6 = inlined_call_operand.hbm [shape: bf16[256,128], index: 6, kind: input, shape index: {}]
  %s7 = inlined_call_operand.vmem [shape: f32[1,128], index: 7, kind: input, shape index: {}]
  %s8 = inlined_call_operand.hbm [shape: f32[256,128], index: 8, kind: output, shape index: {}]
  %s9 = sld [smem:[#allocation0]]
  $region58: #{tpu_custom_call.1} parent=0
    _
  %s11 = ssub.s32 1, %s9
  %s12 = scalar_select 0, %s11, %s9
  %13 = sst [smem:[#allocation2]] %s0
  $region1: #{tpu_custom_call.1} parent=0
    #allocation3 [shape = 'u8[458752]{0}', space=vmem, size = 0x70000, scoped, tag = 'input window, operand 1, single buffered']
    #allocation4 [shape = 's32[1]{0}', space=sflag, size = 0x4, scoped, tag = 'scoped memory for tpu_custom_call.1']
    #allocation5 [shape = 's32[1]{0}', space=sflag, size = 0x4, scoped, tag = 'scoped memory for tpu_custom_call.1']
    #allocation6 [shape = 'u8[458752]{0}', space=vmem, size = 0x70000, scoped, tag = 'input window, operand 2, single buffered']
    #allocation7 [shape = 's32[1]{0}', space=sflag, size = 0x4, scoped, tag = 'scoped memory for tpu_custom_call.1']
    #allocation8 [shape = 'u8[131072]{0}', space=vmem, size = 0x20000, scoped, tag = 'input window, operand 4, single buffered']
    #allocation9 [shape = 'u8[65536]{0}', space=vmem, size = 0x10000, scoped, tag = 'input window, operand 6, single buffered']
    #allocation10 [shape = 's32[1]{0}', space=sflag, size = 0x4, scoped, tag = 'scoped memory for tpu_custom_call.1']
    #allocation11 [shape = 'u8[131072]{0}', space=vmem, size = 0x20000, scoped, tag = 'output window, operand 0, single buffered']
    %14 = vsyncpa [#allocation4], 0
    %15 = vsyncpa [#allocation7], 0
    %16 = vsyncpa [#allocation10], 0
    %17 = vsyncpa [#allocation5], 0
    // Predicated region
    $region2: #{tpu_custom_call.1} parent=1 // pred_check
      _
    $region3: #{tpu_custom_call.1} parent=1 // pred_check_branch
      %19 = sbr.rel (0) target = $region5
    $region4: #{tpu_custom_call.1} parent=1 // pred_region
      _
    $region5: #{tpu_custom_call.1} parent=1 // pred_fallthru
      _
    // Predicated region
    $region6: #{tpu_custom_call.1} parent=1 // pred_check
      _
    $region7: #{tpu_custom_call.1} parent=1 // pred_check_branch
      %21 = sbr.rel (0) target = $region9
    $region8: #{tpu_custom_call.1} parent=1 // pred_region
      %s23 = ssub.s32 14336, 14336
      %24 = vsyncadd [#allocation4], %s23
      %s25 = sshll.u32 [#allocation3], 4
      %s26 = int_to_ptr.vmem [resolvable:$true] %s25
      %31 = dma.hbm_to_vmem [thread:$0]  %s1, 14336, %s26, [#allocation4], 448, 448, 28
    $region9: #{tpu_custom_call.1} parent=1 // pred_fallthru
      _
    // Predicated region
    $region10: #{tpu_custom_call.1} parent=1 // pred_check
      _
    $region11: #{tpu_custom_call.1} parent=1 // pred_check_branch
      %33 = sbr.rel (0) target = $region13
    $region12: #{tpu_custom_call.1} parent=1 // pred_region
      %s35 = ssub.s32 14336, 14336
      %36 = vsyncadd [#allocation7], %s35
      %s37 = sshll.u32 [#allocation6], 4
      %s38 = int_to_ptr.vmem [resolvable:$true] %s37
      %43 = dma.hbm_to_vmem [thread:$0]  %s2, 14336, %s38, [#allocation7], 128, 128, 8
    $region13: #{tpu_custom_call.1} parent=1 // pred_fallthru
      _
    // Predicated region
    $region14: #{tpu_custom_call.1} parent=1 // pred_check
      _
    $region15: #{tpu_custom_call.1} parent=1 // pred_check_branch
      %45 = sbr.rel (0) target = $region17
    $region16: #{tpu_custom_call.1} parent=1 // pred_region
      _
    $region17: #{tpu_custom_call.1} parent=1 // pred_fallthru
      _
    // Predicated region
    $region18: #{tpu_custom_call.1} parent=1 // pred_check
      _
    $region19: #{tpu_custom_call.1} parent=1 // pred_check_branch
      %47 = sbr.rel (0) target = $region21
    $region20: #{tpu_custom_call.1} parent=1 // pred_region
      %s49 = ssub.s32 4096, 4096
      %50 = vsyncadd [#allocation7], %s49
      %s51 = sshll.u32 [#allocation8], 4
      %s52 = int_to_ptr.vmem [resolvable:$true] %s51
      %57 = dma.hbm_to_vmem [thread:$0]  %s4, 4096, %s52, [#allocation7], 128, 128, 8
    $region21: #{tpu_custom_call.1} parent=1 // pred_fallthru
      _
    // Predicated region
    $region22: #{tpu_custom_call.1} parent=1 // pred_check
      _
    $region23: #{tpu_custom_call.1} parent=1 // pred_check_branch
      %59 = sbr.rel (0) target = $region25
    $region24: #{tpu_custom_call.1} parent=1 // pred_region
      _
    $region25: #{tpu_custom_call.1} parent=1 // pred_fallthru
      _
    // Predicated region
    $region26: #{tpu_custom_call.1} parent=1 // pred_check
      _
    $region27: #{tpu_custom_call.1} parent=1 // pred_check_branch
      %61 = sbr.rel (0) target = $region29
    $region28: #{tpu_custom_call.1} parent=1 // pred_region
      %s63 = ssub.s32 2048, 2048
      %64 = vsyncadd [#allocation10], %s63
      %s65 = sshll.u32 [#allocation9], 4
      %s66 = int_to_ptr.vmem [resolvable:$true] %s65
      %71 = dma.hbm_to_vmem [thread:$0]  %s6, 2048, %s66, [#allocation10], 64, 64, 4
    $region29: #{tpu_custom_call.1} parent=1 // pred_fallthru
      _
    // Predicated region
    $region30: #{tpu_custom_call.1} parent=1 // pred_check
      _
    $region31: #{tpu_custom_call.1} parent=1 // pred_check_branch
      %73 = sbr.rel (0) target = $region33
    $region32: #{tpu_custom_call.1} parent=1 // pred_region
      _
    $region33: #{tpu_custom_call.1} parent=1 // pred_fallthru
      _
    // Predicated region
    $region34: #{tpu_custom_call.1} parent=1 // pred_check
      _
    $region35: #{tpu_custom_call.1} parent=1 // pred_check_branch
      %75 = sbr.rel (0) target = $region37
    $region36: #{tpu_custom_call.1} parent=1 // pred_region
      %76 = dma.done [#allocation4], 14336
    $region37: #{tpu_custom_call.1} parent=1 // pred_fallthru
      _
    // Predicated region
    $region38: #{tpu_custom_call.1} parent=1 // pred_check
      _
    $region39: #{tpu_custom_call.1} parent=1 // pred_check_branch
      %78 = sbr.rel (0) target = $region41
    $region40: #{tpu_custom_call.1} parent=1 // pred_region
      %79 = dma.done [#allocation7], 14336
    $region41: #{tpu_custom_call.1} parent=1 // pred_fallthru
      _
    // Predicated region
    $region42: #{tpu_custom_call.1} parent=1 // pred_check
      _
    $region43: #{tpu_custom_call.1} parent=1 // pred_check_branch
      %81 = sbr.rel (0) target = $region45
    $region44: #{tpu_custom_call.1} parent=1 // pred_region
      %82 = dma.done [#allocation7], 4096
    $region45: #{tpu_custom_call.1} parent=1 // pred_fallthru
      _
    // Predicated region
    $region46: #{tpu_custom_call.1} parent=1 // pred_check
      _
    $region47: #{tpu_custom_call.1} parent=1 // pred_check_branch
      %84 = sbr.rel (0) target = $region49
    $region48: #{tpu_custom_call.1} parent=1 // pred_region
      %85 = dma.done [#allocation10], 2048
    $region49: #{tpu_custom_call.1} parent=1 // pred_fallthru
      _
    %s87 = sld [smem:[#allocation2]]
    %s88 = smul.u32 0, 2246822507
    %s89 = sadd.s32 %s87, %s88
    %v90 = vld [vmem:[#allocation3] sm:$0xff]
    %v91 = vld [vmem:[#allocation3 + $0x8] sm:$0xff]
    %v92 = vld [vmem:[#allocation3 + $0x10] sm:$0xff]
    %v93 = vld [vmem:[#allocation3 + $0x18] sm:$0xf]
    %v94 = vld [vmem:[#allocation3 + $0x1c] sm:$0xff]
    %v95 = vld [vmem:[#allocation3 + $0x24] sm:$0xff]
    %v96 = vld [vmem:[#allocation3 + $0x2c] sm:$0xff]
    %v97 = vld [vmem:[#allocation3 + $0x34] sm:$0xf]
    %v98 = vld [vmem:[#allocation3 + $0x38] sm:$0xff]
    %v99 = vld [vmem:[#allocation3 + $0x40] sm:$0xff]
    %v100 = vld [vmem:[#allocation3 + $0x48] sm:$0xff]
    %v101 = vld [vmem:[#allocation3 + $0x50] sm:$0xf]
    %v102 = vld [vmem:[#allocation3 + $0x54] sm:$0xff]
    %v103 = vld [vmem:[#allocation3 + $0x5c] sm:$0xff]
    %v104 = vld [vmem:[#allocation3 + $0x64] sm:$0xff]
    %v105 = vld [vmem:[#allocation3 + $0x6c] sm:$0xf]
    %v106 = vld [vmem:[#allocation3 + $0x70] sm:$0xff]
    %v107 = vld [vmem:[#allocation3 + $0x78] sm:$0xff]
    %v108 = vld [vmem:[#allocation3 + $0x80] sm:$0xff]
    %v109 = vld [vmem:[#allocation3 + $0x88] sm:$0xf]
    %v110 = vld [vmem:[#allocation3 + $0x8c] sm:$0xff]
    %v111 = vld [vmem:[#allocation3 + $0x94] sm:$0xff]
    %v112 = vld [vmem:[#allocation3 + $0x9c] sm:$0xff]
    %v113 = vld [vmem:[#allocation3 + $0xa4] sm:$0xf]
    %v114 = vld [vmem:[#allocation3 + $0xa8] sm:$0xff]
    %v115 = vld [vmem:[#allocation3 + $0xb0] sm:$0xff]
    %v116 = vld [vmem:[#allocation3 + $0xb8] sm:$0xff]
    %v117 = vld [vmem:[#allocation3 + $0xc0] sm:$0xf]
    %v118 = vld [vmem:[#allocation3 + $0xc4] sm:$0xff]
    %v119 = vld [vmem:[#allocation3 + $0xcc] sm:$0xff]
    %v120 = vld [vmem:[#allocation3 + $0xd4] sm:$0xff]
    %v121 = vld [vmem:[#allocation3 + $0xdc] sm:$0xf]
    %v122 = vld [vmem:[#allocation3 + $0xe0] sm:$0xff]
    %v123 = vld [vmem:[#allocation3 + $0xe8] sm:$0xff]
    %v124 = vld [vmem:[#allocation3 + $0xf0] sm:$0xff]
    %v125 = vld [vmem:[#allocation3 + $0xf8] sm:$0xf]
    %v126 = vld [vmem:[#allocation3 + $0xfc] sm:$0xff]
    %v127 = vld [vmem:[#allocation3 + $0x104] sm:$0xff]
    %v128 = vld [vmem:[#allocation3 + $0x10c] sm:$0xff]
    %v129 = vld [vmem:[#allocation3 + $0x114] sm:$0xf]
    %v130 = vld [vmem:[#allocation3 + $0x118] sm:$0xff]
    %v131 = vld [vmem:[#allocation3 + $0x120] sm:$0xff]
    %v132 = vld [vmem:[#allocation3 + $0x128] sm:$0xff]
    %v133 = vld [vmem:[#allocation3 + $0x130] sm:$0xf]
    %v134 = vld [vmem:[#allocation3 + $0x134] sm:$0xff]
    %v135 = vld [vmem:[#allocation3 + $0x13c] sm:$0xff]
    %v136 = vld [vmem:[#allocation3 + $0x144] sm:$0xff]
    %v137 = vld [vmem:[#allocation3 + $0x14c] sm:$0xf]
    %v138 = vld [vmem:[#allocation3 + $0x150] sm:$0xff]
    %v139 = vld [vmem:[#allocation3 + $0x158] sm:$0xff]
    %v140 = vld [vmem:[#allocation3 + $0x160] sm:$0xff]
    %v141 = vld [vmem:[#allocation3 + $0x168] sm:$0xf]
    %v142 = vld [vmem:[#allocation3 + $0x16c] sm:$0xff]
    %v143 = vld [vmem:[#allocation3 + $0x174] sm:$0xff]
    %v144 = vld [vmem:[#allocation3 + $0x17c] sm:$0xff]
    %v145 = vld [vmem:[#allocation3 + $0x184] sm:$0xf]
    %v146 = vld [vmem:[#allocation3 + $0x188] sm:$0xff]
    %v147 = vld [vmem:[#allocation3 + $0x190] sm:$0xff]
    %v148 = vld [vmem:[#allocation3 + $0x198] sm:$0xff]
    %v149 = vld [vmem:[#allocation3 + $0x1a0] sm:$0xf]
    %v150 = vld [vmem:[#allocation3 + $0x1a4] sm:$0xff]
    %v151 = vld [vmem:[#allocation3 + $0x1ac] sm:$0xff]
    %v152 = vld [vmem:[#allocation3 + $0x1b4] sm:$0xff]
    %v153 = vld [vmem:[#allocation3 + $0x1bc] sm:$0xf]
    %v154 = vld [vmem:[#allocation3 + $0x1c0] sm:$0xff]
    %v155 = vld [vmem:[#allocation3 + $0x1c8] sm:$0xff]
    %v156 = vld [vmem:[#allocation3 + $0x1d0] sm:$0xff]
    %v157 = vld [vmem:[#allocation3 + $0x1d8] sm:$0xf]
    %v158 = vld [vmem:[#allocation3 + $0x1dc] sm:$0xff]
    %v159 = vld [vmem:[#allocation3 + $0x1e4] sm:$0xff]
    %v160 = vld [vmem:[#allocation3 + $0x1ec] sm:$0xff]
    %v161 = vld [vmem:[#allocation3 + $0x1f4] sm:$0xf]
    %v162 = vld [vmem:[#allocation3 + $0x1f8] sm:$0xff]
    %v163 = vld [vmem:[#allocation3 + $0x200] sm:$0xff]
    %v164 = vld [vmem:[#allocation3 + $0x208] sm:$0xff]
    %v165 = vld [vmem:[#allocation3 + $0x210] sm:$0xf]
    %v166 = vld [vmem:[#allocation3 + $0x214] sm:$0xff]
    %v167 = vld [vmem:[#allocation3 + $0x21c] sm:$0xff]
    %v168 = vld [vmem:[#allocation3 + $0x224] sm:$0xff]
    %v169 = vld [vmem:[#allocation3 + $0x22c] sm:$0xf]
    %v170 = vld [vmem:[#allocation3 + $0x230] sm:$0xff]
    %v171 = vld [vmem:[#allocation3 + $0x238] sm:$0xff]
    %v172 = vld [vmem:[#allocation3 + $0x240] sm:$0xff]
    %v173 = vld [vmem:[#allocation3 + $0x248] sm:$0xf]
    %v174 = vld [vmem:[#allocation3 + $0x24c] sm:$0xff]
    %v175 = vld [vmem:[#allocation3 + $0x254] sm:$0xff]
    %v176 = vld [vmem:[#allocation3 + $0x25c] sm:$0xff]
    %v177 = vld [vmem:[#allocation3 + $0x264] sm:$0xf]
    %v178 = vld [vmem:[#allocation3 + $0x268] sm:$0xff]
    %v179 = vld [vmem:[#allocation3 + $0x270] sm:$0xff]
    %v180 = vld [vmem:[#allocation3 + $0x278] sm:$0xff]
    %v181 = vld [vmem:[#allocation3 + $0x280] sm:$0xf]
    %v182 = vld [vmem:[#allocation3 + $0x284] sm:$0xff]
    %v183 = vld [vmem:[#allocation3 + $0x28c] sm:$0xff]
    %v184 = vld [vmem:[#allocation3 + $0x294] sm:$0xff]
    %v185 = vld [vmem:[#allocation3 + $0x29c] sm:$0xf]
    %v186 = vld [vmem:[#allocation3 + $0x2a0] sm:$0xff]
    %v187 = vld [vmem:[#allocation3 + $0x2a8] sm:$0xff]
    %v188 = vld [vmem:[#allocation3 + $0x2b0] sm:$0xff]
    %v189 = vld [vmem:[#allocation3 + $0x2b8] sm:$0xf]
    %v190 = vld [vmem:[#allocation3 + $0x2bc] sm:$0xff]
    %v191 = vld [vmem:[#allocation3 + $0x2c4] sm:$0xff]
    %v192 = vld [vmem:[#allocation3 + $0x2cc] sm:$0xff]
    %v193 = vld [vmem:[#allocation3 + $0x2d4] sm:$0xf]
    %v194 = vld [vmem:[#allocation3 + $0x2d8] sm:$0xff]
    %v195 = vld [vmem:[#allocation3 + $0x2e0] sm:$0xff]
    %v196 = vld [vmem:[#allocation3 + $0x2e8] sm:$0xff]
    %v197 = vld [vmem:[#allocation3 + $0x2f0] sm:$0xf]
    %v198 = vld [vmem:[#allocation3 + $0x2f4] sm:$0xff]
    %v199 = vld [vmem:[#allocation3 + $0x2fc] sm:$0xff]
    %v200 = vld [vmem:[#allocation3 + $0x304] sm:$0xff]
    %v201 = vld [vmem:[#allocation3 + $0x30c] sm:$0xf]
    %v202 = vld [vmem:[#allocation3 + $0x310] sm:$0xff]
    %v203 = vld [vmem:[#allocation3 + $0x318] sm:$0xff]
    %v204 = vld [vmem:[#allocation3 + $0x320] sm:$0xff]
    %v205 = vld [vmem:[#allocation3 + $0x328] sm:$0xf]
    %v206 = vld [vmem:[#allocation3 + $0x32c] sm:$0xff]
    %v207 = vld [vmem:[#allocation3 + $0x334] sm:$0xff]
    %v208 = vld [vmem:[#allocation3 + $0x33c] sm:$0xff]
    %v209 = vld [vmem:[#allocation3 + $0x344] sm:$0xf]
    %v210 = vld [vmem:[#allocation3 + $0x348] sm:$0xff]
    %v211 = vld [vmem:[#allocation3 + $0x350] sm:$0xff]
    %v212 = vld [vmem:[#allocation3 + $0x358] sm:$0xff]
    %v213 = vld [vmem:[#allocation3 + $0x360] sm:$0xf]
    %v214 = vld [vmem:[#allocation3 + $0x364] sm:$0xff]
    %v215 = vld [vmem:[#allocation3 + $0x36c] sm:$0xff]
    %v216 = vld [vmem:[#allocation3 + $0x374] sm:$0xff]
    %v217 = vld [vmem:[#allocation3 + $0x37c] sm:$0xf]
    %v218 = vld [vmem:[#allocation6] sm:$0xff]
    %v219 = vld [vmem:[#allocation6 + $0x8] sm:$0xff]
    %v220 = vld [vmem:[#allocation6 + $0x10] sm:$0xff]
    %v221 = vld [vmem:[#allocation6 + $0x18] sm:$0xff]
    %v222 = vld [vmem:[#allocation6 + $0x20] sm:$0xff]
    %v223 = vld [vmem:[#allocation6 + $0x28] sm:$0xff]
    %v224 = vld [vmem:[#allocation6 + $0x30] sm:$0xff]
    %v225 = vld [vmem:[#allocation6 + $0x38] sm:$0xff]
    %v226 = vld [vmem:[#allocation6 + $0x40] sm:$0xff]
    %v227 = vld [vmem:[#allocation6 + $0x48] sm:$0xff]
    %v228 = vld [vmem:[#allocation6 + $0x50] sm:$0xff]
    %v229 = vld [vmem:[#allocation6 + $0x58] sm:$0xff]
    %v230 = vld [vmem:[#allocation6 + $0x60] sm:$0xff]
    %v231 = vld [vmem:[#allocation6 + $0x68] sm:$0xff]
    %v232 = vld [vmem:[#allocation6 + $0x70] sm:$0xff]
    %v233 = vld [vmem:[#allocation6 + $0x78] sm:$0xff]
    %v234 = vld [vmem:[#allocation6 + $0x80] sm:$0xff]
    %v235 = vld [vmem:[#allocation6 + $0x88] sm:$0xff]
    %v236 = vld [vmem:[#allocation6 + $0x90] sm:$0xff]
    %v237 = vld [vmem:[#allocation6 + $0x98] sm:$0xff]
    %v238 = vld [vmem:[#allocation6 + $0xa0] sm:$0xff]
    %v239 = vld [vmem:[#allocation6 + $0xa8] sm:$0xff]
    %v240 = vld [vmem:[#allocation6 + $0xb0] sm:$0xff]
    %v241 = vld [vmem:[#allocation6 + $0xb8] sm:$0xff]
    %v242 = vld [vmem:[#allocation6 + $0xc0] sm:$0xff]
    %v243 = vld [vmem:[#allocation6 + $0xc8] sm:$0xff]
    %v244 = vld [vmem:[#allocation6 + $0xd0] sm:$0xff]
    %v245 = vld [vmem:[#allocation6 + $0xd8] sm:$0xff]
    %v246 = vld [vmem:[#allocation6 + $0xe0] sm:$0xff]
    %v247 = vld [vmem:[#allocation6 + $0xe8] sm:$0xff]
    %v248 = vld [vmem:[#allocation6 + $0xf0] sm:$0xff]
    %v249 = vld [vmem:[#allocation6 + $0xf8] sm:$0xff]
    %v250 = vld [vmem:[#allocation6 + $0x100] sm:$0xff]
    %v251 = vld [vmem:[#allocation6 + $0x108] sm:$0xff]
    %v252 = vld [vmem:[#allocation6 + $0x110] sm:$0xff]
    %v253 = vld [vmem:[#allocation6 + $0x118] sm:$0xff]
    %v254 = vld [vmem:[#allocation6 + $0x120] sm:$0xff]
    %v255 = vld [vmem:[#allocation6 + $0x128] sm:$0xff]
    %v256 = vld [vmem:[#allocation6 + $0x130] sm:$0xff]
    %v257 = vld [vmem:[#allocation6 + $0x138] sm:$0xff]
    %v258 = vld [vmem:[#allocation6 + $0x140] sm:$0xff]
    %v259 = vld [vmem:[#allocation6 + $0x148] sm:$0xff]
    %v260 = vld [vmem:[#allocation6 + $0x150] sm:$0xff]
    %v261 = vld [vmem:[#allocation6 + $0x158] sm:$0xff]
    %v262 = vld [vmem:[#allocation6 + $0x160] sm:$0xff]
    %v263 = vld [vmem:[#allocation6 + $0x168] sm:$0xff]
    %v264 = vld [vmem:[#allocation6 + $0x170] sm:$0xff]
    %v265 = vld [vmem:[#allocation6 + $0x178] sm:$0xff]
    %v266 = vld [vmem:[#allocation6 + $0x180] sm:$0xff]
    %v267 = vld [vmem:[#allocation6 + $0x188] sm:$0xff]
    %v268 = vld [vmem:[#allocation6 + $0x190] sm:$0xff]
    %v269 = vld [vmem:[#allocation6 + $0x198] sm:$0xff]
    %v270 = vld [vmem:[#allocation6 + $0x1a0] sm:$0xff]
    %v271 = vld [vmem:[#allocation6 + $0x1a8] sm:$0xff]
    %v272 = vld [vmem:[#allocation6 + $0x1b0] sm:$0xff]
    %v273 = vld [vmem:[#allocation6 + $0x1b8] sm:$0xff]
    %v274 = vld [vmem:[#allocation6 + $0x1c0] sm:$0xff]
    %v275 = vld [vmem:[#allocation6 + $0x1c8] sm:$0xff]
    %v276 = vld [vmem:[#allocation6 + $0x1d0] sm:$0xff]
    %v277 = vld [vmem:[#allocation6 + $0x1d8] sm:$0xff]
    %v278 = vld [vmem:[#allocation6 + $0x1e0] sm:$0xff]
    %v279 = vld [vmem:[#allocation6 + $0x1e8] sm:$0xff]
    %v280 = vld [vmem:[#allocation6 + $0x1f0] sm:$0xff]
    %v281 = vld [vmem:[#allocation6 + $0x1f8] sm:$0xff]
    %v282 = vld [vmem:[#allocation6 + $0x200] sm:$0xff]
    %v283 = vld [vmem:[#allocation6 + $0x208] sm:$0xff]
    %v284 = vld [vmem:[#allocation6 + $0x210] sm:$0xff]
    %v285 = vld [vmem:[#allocation6 + $0x218] sm:$0xff]
    %v286 = vld [vmem:[#allocation6 + $0x220] sm:$0xff]
    %v287 = vld [vmem:[#allocation6 + $0x228] sm:$0xff]
    %v288 = vld [vmem:[#allocation6 + $0x230] sm:$0xff]
    %v289 = vld [vmem:[#allocation6 + $0x238] sm:$0xff]
    %v290 = vld [vmem:[#allocation6 + $0x240] sm:$0xff]
    %v291 = vld [vmem:[#allocation6 + $0x248] sm:$0xff]
    %v292 = vld [vmem:[#allocation6 + $0x250] sm:$0xff]
    %v293 = vld [vmem:[#allocation6 + $0x258] sm:$0xff]
    %v294 = vld [vmem:[#allocation6 + $0x260] sm:$0xff]
    %v295 = vld [vmem:[#allocation6 + $0x268] sm:$0xff]
    %v296 = vld [vmem:[#allocation6 + $0x270] sm:$0xff]
    %v297 = vld [vmem:[#allocation6 + $0x278] sm:$0xff]
    %v298 = vld [vmem:[#allocation6 + $0x280] sm:$0xff]
    %v299 = vld [vmem:[#allocation6 + $0x288] sm:$0xff]
    %v300 = vld [vmem:[#allocation6 + $0x290] sm:$0xff]
    %v301 = vld [vmem:[#allocation6 + $0x298] sm:$0xff]
    %v302 = vld [vmem:[#allocation6 + $0x2a0] sm:$0xff]
    %v303 = vld [vmem:[#allocation6 + $0x2a8] sm:$0xff]
    %v304 = vld [vmem:[#allocation6 + $0x2b0] sm:$0xff]
    %v305 = vld [vmem:[#allocation6 + $0x2b8] sm:$0xff]
    %v306 = vld [vmem:[#allocation6 + $0x2c0] sm:$0xff]
    %v307 = vld [vmem:[#allocation6 + $0x2c8] sm:$0xff]
    %v308 = vld [vmem:[#allocation6 + $0x2d0] sm:$0xff]
    %v309 = vld [vmem:[#allocation6 + $0x2d8] sm:$0xff]
    %v310 = vld [vmem:[#allocation6 + $0x2e0] sm:$0xff]
    %v311 = vld [vmem:[#allocation6 + $0x2e8] sm:$0xff]
    %v312 = vld [vmem:[#allocation6 + $0x2f0] sm:$0xff]
    %v313 = vld [vmem:[#allocation6 + $0x2f8] sm:$0xff]
    %v314 = vld [vmem:[#allocation6 + $0x300] sm:$0xff]
    %v315 = vld [vmem:[#allocation6 + $0x308] sm:$0xff]
    %v316 = vld [vmem:[#allocation6 + $0x310] sm:$0xff]
    %v317 = vld [vmem:[#allocation6 + $0x318] sm:$0xff]
    %v318 = vld [vmem:[#allocation6 + $0x320] sm:$0xff]
    %v319 = vld [vmem:[#allocation6 + $0x328] sm:$0xff]
    %v320 = vld [vmem:[#allocation6 + $0x330] sm:$0xff]
    %v321 = vld [vmem:[#allocation6 + $0x338] sm:$0xff]
    %v322 = vld [vmem:[#allocation6 + $0x340] sm:$0xff]
    %v323 = vld [vmem:[#allocation6 + $0x348] sm:$0xff]
    %v324 = vld [vmem:[#allocation6 + $0x350] sm:$0xff]
    %v325 = vld [vmem:[#allocation6 + $0x358] sm:$0xff]
    %v326 = vld [vmem:[#allocation6 + $0x360] sm:$0xff]
    %v327 = vld [vmem:[#allocation6 + $0x368] sm:$0xff]
    %v328 = vld [vmem:[#allocation6 + $0x370] sm:$0xff]
    %v329 = vld [vmem:[#allocation6 + $0x378] sm:$0xff]
    %v330 = vld [vmem:[%s3] sm:$0x3]
    %v332 = vlaneseq
    %v333 = vshrl.u32 %v332, 7
    %v334 = vsub.s32 0, %v333
    %v335 = vrot.slane %v330, %v334
    %v336 = vlaneseq
    %v337 = vshrl.u32 %v336, 7
    %v338 = vsub.s32 1, %v337
    %v339 = vrot.slane %v330, %v338
    %v470 = vunpack.c.l.b16 %v90
    %v471 = vunpack.c.h.b16 %v90
    %v472 = vunpack.c.l.b16 %v91
    %v473 = vunpack.c.h.b16 %v91
    %v474 = vunpack.c.l.b16 %v92
    %v475 = vunpack.c.h.b16 %v92
    %v476 = vunpack.c.l.b16 %v93
    %v477 = vunpack.c.l.b16 %v94
    %v478 = vunpack.c.h.b16 %v94
    %v479 = vunpack.c.l.b16 %v95
    %v480 = vunpack.c.h.b16 %v95
    %v481 = vunpack.c.l.b16 %v96
    %v482 = vunpack.c.h.b16 %v96
    %v483 = vunpack.c.l.b16 %v97
    %v484 = vunpack.c.l.b16 %v98
    %v485 = vunpack.c.h.b16 %v98
    %v486 = vunpack.c.l.b16 %v99
    %v487 = vunpack.c.h.b16 %v99
    %v488 = vunpack.c.l.b16 %v100
    %v489 = vunpack.c.h.b16 %v100
    %v490 = vunpack.c.l.b16 %v101
    %v491 = vunpack.c.l.b16 %v102
    %v492 = vunpack.c.h.b16 %v102
    %v493 = vunpack.c.l.b16 %v103
    %v494 = vunpack.c.h.b16 %v103
    %v495 = vunpack.c.l.b16 %v104
    %v496 = vunpack.c.h.b16 %v104
    %v497 = vunpack.c.l.b16 %v105
    %v498 = vunpack.c.l.b16 %v106
    %v499 = vunpack.c.h.b16 %v106
    %v500 = vunpack.c.l.b16 %v107
    %v501 = vunpack.c.h.b16 %v107
    %v502 = vunpack.c.l.b16 %v108
    %v503 = vunpack.c.h.b16 %v108
    %v504 = vunpack.c.l.b16 %v109
    %v505 = vunpack.c.l.b16 %v110
    %v506 = vunpack.c.h.b16 %v110
    %v507 = vunpack.c.l.b16 %v111
    %v508 = vunpack.c.h.b16 %v111
    %v509 = vunpack.c.l.b16 %v112
    %v510 = vunpack.c.h.b16 %v112
    %v511 = vunpack.c.l.b16 %v113
    %v512 = vunpack.c.l.b16 %v114
    %v513 = vunpack.c.h.b16 %v114
    %v514 = vunpack.c.l.b16 %v115
    %v515 = vunpack.c.h.b16 %v115
    %v516 = vunpack.c.l.b16 %v116
    %v517 = vunpack.c.h.b16 %v116
    %v518 = vunpack.c.l.b16 %v117
    %v519 = vunpack.c.l.b16 %v118
    %v520 = vunpack.c.h.b16 %v118
    %v521 = vunpack.c.l.b16 %v119
    %v522 = vunpack.c.h.b16 %v119
    %v523 = vunpack.c.l.b16 %v120
    %v524 = vunpack.c.h.b16 %v120
    %v525 = vunpack.c.l.b16 %v121
    %v526 = vunpack.c.l.b16 %v122
    %v527 = vunpack.c.h.b16 %v122
    %v528 = vunpack.c.l.b16 %v123
    %v529 = vunpack.c.h.b16 %v123
    %v530 = vunpack.c.l.b16 %v124
    %v531 = vunpack.c.h.b16 %v124
    %v532 = vunpack.c.l.b16 %v125
    %v533 = vunpack.c.l.b16 %v126
    %v534 = vunpack.c.h.b16 %v126
    %v535 = vunpack.c.l.b16 %v127
    %v536 = vunpack.c.h.b16 %v127
    %v537 = vunpack.c.l.b16 %v128
    %v538 = vunpack.c.h.b16 %v128
    %v539 = vunpack.c.l.b16 %v129
    %v540 = vunpack.c.l.b16 %v130
    %v541 = vunpack.c.h.b16 %v130
    %v542 = vunpack.c.l.b16 %v131
    %v543 = vunpack.c.h.b16 %v131
    %v544 = vunpack.c.l.b16 %v132
    %v545 = vunpack.c.h.b16 %v132
    %v546 = vunpack.c.l.b16 %v133
    %v547 = vunpack.c.l.b16 %v134
    %v548 = vunpack.c.h.b16 %v134
    %v549 = vunpack.c.l.b16 %v135
    %v550 = vunpack.c.h.b16 %v135
    %v551 = vunpack.c.l.b16 %v136
    %v552 = vunpack.c.h.b16 %v136
    %v553 = vunpack.c.l.b16 %v137
    %v554 = vunpack.c.l.b16 %v138
    %v555 = vunpack.c.h.b16 %v138
    %v556 = vunpack.c.l.b16 %v139
    %v557 = vunpack.c.h.b16 %v139
    %v558 = vunpack.c.l.b16 %v140
    %v559 = vunpack.c.h.b16 %v140
    %v560 = vunpack.c.l.b16 %v141
    %v561 = vunpack.c.l.b16 %v142
    %v562 = vunpack.c.h.b16 %v142
    %v563 = vunpack.c.l.b16 %v143
    %v564 = vunpack.c.h.b16 %v143
    %v565 = vunpack.c.l.b16 %v144
    %v566 = vunpack.c.h.b16 %v144
    %v567 = vunpack.c.l.b16 %v145
    %v568 = vunpack.c.l.b16 %v146
    %v569 = vunpack.c.h.b16 %v146
    %v570 = vunpack.c.l.b16 %v147
    %v571 = vunpack.c.h.b16 %v147
    %v572 = vunpack.c.l.b16 %v148
    %v573 = vunpack.c.h.b16 %v148
    %v574 = vunpack.c.l.b16 %v149
    %v575 = vunpack.c.l.b16 %v150
    %v576 = vunpack.c.h.b16 %v150
    %v577 = vunpack.c.l.b16 %v151
    %v578 = vunpack.c.h.b16 %v151
    %v579 = vunpack.c.l.b16 %v152
    %v580 = vunpack.c.h.b16 %v152
    %v581 = vunpack.c.l.b16 %v153
    %v582 = vunpack.c.l.b16 %v154
    %v583 = vunpack.c.h.b16 %v154
    %v584 = vunpack.c.l.b16 %v155
    %v585 = vunpack.c.h.b16 %v155
    %v586 = vunpack.c.l.b16 %v156
    %v587 = vunpack.c.h.b16 %v156
    %v588 = vunpack.c.l.b16 %v157
    %v589 = vunpack.c.l.b16 %v158
    %v590 = vunpack.c.h.b16 %v158
    %v591 = vunpack.c.l.b16 %v159
    %v592 = vunpack.c.h.b16 %v159
    %v593 = vunpack.c.l.b16 %v160
    %v594 = vunpack.c.h.b16 %v160
    %v595 = vunpack.c.l.b16 %v161
    %v596 = vunpack.c.l.b16 %v162
    %v597 = vunpack.c.h.b16 %v162
    %v598 = vunpack.c.l.b16 %v163
    %v599 = vunpack.c.h.b16 %v163
    %v600 = vunpack.c.l.b16 %v164
    %v601 = vunpack.c.h.b16 %v164
    %v602 = vunpack.c.l.b16 %v165
    %v603 = vunpack.c.l.b16 %v166
    %v604 = vunpack.c.h.b16 %v166
    %v605 = vunpack.c.l.b16 %v167
    %v606 = vunpack.c.h.b16 %v167
    %v607 = vunpack.c.l.b16 %v168
    %v608 = vunpack.c.h.b16 %v168
    %v609 = vunpack.c.l.b16 %v169
    %v610 = vunpack.c.l.b16 %v170
    %v611 = vunpack.c.h.b16 %v170
    %v612 = vunpack.c.l.b16 %v171
    %v613 = vunpack.c.h.b16 %v171
    %v614 = vunpack.c.l.b16 %v172
    %v615 = vunpack.c.h.b16 %v172
    %v616 = vunpack.c.l.b16 %v173
    %v617 = vunpack.c.l.b16 %v174
    %v618 = vunpack.c.h.b16 %v174
    %v619 = vunpack.c.l.b16 %v175
    %v620 = vunpack.c.h.b16 %v175
    %v621 = vunpack.c.l.b16 %v176
    %v622 = vunpack.c.h.b16 %v176
    %v623 = vunpack.c.l.b16 %v177
    %v624 = vunpack.c.l.b16 %v178
    %v625 = vunpack.c.h.b16 %v178
    %v626 = vunpack.c.l.b16 %v179
    %v627 = vunpack.c.h.b16 %v179
    %v628 = vunpack.c.l.b16 %v180
    %v629 = vunpack.c.h.b16 %v180
    %v630 = vunpack.c.l.b16 %v181
    %v631 = vunpack.c.l.b16 %v182
    %v632 = vunpack.c.h.b16 %v182
    %v633 = vunpack.c.l.b16 %v183
    %v634 = vunpack.c.h.b16 %v183
    %v635 = vunpack.c.l.b16 %v184
    %v636 = vunpack.c.h.b16 %v184
    %v637 = vunpack.c.l.b16 %v185
    %v638 = vunpack.c.l.b16 %v186
    %v639 = vunpack.c.h.b16 %v186
    %v640 = vunpack.c.l.b16 %v187
    %v641 = vunpack.c.h.b16 %v187
    %v642 = vunpack.c.l.b16 %v188
    %v643 = vunpack.c.h.b16 %v188
    %v644 = vunpack.c.l.b16 %v189
    %v645 = vunpack.c.l.b16 %v190
    %v646 = vunpack.c.h.b16 %v190
    %v647 = vunpack.c.l.b16 %v191
    %v648 = vunpack.c.h.b16 %v191
    %v649 = vunpack.c.l.b16 %v192
    %v650 = vunpack.c.h.b16 %v192
    %v651 = vunpack.c.l.b16 %v193
    %v652 = vunpack.c.l.b16 %v194
    %v653 = vunpack.c.h.b16 %v194
    %v654 = vunpack.c.l.b16 %v195
    %v655 = vunpack.c.h.b16 %v195
    %v656 = vunpack.c.l.b16 %v196
    %v657 = vunpack.c.h.b16 %v196
    %v658 = vunpack.c.l.b16 %v197
    %v659 = vunpack.c.l.b16 %v198
    %v660 = vunpack.c.h.b16 %v198
    %v661 = vunpack.c.l.b16 %v199
    %v662 = vunpack.c.h.b16 %v199
    %v663 = vunpack.c.l.b16 %v200
    %v664 = vunpack.c.h.b16 %v200
    %v665 = vunpack.c.l.b16 %v201
    %v666 = vunpack.c.l.b16 %v202
    %v667 = vunpack.c.h.b16 %v202
    %v668 = vunpack.c.l.b16 %v203
    %v669 = vunpack.c.h.b16 %v203
    %v670 = vunpack.c.l.b16 %v204
    %v671 = vunpack.c.h.b16 %v204
    %v672 = vunpack.c.l.b16 %v205
    %v673 = vunpack.c.l.b16 %v206
    %v674 = vunpack.c.h.b16 %v206
    %v675 = vunpack.c.l.b16 %v207
    %v676 = vunpack.c.h.b16 %v207
    %v677 = vunpack.c.l.b16 %v208
    %v678 = vunpack.c.h.b16 %v208
    %v679 = vunpack.c.l.b16 %v209
    %v680 = vunpack.c.l.b16 %v210
    %v681 = vunpack.c.h.b16 %v210
    %v682 = vunpack.c.l.b16 %v211
    %v683 = vunpack.c.h.b16 %v211
    %v684 = vunpack.c.l.b16 %v212
    %v685 = vunpack.c.h.b16 %v212
    %v686 = vunpack.c.l.b16 %v213
    %v687 = vunpack.c.l.b16 %v214
    %v688 = vunpack.c.h.b16 %v214
    %v689 = vunpack.c.l.b16 %v215
    %v690 = vunpack.c.h.b16 %v215
    %v691 = vunpack.c.l.b16 %v216
    %v692 = vunpack.c.h.b16 %v216
    %v693 = vunpack.c.l.b16 %v217
    %v694 = vpack.c.b16 %v477, %v470
    %v695 = vpack.c.b16 %v478, %v471
    %v696 = vpack.c.b16 %v479, %v472
    %v697 = vpack.c.b16 %v480, %v473
    %v698 = vpack.c.b16 %v481, %v474
    %v699 = vpack.c.b16 %v482, %v475
    %v700 = vpack.c.b16 %v483, %v476
    %v701 = vpack.c.b16 %v491, %v484
    %v702 = vpack.c.b16 %v492, %v485
    %v703 = vpack.c.b16 %v493, %v486
    %v704 = vpack.c.b16 %v494, %v487
    %v705 = vpack.c.b16 %v495, %v488
    %v706 = vpack.c.b16 %v496, %v489
    %v707 = vpack.c.b16 %v497, %v490
    %v708 = vpack.c.b16 %v505, %v498
    %v709 = vpack.c.b16 %v506, %v499
    %v710 = vpack.c.b16 %v507, %v500
    %v711 = vpack.c.b16 %v508, %v501
    %v712 = vpack.c.b16 %v509, %v502
    %v713 = vpack.c.b16 %v510, %v503
    %v714 = vpack.c.b16 %v511, %v504
    %v715 = vpack.c.b16 %v519, %v512
    %v716 = vpack.c.b16 %v520, %v513
    %v717 = vpack.c.b16 %v521, %v514
    %v718 = vpack.c.b16 %v522, %v515
    %v719 = vpack.c.b16 %v523, %v516
    %v720 = vpack.c.b16 %v524, %v517
    %v721 = vpack.c.b16 %v525, %v518
    %v722 = vpack.c.b16 %v533, %v526
    %v723 = vpack.c.b16 %v534, %v527
    %v724 = vpack.c.b16 %v535, %v528
    %v725 = vpack.c.b16 %v536, %v529
    %v726 = vpack.c.b16 %v537, %v530
    %v727 = vpack.c.b16 %v538, %v531
    %v728 = vpack.c.b16 %v539, %v532
    %v729 = vpack.c.b16 %v547, %v540
    %v730 = vpack.c.b16 %v548, %v541
    %v731 = vpack.c.b16 %v549, %v542
    %v732 = vpack.c.b16 %v550, %v543
    %v733 = vpack.c.b16 %v551, %v544
    %v734 = vpack.c.b16 %v552, %v545
    %v735 = vpack.c.b16 %v553, %v546
    %v736 = vpack.c.b16 %v561, %v554
    %v737 = vpack.c.b16 %v562, %v555
    %v738 = vpack.c.b16 %v563, %v556
    %v739 = vpack.c.b16 %v564, %v557
    %v740 = vpack.c.b16 %v565, %v558
    %v741 = vpack.c.b16 %v566, %v559
    %v742 = vpack.c.b16 %v567, %v560
    %v743 = vpack.c.b16 %v575, %v568
    %v744 = vpack.c.b16 %v576, %v569
    %v745 = vpack.c.b16 %v577, %v570
    %v746 = vpack.c.b16 %v578, %v571
    %v747 = vpack.c.b16 %v579, %v572
    %v748 = vpack.c.b16 %v580, %v573
    %v749 = vpack.c.b16 %v581, %v574
    %v750 = vpack.c.b16 %v589, %v582
    %v751 = vpack.c.b16 %v590, %v583
    %v752 = vpack.c.b16 %v591, %v584
    %v753 = vpack.c.b16 %v592, %v585
    %v754 = vpack.c.b16 %v593, %v586
    %v755 = vpack.c.b16 %v594, %v587
    %v756 = vpack.c.b16 %v595, %v588
    %v757 = vpack.c.b16 %v603, %v596
    %v758 = vpack.c.b16 %v604, %v597
    %v759 = vpack.c.b16 %v605, %v598
    %v760 = vpack.c.b16 %v606, %v599
    %v761 = vpack.c.b16 %v607, %v600
    %v762 = vpack.c.b16 %v608, %v601
    %v763 = vpack.c.b16 %v609, %v602
    %v764 = vpack.c.b16 %v617, %v610
    %v765 = vpack.c.b16 %v618, %v611
    %v766 = vpack.c.b16 %v619, %v612
    %v767 = vpack.c.b16 %v620, %v613
    %v768 = vpack.c.b16 %v621, %v614
    %v769 = vpack.c.b16 %v622, %v615
    %v770 = vpack.c.b16 %v623, %v616
    %v771 = vpack.c.b16 %v631, %v624
    %v772 = vpack.c.b16 %v632, %v625
    %v773 = vpack.c.b16 %v633, %v626
    %v774 = vpack.c.b16 %v634, %v627
    %v775 = vpack.c.b16 %v635, %v628
    %v776 = vpack.c.b16 %v636, %v629
    %v777 = vpack.c.b16 %v637, %v630
    %v778 = vpack.c.b16 %v645, %v638
    %v779 = vpack.c.b16 %v646, %v639
    %v780 = vpack.c.b16 %v647, %v640
    %v781 = vpack.c.b16 %v648, %v641
    %v782 = vpack.c.b16 %v649, %v642
    %v783 = vpack.c.b16 %v650, %v643
    %v784 = vpack.c.b16 %v651, %v644
    %v785 = vpack.c.b16 %v659, %v652
    %v786 = vpack.c.b16 %v660, %v653
    %v787 = vpack.c.b16 %v661, %v654
    %v788 = vpack.c.b16 %v662, %v655
    %v789 = vpack.c.b16 %v663, %v656
    %v790 = vpack.c.b16 %v664, %v657
    %v791 = vpack.c.b16 %v665, %v658
    %v792 = vpack.c.b16 %v673, %v666
    %v793 = vpack.c.b16 %v674, %v667
    %v794 = vpack.c.b16 %v675, %v668
    %v795 = vpack.c.b16 %v676, %v669
    %v796 = vpack.c.b16 %v677, %v670
    %v797 = vpack.c.b16 %v678, %v671
    %v798 = vpack.c.b16 %v679, %v672
    %v799 = vpack.c.b16 %v687, %v680
    %v800 = vpack.c.b16 %v688, %v681
    %v801 = vpack.c.b16 %v689, %v682
    %v802 = vpack.c.b16 %v690, %v683
    %v803 = vpack.c.b16 %v691, %v684
    %v804 = vpack.c.b16 %v692, %v685
    %v805 = vpack.c.b16 %v693, %v686
    %v1030 = vunpack.c.l.b16 %v218
    %v1031 = vunpack.c.h.b16 %v218
    %v1032 = vunpack.c.l.b16 %v219
    %v1033 = vunpack.c.h.b16 %v219
    %v1034 = vunpack.c.l.b16 %v220
    %v1035 = vunpack.c.h.b16 %v220
    %v1036 = vunpack.c.l.b16 %v221
    %v1037 = vunpack.c.h.b16 %v221
    %v1038 = vunpack.c.l.b16 %v222
    %v1039 = vunpack.c.h.b16 %v222
    %v1040 = vunpack.c.l.b16 %v223
    %v1041 = vunpack.c.h.b16 %v223
    %v1042 = vunpack.c.l.b16 %v224
    %v1043 = vunpack.c.h.b16 %v224
    %v1044 = vunpack.c.l.b16 %v225
    %v1045 = vunpack.c.h.b16 %v225
    %v1046 = vunpack.c.l.b16 %v226
    %v1047 = vunpack.c.h.b16 %v226
    %v1048 = vunpack.c.l.b16 %v227
    %v1049 = vunpack.c.h.b16 %v227
    %v1050 = vunpack.c.l.b16 %v228
    %v1051 = vunpack.c.h.b16 %v228
    %v1052 = vunpack.c.l.b16 %v229
    %v1053 = vunpack.c.h.b16 %v229
    %v1054 = vunpack.c.l.b16 %v230
    %v1055 = vunpack.c.h.b16 %v230
    %v1056 = vunpack.c.l.b16 %v231
    %v1057 = vunpack.c.h.b16 %v231
    %v1058 = vunpack.c.l.b16 %v232
    %v1059 = vunpack.c.h.b16 %v232
    %v1060 = vunpack.c.l.b16 %v233
    %v1061 = vunpack.c.h.b16 %v233
    %v1062 = vunpack.c.l.b16 %v234
    %v1063 = vunpack.c.h.b16 %v234
    %v1064 = vunpack.c.l.b16 %v235
    %v1065 = vunpack.c.h.b16 %v235
    %v1066 = vunpack.c.l.b16 %v236
    %v1067 = vunpack.c.h.b16 %v236
    %v1068 = vunpack.c.l.b16 %v237
    %v1069 = vunpack.c.h.b16 %v237
    %v1070 = vunpack.c.l.b16 %v238
    %v1071 = vunpack.c.h.b16 %v238
    %v1072 = vunpack.c.l.b16 %v239
    %v1073 = vunpack.c.h.b16 %v239
    %v1074 = vunpack.c.l.b16 %v240
    %v1075 = vunpack.c.h.b16 %v240
    %v1076 = vunpack.c.l.b16 %v241
    %v1077 = vunpack.c.h.b16 %v241
    %v1078 = vunpack.c.l.b16 %v242
    %v1079 = vunpack.c.h.b16 %v242
    %v1080 = vunpack.c.l.b16 %v243
    %v1081 = vunpack.c.h.b16 %v243
    %v1082 = vunpack.c.l.b16 %v244
    %v1083 = vunpack.c.h.b16 %v244
    %v1084 = vunpack.c.l.b16 %v245
    %v1085 = vunpack.c.h.b16 %v245
    %v1086 = vunpack.c.l.b16 %v246
    %v1087 = vunpack.c.h.b16 %v246
    %v1088 = vunpack.c.l.b16 %v247
    %v1089 = vunpack.c.h.b16 %v247
    %v1090 = vunpack.c.l.b16 %v248
    %v1091 = vunpack.c.h.b16 %v248
    %v1092 = vunpack.c.l.b16 %v249
    %v1093 = vunpack.c.h.b16 %v249
    %v1094 = vunpack.c.l.b16 %v250
    %v1095 = vunpack.c.h.b16 %v250
    %v1096 = vunpack.c.l.b16 %v251
    %v1097 = vunpack.c.h.b16 %v251
    %v1098 = vunpack.c.l.b16 %v252
    %v1099 = vunpack.c.h.b16 %v252
    %v1100 = vunpack.c.l.b16 %v253
    %v1101 = vunpack.c.h.b16 %v253
    %v1102 = vunpack.c.l.b16 %v254
    %v1103 = vunpack.c.h.b16 %v254
    %v1104 = vunpack.c.l.b16 %v255
    %v1105 = vunpack.c.h.b16 %v255
    %v1106 = vunpack.c.l.b16 %v256
    %v1107 = vunpack.c.h.b16 %v256
    %v1108 = vunpack.c.l.b16 %v257
    %v1109 = vunpack.c.h.b16 %v257
    %v1110 = vunpack.c.l.b16 %v258
    %v1111 = vunpack.c.h.b16 %v258
    %v1112 = vunpack.c.l.b16 %v259
    %v1113 = vunpack.c.h.b16 %v259
    %v1114 = vunpack.c.l.b16 %v260
    %v1115 = vunpack.c.h.b16 %v260
    %v1116 = vunpack.c.l.b16 %v261
    %v1117 = vunpack.c.h.b16 %v261
    %v1118 = vunpack.c.l.b16 %v262
    %v1119 = vunpack.c.h.b16 %v262
    %v1120 = vunpack.c.l.b16 %v263
    %v1121 = vunpack.c.h.b16 %v263
    %v1122 = vunpack.c.l.b16 %v264
    %v1123 = vunpack.c.h.b16 %v264
    %v1124 = vunpack.c.l.b16 %v265
    %v1125 = vunpack.c.h.b16 %v265
    %v1126 = vunpack.c.l.b16 %v266
    %v1127 = vunpack.c.h.b16 %v266
    %v1128 = vunpack.c.l.b16 %v267
    %v1129 = vunpack.c.h.b16 %v267
    %v1130 = vunpack.c.l.b16 %v268
    %v1131 = vunpack.c.h.b16 %v268
    %v1132 = vunpack.c.l.b16 %v269
    %v1133 = vunpack.c.h.b16 %v269
    %v1134 = vunpack.c.l.b16 %v270
    %v1135 = vunpack.c.h.b16 %v270
    %v1136 = vunpack.c.l.b16 %v271
    %v1137 = vunpack.c.h.b16 %v271
    %v1138 = vunpack.c.l.b16 %v272
    %v1139 = vunpack.c.h.b16 %v272
    %v1140 = vunpack.c.l.b16 %v273
    %v1141 = vunpack.c.h.b16 %v273
    %v1142 = vunpack.c.l.b16 %v274
    %v1143 = vunpack.c.h.b16 %v274
    %v1144 = vunpack.c.l.b16 %v275
    %v1145 = vunpack.c.h.b16 %v275
    %v1146 = vunpack.c.l.b16 %v276
    %v1147 = vunpack.c.h.b16 %v276
    %v1148 = vunpack.c.l.b16 %v277
    %v1149 = vunpack.c.h.b16 %v277
    %v1150 = vunpack.c.l.b16 %v278
    %v1151 = vunpack.c.h.b16 %v278
    %v1152 = vunpack.c.l.b16 %v279
    %v1153 = vunpack.c.h.b16 %v279
    %v1154 = vunpack.c.l.b16 %v280
    %v1155 = vunpack.c.h.b16 %v280
    %v1156 = vunpack.c.l.b16 %v281
    %v1157 = vunpack.c.h.b16 %v281
    %v1158 = vunpack.c.l.b16 %v282
    %v1159 = vunpack.c.h.b16 %v282
    %v1160 = vunpack.c.l.b16 %v283
    %v1161 = vunpack.c.h.b16 %v283
    %v1162 = vunpack.c.l.b16 %v284
    %v1163 = vunpack.c.h.b16 %v284
    %v1164 = vunpack.c.l.b16 %v285
    %v1165 = vunpack.c.h.b16 %v285
    %v1166 = vunpack.c.l.b16 %v286
    %v1167 = vunpack.c.h.b16 %v286
    %v1168 = vunpack.c.l.b16 %v287
    %v1169 = vunpack.c.h.b16 %v287
    %v1170 = vunpack.c.l.b16 %v288
    %v1171 = vunpack.c.h.b16 %v288
    %v1172 = vunpack.c.l.b16 %v289
    %v1173 = vunpack.c.h.b16 %v289
    %v1174 = vunpack.c.l.b16 %v290
    %v1175 = vunpack.c.h.b16 %v290
    %v1176 = vunpack.c.l.b16 %v291
    %v1177 = vunpack.c.h.b16 %v291
    %v1178 = vunpack.c.l.b16 %v292
    %v1179 = vunpack.c.h.b16 %v292
    %v1180 = vunpack.c.l.b16 %v293
    %v1181 = vunpack.c.h.b16 %v293
    %v1182 = vunpack.c.l.b16 %v294
    %v1183 = vunpack.c.h.b16 %v294
    %v1184 = vunpack.c.l.b16 %v295
    %v1185 = vunpack.c.h.b16 %v295
    %v1186 = vunpack.c.l.b16 %v296
    %v1187 = vunpack.c.h.b16 %v296
    %v1188 = vunpack.c.l.b16 %v297
    %v1189 = vunpack.c.h.b16 %v297
    %v1190 = vunpack.c.l.b16 %v298
    %v1191 = vunpack.c.h.b16 %v298
    %v1192 = vunpack.c.l.b16 %v299
    %v1193 = vunpack.c.h.b16 %v299
    %v1194 = vunpack.c.l.b16 %v300
    %v1195 = vunpack.c.h.b16 %v300
    %v1196 = vunpack.c.l.b16 %v301
    %v1197 = vunpack.c.h.b16 %v301
    %v1198 = vunpack.c.l.b16 %v302
    %v1199 = vunpack.c.h.b16 %v302
    %v1200 = vunpack.c.l.b16 %v303
    %v1201 = vunpack.c.h.b16 %v303
    %v1202 = vunpack.c.l.b16 %v304
    %v1203 = vunpack.c.h.b16 %v304
    %v1204 = vunpack.c.l.b16 %v305
    %v1205 = vunpack.c.h.b16 %v305
    %v1206 = vunpack.c.l.b16 %v306
    %v1207 = vunpack.c.h.b16 %v306
    %v1208 = vunpack.c.l.b16 %v307
    %v1209 = vunpack.c.h.b16 %v307
    %v1210 = vunpack.c.l.b16 %v308
    %v1211 = vunpack.c.h.b16 %v308
    %v1212 = vunpack.c.l.b16 %v309
    %v1213 = vunpack.c.h.b16 %v309
    %v1214 = vunpack.c.l.b16 %v310
    %v1215 = vunpack.c.h.b16 %v310
    %v1216 = vunpack.c.l.b16 %v311
    %v1217 = vunpack.c.h.b16 %v311
    %v1218 = vunpack.c.l.b16 %v312
    %v1219 = vunpack.c.h.b16 %v312
    %v1220 = vunpack.c.l.b16 %v313
    %v1221 = vunpack.c.h.b16 %v313
    %v1222 = vunpack.c.l.b16 %v314
    %v1223 = vunpack.c.h.b16 %v314
    %v1224 = vunpack.c.l.b16 %v315
    %v1225 = vunpack.c.h.b16 %v315
    %v1226 = vunpack.c.l.b16 %v316
    %v1227 = vunpack.c.h.b16 %v316
    %v1228 = vunpack.c.l.b16 %v317
    %v1229 = vunpack.c.h.b16 %v317
    %v1230 = vunpack.c.l.b16 %v318
    %v1231 = vunpack.c.h.b16 %v318
    %v1232 = vunpack.c.l.b16 %v319
    %v1233 = vunpack.c.h.b16 %v319
    %v1234 = vunpack.c.l.b16 %v320
    %v1235 = vunpack.c.h.b16 %v320
    %v1236 = vunpack.c.l.b16 %v321
    %v1237 = vunpack.c.h.b16 %v321
    %v1238 = vunpack.c.l.b16 %v322
    %v1239 = vunpack.c.h.b16 %v322
    %v1240 = vunpack.c.l.b16 %v323
    %v1241 = vunpack.c.h.b16 %v323
    %v1242 = vunpack.c.l.b16 %v324
    %v1243 = vunpack.c.h.b16 %v324
    %v1244 = vunpack.c.l.b16 %v325
    %v1245 = vunpack.c.h.b16 %v325
    %v1246 = vunpack.c.l.b16 %v326
    %v1247 = vunpack.c.h.b16 %v326
    %v1248 = vunpack.c.l.b16 %v327
    %v1249 = vunpack.c.h.b16 %v327
    %v1250 = vunpack.c.l.b16 %v328
    %v1251 = vunpack.c.h.b16 %v328
    %v1252 = vunpack.c.l.b16 %v329
    %v1253 = vunpack.c.h.b16 %v329
    %v1254 = vpack.c.b16 %v1032, %v1030
    %v1255 = vpack.c.b16 %v1033, %v1031
    %v1256 = vpack.c.b16 %v1036, %v1034
    %v1257 = vpack.c.b16 %v1037, %v1035
    %v1258 = vpack.c.b16 %v1040, %v1038
    %v1259 = vpack.c.b16 %v1041, %v1039
    %v1260 = vpack.c.b16 %v1044, %v1042
    %v1261 = vpack.c.b16 %v1045, %v1043
    %v1262 = vpack.c.b16 %v1048, %v1046
    %v1263 = vpack.c.b16 %v1049, %v1047
    %v1264 = vpack.c.b16 %v1052, %v1050
    %v1265 = vpack.c.b16 %v1053, %v1051
    %v1266 = vpack.c.b16 %v1056, %v1054
    %v1267 = vpack.c.b16 %v1057, %v1055
    %v1268 = vpack.c.b16 %v1060, %v1058
    %v1269 = vpack.c.b16 %v1061, %v1059
    %v1270 = vpack.c.b16 %v1064, %v1062
    %v1271 = vpack.c.b16 %v1065, %v1063
    %v1272 = vpack.c.b16 %v1068, %v1066
    %v1273 = vpack.c.b16 %v1069, %v1067
    %v1274 = vpack.c.b16 %v1072, %v1070
    %v1275 = vpack.c.b16 %v1073, %v1071
    %v1276 = vpack.c.b16 %v1076, %v1074
    %v1277 = vpack.c.b16 %v1077, %v1075
    %v1278 = vpack.c.b16 %v1080, %v1078
    %v1279 = vpack.c.b16 %v1081, %v1079
    %v1280 = vpack.c.b16 %v1084, %v1082
    %v1281 = vpack.c.b16 %v1085, %v1083
    %v1282 = vpack.c.b16 %v1088, %v1086
    %v1283 = vpack.c.b16 %v1089, %v1087
    %v1284 = vpack.c.b16 %v1092, %v1090
    %v1285 = vpack.c.b16 %v1093, %v1091
    %v1286 = vpack.c.b16 %v1096, %v1094
    %v1287 = vpack.c.b16 %v1097, %v1095
    %v1288 = vpack.c.b16 %v1100, %v1098
    %v1289 = vpack.c.b16 %v1101, %v1099
    %v1290 = vpack.c.b16 %v1104, %v1102
    %v1291 = vpack.c.b16 %v1105, %v1103
    %v1292 = vpack.c.b16 %v1108, %v1106
    %v1293 = vpack.c.b16 %v1109, %v1107
    %v1294 = vpack.c.b16 %v1112, %v1110
    %v1295 = vpack.c.b16 %v1113, %v1111
    %v1296 = vpack.c.b16 %v1116, %v1114
    %v1297 = vpack.c.b16 %v1117, %v1115
    %v1298 = vpack.c.b16 %v1120, %v1118
    %v1299 = vpack.c.b16 %v1121, %v1119
    %v1300 = vpack.c.b16 %v1124, %v1122
    %v1301 = vpack.c.b16 %v1125, %v1123
    %v1302 = vpack.c.b16 %v1128, %v1126
    %v1303 = vpack.c.b16 %v1129, %v1127
    %v1304 = vpack.c.b16 %v1132, %v1130
    %v1305 = vpack.c.b16 %v1133, %v1131
    %v1306 = vpack.c.b16 %v1136, %v1134
    %v1307 = vpack.c.b16 %v1137, %v1135
    %v1308 = vpack.c.b16 %v1140, %v1138
    %v1309 = vpack.c.b16 %v1141, %v1139
    %v1310 = vpack.c.b16 %v1144, %v1142
    %v1311 = vpack.c.b16 %v1145, %v1143
    %v1312 = vpack.c.b16 %v1148, %v1146
    %v1313 = vpack.c.b16 %v1149, %v1147
    %v1314 = vpack.c.b16 %v1152, %v1150
    %v1315 = vpack.c.b16 %v1153, %v1151
    %v1316 = vpack.c.b16 %v1156, %v1154
    %v1317 = vpack.c.b16 %v1157, %v1155
    %v1318 = vpack.c.b16 %v1160, %v1158
    %v1319 = vpack.c.b16 %v1161, %v1159
    %v1320 = vpack.c.b16 %v1164, %v1162
    %v1321 = vpack.c.b16 %v1165, %v1163
    %v1322 = vpack.c.b16 %v1168, %v1166
    %v1323 = vpack.c.b16 %v1169, %v1167
    %v1324 = vpack.c.b16 %v1172, %v1170
    %v1325 = vpack.c.b16 %v1173, %v1171
    %v1326 = vpack.c.b16 %v1176, %v1174
    %v1327 = vpack.c.b16 %v1177, %v1175
    %v1328 = vpack.c.b16 %v1180, %v1178
    %v1329 = vpack.c.b16 %v1181, %v1179
    %v1330 = vpack.c.b16 %v1184, %v1182
    %v1331 = vpack.c.b16 %v1185, %v1183
    %v1332 = vpack.c.b16 %v1188, %v1186
    %v1333 = vpack.c.b16 %v1189, %v1187
    %v1334 = vpack.c.b16 %v1192, %v1190
    %v1335 = vpack.c.b16 %v1193, %v1191
    %v1336 = vpack.c.b16 %v1196, %v1194
    %v1337 = vpack.c.b16 %v1197, %v1195
    %v1338 = vpack.c.b16 %v1200, %v1198
    %v1339 = vpack.c.b16 %v1201, %v1199
    %v1340 = vpack.c.b16 %v1204, %v1202
    %v1341 = vpack.c.b16 %v1205, %v1203
    %v1342 = vpack.c.b16 %v1208, %v1206
    %v1343 = vpack.c.b16 %v1209, %v1207
    %v1344 = vpack.c.b16 %v1212, %v1210
    %v1345 = vpack.c.b16 %v1213, %v1211
    %v1346 = vpack.c.b16 %v1216, %v1214
    %v1347 = vpack.c.b16 %v1217, %v1215
    %v1348 = vpack.c.b16 %v1220, %v1218
    %v1349 = vpack.c.b16 %v1221, %v1219
    %v1350 = vpack.c.b16 %v1224, %v1222
    %v1351 = vpack.c.b16 %v1225, %v1223
    %v1352 = vpack.c.b16 %v1228, %v1226
    %v1353 = vpack.c.b16 %v1229, %v1227
    %v1354 = vpack.c.b16 %v1232, %v1230
    %v1355 = vpack.c.b16 %v1233, %v1231
    %v1356 = vpack.c.b16 %v1236, %v1234
    %v1357 = vpack.c.b16 %v1237, %v1235
    %v1358 = vpack.c.b16 %v1240, %v1238
    %v1359 = vpack.c.b16 %v1241, %v1239
    %v1360 = vpack.c.b16 %v1244, %v1242
    %v1361 = vpack.c.b16 %v1245, %v1243
    %v1362 = vpack.c.b16 %v1248, %v1246
    %v1363 = vpack.c.b16 %v1249, %v1247
    %v1364 = vpack.c.b16 %v1252, %v1250
    %v1365 = vpack.c.b16 %v1253, %v1251
    %1478 = vmatprep.subr.bf16.mxu0 %v1255
    %1479 = vmatpush1.bf16.msra.mxu0 %v1254
    %1480 = vmatprep.subr.bf16.mxu0 %v1257
    %1481 = vmatpush1.bf16.msra.mxu0 %v1256
    %1482 = vmatprep.subr.bf16.mxu0 %v1259
    %1483 = vmatpush1.bf16.msra.mxu0 %v1258
    %1484 = vmatprep.subr.bf16.mxu0 %v1261
    %1485 = vmatpush1.bf16.msra.mxu0 %v1260
    %1486 = vmatprep.subr.bf16.mxu0 %v1263
    %1487 = vmatpush1.bf16.msra.mxu0 %v1262
    %1488 = vmatprep.subr.bf16.mxu0 %v1265
    %1489 = vmatpush1.bf16.msra.mxu0 %v1264
    %1490 = vmatprep.subr.bf16.mxu0 %v1267
    %1491 = vmatpush1.bf16.msra.mxu0 %v1266
    %1492 = vmatprep.subr.bf16.mxu0 %v1269
    %1493 = vmatpush1.bf16.msra.mxu0 %v1268
    %1494 = vmatprep.subr.bf16.mxu0 %v1271
    %1495 = vmatpush1.bf16.msra.mxu0 %v1270
    %1496 = vmatprep.subr.bf16.mxu0 %v1273
    %1497 = vmatpush1.bf16.msra.mxu0 %v1272
    %1498 = vmatprep.subr.bf16.mxu0 %v1275
    %1499 = vmatpush1.bf16.msra.mxu0 %v1274
    %1500 = vmatprep.subr.bf16.mxu0 %v1277
    %1501 = vmatpush1.bf16.msra.mxu0 %v1276
    %1502 = vmatprep.subr.bf16.mxu0 %v1279
    %1503 = vmatpush1.bf16.msra.mxu0 %v1278
    %1504 = vmatprep.subr.bf16.mxu0 %v1281
    %1505 = vmatpush1.bf16.msra.mxu0 %v1280
    %1506 = vmatprep.subr.bf16.mxu0 %v1283
    %1507 = vmatpush1.bf16.msra.mxu0 %v1282
    %1508 = vmatprep.subr.bf16.mxu0 %v1285
    %1509 = vmatpush1.bf16.msra.mxu0 %v1284
    %1510 = vmatprep.mubr.bf16.mxu0 %v695
    %1511 = vmatmul.mubr.bf16.gmra.mrb[0].mxu0 %v694
    %v1512 = vpop.f32.mrb[0].mxu0
    %v1513 = vadd.f32 %v335, %v1512
    %v1514 = vpop.f32.mrb[0].mxu0
    %v1515 = vadd.f32 %v339, %v1514
    %v1516 = vpop.f32.mrb[0].mxu0
    %v1517 = vadd.f32 %v335, %v1516
    %v1518 = vpop.f32.mrb[0].mxu0
    %v1519 = vadd.f32 %v339, %v1518
    %1520 = vmatprep.mubr.bf16.mxu0 %v702
    %1521 = vmatmul.mubr.bf16.gmra.mrb[0].mxu0 %v701
    %v1522 = vpop.f32.mrb[0].mxu0
    %v1523 = vadd.f32 %v335, %v1522
    %v1524 = vpop.f32.mrb[0].mxu0
    %v1525 = vadd.f32 %v339, %v1524
    %v1526 = vpop.f32.mrb[0].mxu0
    %v1527 = vadd.f32 %v335, %v1526
    %v1528 = vpop.f32.mrb[0].mxu0
    %v1529 = vadd.f32 %v339, %v1528
    %1530 = vmatprep.mubr.bf16.mxu0 %v709
    %1531 = vmatmul.mubr.bf16.gmra.mrb[0].mxu0 %v708
    %v1532 = vpop.f32.mrb[0].mxu0
    %v1533 = vadd.f32 %v335, %v1532
    %v1534 = vpop.f32.mrb[0].mxu0
    %v1535 = vadd.f32 %v339, %v1534
    %v1536 = vpop.f32.mrb[0].mxu0
    %v1537 = vadd.f32 %v335, %v1536
    %v1538 = vpop.f32.mrb[0].mxu0
    %v1539 = vadd.f32 %v339, %v1538
    %1540 = vmatprep.mubr.bf16.mxu0 %v716
    %1541 = vmatmul.mubr.bf16.gmra.mrb[0].mxu0 %v715
    %v1542 = vpop.f32.mrb[0].mxu0
    %v1543 = vadd.f32 %v335, %v1542
    %v1544 = vpop.f32.mrb[0].mxu0
    %v1545 = vadd.f32 %v339, %v1544
    %v1546 = vpop.f32.mrb[0].mxu0
    %v1547 = vadd.f32 %v335, %v1546
    %v1548 = vpop.f32.mrb[0].mxu0
    %v1549 = vadd.f32 %v339, %v1548
    %1550 = vmatprep.mubr.bf16.mxu0 %v723
    %1551 = vmatmul.mubr.bf16.gmra.mrb[0].mxu0 %v722
    %v1552 = vpop.f32.mrb[0].mxu0
    %v1553 = vadd.f32 %v335, %v1552
    %v1554 = vpop.f32.mrb[0].mxu0
    %v1555 = vadd.f32 %v339, %v1554
    %v1556 = vpop.f32.mrb[0].mxu0
    %v1557 = vadd.f32 %v335, %v1556
    %v1558 = vpop.f32.mrb[0].mxu0
    %v1559 = vadd.f32 %v339, %v1558
    %1560 = vmatprep.mubr.bf16.mxu0 %v730
    %1561 = vmatmul.mubr.bf16.gmra.mrb[0].mxu0 %v729
    %v1562 = vpop.f32.mrb[0].mxu0
    %v1563 = vadd.f32 %v335, %v1562
    %v1564 = vpop.f32.mrb[0].mxu0
    %v1565 = vadd.f32 %v339, %v1564
    %v1566 = vpop.f32.mrb[0].mxu0
    %v1567 = vadd.f32 %v335, %v1566
    %v1568 = vpop.f32.mrb[0].mxu0
    %v1569 = vadd.f32 %v339, %v1568
    %1570 = vmatprep.mubr.bf16.mxu0 %v737
    %1571 = vmatmul.mubr.bf16.gmra.mrb[0].mxu0 %v736
    %v1572 = vpop.f32.mrb[0].mxu0
    %v1573 = vadd.f32 %v335, %v1572
    %v1574 = vpop.f32.mrb[0].mxu0
    %v1575 = vadd.f32 %v339, %v1574
    %v1576 = vpop.f32.mrb[0].mxu0
    %v1577 = vadd.f32 %v335, %v1576
    %v1578 = vpop.f32.mrb[0].mxu0
    %v1579 = vadd.f32 %v339, %v1578
    %1580 = vmatprep.mubr.bf16.mxu0 %v744
    %1581 = vmatmul.mubr.bf16.gmra.mrb[0].mxu0 %v743
    %v1582 = vpop.f32.mrb[0].mxu0
    %v1583 = vadd.f32 %v335, %v1582
    %v1584 = vpop.f32.mrb[0].mxu0
    %v1585 = vadd.f32 %v339, %v1584
    %v1586 = vpop.f32.mrb[0].mxu0
    %v1587 = vadd.f32 %v335, %v1586
    %v1588 = vpop.f32.mrb[0].mxu0
    %v1589 = vadd.f32 %v339, %v1588
    %1590 = vmatprep.mubr.bf16.mxu0 %v751
    %1591 = vmatmul.mubr.bf16.gmra.mrb[0].mxu0 %v750
    %v1592 = vpop.f32.mrb[0].mxu0
    %v1593 = vadd.f32 %v335, %v1592
    %v1594 = vpop.f32.mrb[0].mxu0
    %v1595 = vadd.f32 %v339, %v1594
    %v1596 = vpop.f32.mrb[0].mxu0
    %v1597 = vadd.f32 %v335, %v1596
    %v1598 = vpop.f32.mrb[0].mxu0
    %v1599 = vadd.f32 %v339, %v1598
    %1600 = vmatprep.mubr.bf16.mxu0 %v758
    %1601 = vmatmul.mubr.bf16.gmra.mrb[0].mxu0 %v757
    %v1602 = vpop.f32.mrb[0].mxu0
    %v1603 = vadd.f32 %v335, %v1602
    %v1604 = vpop.f32.mrb[0].mxu0
    %v1605 = vadd.f32 %v339, %v1604
    %v1606 = vpop.f32.mrb[0].mxu0
    %v1607 = vadd.f32 %v335, %v1606
    %v1608 = vpop.f32.mrb[0].mxu0
    %v1609 = vadd.f32 %v339, %v1608
    %1610 = vmatprep.mubr.bf16.mxu0 %v765
    %1611 = vmatmul.mubr.bf16.gmra.mrb[0].mxu0 %v764
    %v1612 = vpop.f32.mrb[0].mxu0
    %v1613 = vadd.f32 %v335, %v1612
    %v1614 = vpop.f32.mrb[0].mxu0
    %v1615 = vadd.f32 %v339, %v1614
    %v1616 = vpop.f32.mrb[0].mxu0
    %v1617 = vadd.f32 %v335, %v1616
    %v1618 = vpop.f32.mrb[0].mxu0
    %v1619 = vadd.f32 %v339, %v1618
    %1620 = vmatprep.mubr.bf16.mxu0 %v772
    %1621 = vmatmul.mubr.bf16.gmra.mrb[0].mxu0 %v771
    %v1622 = vpop.f32.mrb[0].mxu0
    %v1623 = vadd.f32 %v335, %v1622
    %v1624 = vpop.f32.mrb[0].mxu0
    %v1625 = vadd.f32 %v339, %v1624
    %v1626 = vpop.f32.mrb[0].mxu0
    %v1627 = vadd.f32 %v335, %v1626
    %v1628 = vpop.f32.mrb[0].mxu0
    %v1629 = vadd.f32 %v339, %v1628
    %1630 = vmatprep.mubr.bf16.mxu0 %v779
    %1631 = vmatmul.mubr.bf16.gmra.mrb[0].mxu0 %v778
    %v1632 = vpop.f32.mrb[0].mxu0
    %v1633 = vadd.f32 %v335, %v1632
    %v1634 = vpop.f32.mrb[0].mxu0
    %v1635 = vadd.f32 %v339, %v1634
    %v1636 = vpop.f32.mrb[0].mxu0
    %v1637 = vadd.f32 %v335, %v1636
    %v1638 = vpop.f32.mrb[0].mxu0
    %v1639 = vadd.f32 %v339, %v1638
    %1640 = vmatprep.mubr.bf16.mxu0 %v786
    %1641 = vmatmul.mubr.bf16.gmra.mrb[0].mxu0 %v785
    %v1642 = vpop.f32.mrb[0].mxu0
    %v1643 = vadd.f32 %v335, %v1642
    %v1644 = vpop.f32.mrb[0].mxu0
    %v1645 = vadd.f32 %v339, %v1644
    %v1646 = vpop.f32.mrb[0].mxu0
    %v1647 = vadd.f32 %v335, %v1646
    %v1648 = vpop.f32.mrb[0].mxu0
    %v1649 = vadd.f32 %v339, %v1648
    %1650 = vmatprep.mubr.bf16.mxu0 %v793
    %1651 = vmatmul.mubr.bf16.gmra.mrb[0].mxu0 %v792
    %v1652 = vpop.f32.mrb[0].mxu0
    %v1653 = vadd.f32 %v335, %v1652
    %v1654 = vpop.f32.mrb[0].mxu0
    %v1655 = vadd.f32 %v339, %v1654
    %v1656 = vpop.f32.mrb[0].mxu0
    %v1657 = vadd.f32 %v335, %v1656
    %v1658 = vpop.f32.mrb[0].mxu0
    %v1659 = vadd.f32 %v339, %v1658
    %1660 = vmatprep.mubr.bf16.mxu0 %v800
    %1661 = vmatmul.mubr.bf16.gmra.mrb[0].mxu0 %v799
    %v1662 = vpop.f32.mrb[0].mxu0
    %v1663 = vadd.f32 %v335, %v1662
    %v1664 = vpop.f32.mrb[0].mxu0
    %v1665 = vadd.f32 %v339, %v1664
    %v1666 = vpop.f32.mrb[0].mxu0
    %v1667 = vadd.f32 %v335, %v1666
    %v1668 = vpop.f32.mrb[0].mxu0
    %v1669 = vadd.f32 %v339, %v1668
    %1670 = vdwg.mxu0
    %1671 = vmatprep.subr.bf16.mxu0 %v1287
    %1672 = vmatpush1.bf16.msra.mxu0 %v1286
    %1673 = vmatprep.subr.bf16.mxu0 %v1289
    %1674 = vmatpush1.bf16.msra.mxu0 %v1288
    %1675 = vmatprep.subr.bf16.mxu0 %v1291
    %1676 = vmatpush1.bf16.msra.mxu0 %v1290
    %1677 = vmatprep.subr.bf16.mxu0 %v1293
    %1678 = vmatpush1.bf16.msra.mxu0 %v1292
    %1679 = vmatprep.subr.bf16.mxu0 %v1295
    %1680 = vmatpush1.bf16.msra.mxu0 %v1294
    %1681 = vmatprep.subr.bf16.mxu0 %v1297
    %1682 = vmatpush1.bf16.msra.mxu0 %v1296
    %1683 = vmatprep.subr.bf16.mxu0 %v1299
    %1684 = vmatpush1.bf16.msra.mxu0 %v1298
    %1685 = vmatprep.subr.bf16.mxu0 %v1301
    %1686 = vmatpush1.bf16.msra.mxu0 %v1300
    %1687 = vmatprep.subr.bf16.mxu0 %v1303
    %1688 = vmatpush1.bf16.msra.mxu0 %v1302
    %1689 = vmatprep.subr.bf16.mxu0 %v1305
    %1690 = vmatpush1.bf16.msra.mxu0 %v1304
    %1691 = vmatprep.subr.bf16.mxu0 %v1307
    %1692 = vmatpush1.bf16.msra.mxu0 %v1306
    %1693 = vmatprep.subr.bf16.mxu0 %v1309
    %1694 = vmatpush1.bf16.msra.mxu0 %v1308
    %1695 = vmatprep.subr.bf16.mxu0 %v1311
    %1696 = vmatpush1.bf16.msra.mxu0 %v1310
    %1697 = vmatprep.subr.bf16.mxu0 %v1313
    %1698 = vmatpush1.bf16.msra.mxu0 %v1312
    %1699 = vmatprep.subr.bf16.mxu0 %v1315
    %1700 = vmatpush1.bf16.msra.mxu0 %v1314
    %1701 = vmatprep.subr.bf16.mxu0 %v1317
    %1702 = vmatpush1.bf16.msra.mxu0 %v1316
    %1703 = vmatprep.mubr.bf16.mxu0 %v697
    %1704 = vmatmul.mubr.bf16.gmra.mrb[0].mxu0 %v696
    %v1705 = vpop.f32.mrb[0].mxu0
    %v1706 = vadd.f32 %v1513, %v1705
    %v1707 = vpop.f32.mrb[0].mxu0
    %v1708 = vadd.f32 %v1515, %v1707
    %v1709 = vpop.f32.mrb[0].mxu0
    %v1710 = vadd.f32 %v1517, %v1709
    %v1711 = vpop.f32.mrb[0].mxu0
    %v1712 = vadd.f32 %v1519, %v1711
    %1713 = vmatprep.mubr.bf16.mxu0 %v704
    %1714 = vmatmul.mubr.bf16.gmra.mrb[0].mxu0 %v703
    %v1715 = vpop.f32.mrb[0].mxu0
    %v1716 = vadd.f32 %v1523, %v1715
    %v1717 = vpop.f32.mrb[0].mxu0
    %v1718 = vadd.f32 %v1525, %v1717
    %v1719 = vpop.f32.mrb[0].mxu0
    %v1720 = vadd.f32 %v1527, %v1719
    %v1721 = vpop.f32.mrb[0].mxu0
    %v1722 = vadd.f32 %v1529, %v1721
    %1723 = vmatprep.mubr.bf16.mxu0 %v711
    %1724 = vmatmul.mubr.bf16.gmra.mrb[0].mxu0 %v710
    %v1725 = vpop.f32.mrb[0].mxu0
    %v1726 = vadd.f32 %v1533, %v1725
    %v1727 = vpop.f32.mrb[0].mxu0
    %v1728 = vadd.f32 %v1535, %v1727
    %v1729 = vpop.f32.mrb[0].mxu0
    %v1730 = vadd.f32 %v1537, %v1729
    %v1731 = vpop.f32.mrb[0].mxu0
    %v1732 = vadd.f32 %v1539, %v1731
    %1733 = vmatprep.mubr.bf16.mxu0 %v718
    %1734 = vmatmul.mubr.bf16.gmra.mrb[0].mxu0 %v717
    %v1735 = vpop.f32.mrb[0].mxu0
    %v1736 = vadd.f32 %v1543, %v1735
    %v1737 = vpop.f32.mrb[0].mxu0
    %v1738 = vadd.f32 %v1545, %v1737
    %v1739 = vpop.f32.mrb[0].mxu0
    %v1740 = vadd.f32 %v1547, %v1739
    %v1741 = vpop.f32.mrb[0].mxu0
    %v1742 = vadd.f32 %v1549, %v1741
    %1743 = vmatprep.mubr.bf16.mxu0 %v725
    %1744 = vmatmul.mubr.bf16.gmra.mrb[0].mxu0 %v724
    %v1745 = vpop.f32.mrb[0].mxu0
    %v1746 = vadd.f32 %v1553, %v1745
    %v1747 = vpop.f32.mrb[0].mxu0
    %v1748 = vadd.f32 %v1555, %v1747
    %v1749 = vpop.f32.mrb[0].mxu0
    %v1750 = vadd.f32 %v1557, %v1749
    %v1751 = vpop.f32.mrb[0].mxu0
    %v1752 = vadd.f32 %v1559, %v1751
    %1753 = vmatprep.mubr.bf16.mxu0 %v732
    %1754 = vmatmul.mubr.bf16.gmra.mrb[0].mxu0 %v731
    %v1755 = vpop.f32.mrb[0].mxu0
    %v1756 = vadd.f32 %v1563, %v1755
    %v1757 = vpop.f32.mrb[0].mxu0
    %v1758 = vadd.f32 %v1565, %v1757
    %v1759 = vpop.f32.mrb[0].mxu0
    %v1760 = vadd.f32 %v1567, %v1759
    %v1761 = vpop.f32.mrb[0].mxu0
    %v1762 = vadd.f32 %v1569, %v1761
    %1763 = vmatprep.mubr.bf16.mxu0 %v739
    %1764 = vmatmul.mubr.bf16.gmra.mrb[0].mxu0 %v738
    %v1765 = vpop.f32.mrb[0].mxu0
    %v1766 = vadd.f32 %v1573, %v1765
    %v1767 = vpop.f32.mrb[0].mxu0
    %v1768 = vadd.f32 %v1575, %v1767
    %v1769 = vpop.f32.mrb[0].mxu0
    %v1770 = vadd.f32 %v1577, %v1769
    %v1771 = vpop.f32.mrb[0].mxu0
    %v1772 = vadd.f32 %v1579, %v1771
    %1773 = vmatprep.mubr.bf16.mxu0 %v746
    %1774 = vmatmul.mubr.bf16.gmra.mrb[0].mxu0 %v745
    %v1775 = vpop.f32.mrb[0].mxu0
    %v1776 = vadd.f32 %v1583, %v1775
    %v1777 = vpop.f32.mrb[0].mxu0
    %v1778 = vadd.f32 %v1585, %v1777
    %v1779 = vpop.f32.mrb[0].mxu0
    %v1780 = vadd.f32 %v1587, %v1779
    %v1781 = vpop.f32.mrb[0].mxu0
    %v1782 = vadd.f32 %v1589, %v1781
    %1783 = vmatprep.mubr.bf16.mxu0 %v753
    %1784 = vmatmul.mubr.bf16.gmra.mrb[0].mxu0 %v752
    %v1785 = vpop.f32.mrb[0].mxu0
    %v1786 = vadd.f32 %v1593, %v1785
    %v1787 = vpop.f32.mrb[0].mxu0
    %v1788 = vadd.f32 %v1595, %v1787
    %v1789 = vpop.f32.mrb[0].mxu0
    %v1790 = vadd.f32 %v1597, %v1789
    %v1791 = vpop.f32.mrb[0].mxu0
    %v1792 = vadd.f32 %v1599, %v1791
    %1793 = vmatprep.mubr.bf16.mxu0 %v760
    %1794 = vmatmul.mubr.bf16.gmra.mrb[0].mxu0 %v759
    %v1795 = vpop.f32.mrb[0].mxu0
    %v1796 = vadd.f32 %v1603, %v1795
    %v1797 = vpop.f32.mrb[0].mxu0
    %v1798 = vadd.f32 %v1605, %v1797
    %v1799 = vpop.f32.mrb[0].mxu0
    %v1800 = vadd.f32 %v1607, %v1799
    %v1801 = vpop.f32.mrb[0].mxu0
    %v1802 = vadd.f32 %v1609, %v1801
    %1803 = vmatprep.mubr.bf16.mxu0 %v767
    %1804 = vmatmul.mubr.bf16.gmra.mrb[0].mxu0 %v766
    %v1805 = vpop.f32.mrb[0].mxu0
    %v1806 = vadd.f32 %v1613, %v1805
    %v1807 = vpop.f32.mrb[0].mxu0
    %v1808 = vadd.f32 %v1615, %v1807
    %v1809 = vpop.f32.mrb[0].mxu0
    %v1810 = vadd.f32 %v1617, %v1809
    %v1811 = vpop.f32.mrb[0].mxu0
    %v1812 = vadd.f32 %v1619, %v1811
    %1813 = vmatprep.mubr.bf16.mxu0 %v774
    %1814 = vmatmul.mubr.bf16.gmra.mrb[0].mxu0 %v773
    %v1815 = vpop.f32.mrb[0].mxu0
    %v1816 = vadd.f32 %v1623, %v1815
    %v1817 = vpop.f32.mrb[0].mxu0
    %v1818 = vadd.f32 %v1625, %v1817
    %v1819 = vpop.f32.mrb[0].mxu0
    %v1820 = vadd.f32 %v1627, %v1819
    %v1821 = vpop.f32.mrb[0].mxu0
    %v1822 = vadd.f32 %v1629, %v1821
    %1823 = vmatprep.mubr.bf16.mxu0 %v781
    %1824 = vmatmul.mubr.bf16.gmra.mrb[0].mxu0 %v780
    %v1825 = vpop.f32.mrb[0].mxu0
    %v1826 = vadd.f32 %v1633, %v1825
    %v1827 = vpop.f32.mrb[0].mxu0
    %v1828 = vadd.f32 %v1635, %v1827
    %v1829 = vpop.f32.mrb[0].mxu0
    %v1830 = vadd.f32 %v1637, %v1829
    %v1831 = vpop.f32.mrb[0].mxu0
    %v1832 = vadd.f32 %v1639, %v1831
    %1833 = vmatprep.mubr.bf16.mxu0 %v788
    %1834 = vmatmul.mubr.bf16.gmra.mrb[0].mxu0 %v787
    %v1835 = vpop.f32.mrb[0].mxu0
    %v1836 = vadd.f32 %v1643, %v1835
    %v1837 = vpop.f32.mrb[0].mxu0
    %v1838 = vadd.f32 %v1645, %v1837
    %v1839 = vpop.f32.mrb[0].mxu0
    %v1840 = vadd.f32 %v1647, %v1839
    %v1841 = vpop.f32.mrb[0].mxu0
    %v1842 = vadd.f32 %v1649, %v1841
    %1843 = vmatprep.mubr.bf16.mxu0 %v795
    %1844 = vmatmul.mubr.bf16.gmra.mrb[0].mxu0 %v794
    %v1845 = vpop.f32.mrb[0].mxu0
    %v1846 = vadd.f32 %v1653, %v1845
    %v1847 = vpop.f32.mrb[0].mxu0
    %v1848 = vadd.f32 %v1655, %v1847
    %v1849 = vpop.f32.mrb[0].mxu0
    %v1850 = vadd.f32 %v1657, %v1849
    %v1851 = vpop.f32.mrb[0].mxu0
    %v1852 = vadd.f32 %v1659, %v1851
    %1853 = vmatprep.mubr.bf16.mxu0 %v802
    %1854 = vmatmul.mubr.bf16.gmra.mrb[0].mxu0 %v801
    %v1855 = vpop.f32.mrb[0].mxu0
    %v1856 = vadd.f32 %v1663, %v1855
    %v1857 = vpop.f32.mrb[0].mxu0
    %v1858 = vadd.f32 %v1665, %v1857
    %v1859 = vpop.f32.mrb[0].mxu0
    %v1860 = vadd.f32 %v1667, %v1859
    %v1861 = vpop.f32.mrb[0].mxu0
    %v1862 = vadd.f32 %v1669, %v1861
    %1863 = vdwg.mxu0
    %1864 = vmatprep.subr.bf16.mxu0 %v1319
    %1865 = vmatpush1.bf16.msra.mxu0 %v1318
    %1866 = vmatprep.subr.bf16.mxu0 %v1321
    %1867 = vmatpush1.bf16.msra.mxu0 %v1320
    %1868 = vmatprep.subr.bf16.mxu0 %v1323
    %1869 = vmatpush1.bf16.msra.mxu0 %v1322
    %1870 = vmatprep.subr.bf16.mxu0 %v1325
    %1871 = vmatpush1.bf16.msra.mxu0 %v1324
    %1872 = vmatprep.subr.bf16.mxu0 %v1327
    %1873 = vmatpush1.bf16.msra.mxu0 %v1326
    %1874 = vmatprep.subr.bf16.mxu0 %v1329
    %1875 = vmatpush1.bf16.msra.mxu0 %v1328
    %1876 = vmatprep.subr.bf16.mxu0 %v1331
    %1877 = vmatpush1.bf16.msra.mxu0 %v1330
    %1878 = vmatprep.subr.bf16.mxu0 %v1333
    %1879 = vmatpush1.bf16.msra.mxu0 %v1332
    %1880 = vmatprep.subr.bf16.mxu0 %v1335
    %1881 = vmatpush1.bf16.msra.mxu0 %v1334
    %1882 = vmatprep.subr.bf16.mxu0 %v1337
    %1883 = vmatpush1.bf16.msra.mxu0 %v1336
    %1884 = vmatprep.subr.bf16.mxu0 %v1339
    %1885 = vmatpush1.bf16.msra.mxu0 %v1338
    %1886 = vmatprep.subr.bf16.mxu0 %v1341
    %1887 = vmatpush1.bf16.msra.mxu0 %v1340
    %1888 = vmatprep.subr.bf16.mxu0 %v1343
    %1889 = vmatpush1.bf16.msra.mxu0 %v1342
    %1890 = vmatprep.subr.bf16.mxu0 %v1345
    %1891 = vmatpush1.bf16.msra.mxu0 %v1344
    %1892 = vmatprep.subr.bf16.mxu0 %v1347
    %1893 = vmatpush1.bf16.msra.mxu0 %v1346
    %1894 = vmatprep.subr.bf16.mxu0 %v1349
    %1895 = vmatpush1.bf16.msra.mxu0 %v1348
    %1896 = vmatprep.mubr.bf16.mxu0 %v699
    %1897 = vmatmul.mubr.bf16.gmra.mrb[0].mxu0 %v698
    %v1898 = vpop.f32.mrb[0].mxu0
    %v1899 = vadd.f32 %v1706, %v1898
    %v1900 = vpop.f32.mrb[0].mxu0
    %v1901 = vadd.f32 %v1708, %v1900
    %v1902 = vpop.f32.mrb[0].mxu0
    %v1903 = vadd.f32 %v1710, %v1902
    %v1904 = vpop.f32.mrb[0].mxu0
    %v1905 = vadd.f32 %v1712, %v1904
    %1906 = vmatprep.mubr.bf16.mxu0 %v706
    %1907 = vmatmul.mubr.bf16.gmra.mrb[0].mxu0 %v705
    %v1908 = vpop.f32.mrb[0].mxu0
    %v1909 = vadd.f32 %v1716, %v1908
    %v1910 = vpop.f32.mrb[0].mxu0
    %v1911 = vadd.f32 %v1718, %v1910
    %v1912 = vpop.f32.mrb[0].mxu0
    %v1913 = vadd.f32 %v1720, %v1912
    %v1914 = vpop.f32.mrb[0].mxu0
    %v1915 = vadd.f32 %v1722, %v1914
    %1916 = vmatprep.mubr.bf16.mxu0 %v713
    %1917 = vmatmul.mubr.bf16.gmra.mrb[0].mxu0 %v712
    %v1918 = vpop.f32.mrb[0].mxu0
    %v1919 = vadd.f32 %v1726, %v1918
    %v1920 = vpop.f32.mrb[0].mxu0
    %v1921 = vadd.f32 %v1728, %v1920
    %v1922 = vpop.f32.mrb[0].mxu0
    %v1923 = vadd.f32 %v1730, %v1922
    %v1924 = vpop.f32.mrb[0].mxu0
    %v1925 = vadd.f32 %v1732, %v1924
    %1926 = vmatprep.mubr.bf16.mxu0 %v720
    %1927 = vmatmul.mubr.bf16.gmra.mrb[0].mxu0 %v719
    %v1928 = vpop.f32.mrb[0].mxu0
    %v1929 = vadd.f32 %v1736, %v1928
    %v1930 = vpop.f32.mrb[0].mxu0
    %v1931 = vadd.f32 %v1738, %v1930
    %v1932 = vpop.f32.mrb[0].mxu0
    %v1933 = vadd.f32 %v1740, %v1932
    %v1934 = vpop.f32.mrb[0].mxu0
    %v1935 = vadd.f32 %v1742, %v1934
    %1936 = vmatprep.mubr.bf16.mxu0 %v727
    %1937 = vmatmul.mubr.bf16.gmra.mrb[0].mxu0 %v726
    %v1938 = vpop.f32.mrb[0].mxu0
    %v1939 = vadd.f32 %v1746, %v1938
    %v1940 = vpop.f32.mrb[0].mxu0
    %v1941 = vadd.f32 %v1748, %v1940
    %v1942 = vpop.f32.mrb[0].mxu0
    %v1943 = vadd.f32 %v1750, %v1942
    %v1944 = vpop.f32.mrb[0].mxu0
    %v1945 = vadd.f32 %v1752, %v1944
    %1946 = vmatprep.mubr.bf16.mxu0 %v734
    %1947 = vmatmul.mubr.bf16.gmra.mrb[0].mxu0 %v733
    %v1948 = vpop.f32.mrb[0].mxu0
    %v1949 = vadd.f32 %v1756, %v1948
    %v1950 = vpop.f32.mrb[0].mxu0
    %v1951 = vadd.f32 %v1758, %v1950
    %v1952 = vpop.f32.mrb[0].mxu0
    %v1953 = vadd.f32 %v1760, %v1952
    %v1954 = vpop.f32.mrb[0].mxu0
    %v1955 = vadd.f32 %v1762, %v1954
    %1956 = vmatprep.mubr.bf16.mxu0 %v741
    %1957 = vmatmul.mubr.bf16.gmra.mrb[0].mxu0 %v740
    %v1958 = vpop.f32.mrb[0].mxu0
    %v1959 = vadd.f32 %v1766, %v1958
    %v1960 = vpop.f32.mrb[0].mxu0
    %v1961 = vadd.f32 %v1768, %v1960
    %v1962 = vpop.f32.mrb[0].mxu0
    %v1963 = vadd.f32 %v1770, %v1962
    %v1964 = vpop.f32.mrb[0].mxu0
    %v1965 = vadd.f32 %v1772, %v1964
    %1966 = vmatprep.mubr.bf16.mxu0 %v748
    %1967 = vmatmul.mubr.bf16.gmra.mrb[0].mxu0 %v747
    %v1968 = vpop.f32.mrb[0].mxu0
    %v1969 = vadd.f32 %v1776, %v1968
    %v1970 = vpop.f32.mrb[0].mxu0
    %v1971 = vadd.f32 %v1778, %v1970
    %v1972 = vpop.f32.mrb[0].mxu0
    %v1973 = vadd.f32 %v1780, %v1972
    %v1974 = vpop.f32.mrb[0].mxu0
    %v1975 = vadd.f32 %v1782, %v1974
    %1976 = vmatprep.mubr.bf16.mxu0 %v755
    %1977 = vmatmul.mubr.bf16.gmra.mrb[0].mxu0 %v754
    %v1978 = vpop.f32.mrb[0].mxu0
    %v1979 = vadd.f32 %v1786, %v1978
    %v1980 = vpop.f32.mrb[0].mxu0
    %v1981 = vadd.f32 %v1788, %v1980
    %v1982 = vpop.f32.mrb[0].mxu0
    %v1983 = vadd.f32 %v1790, %v1982
    %v1984 = vpop.f32.mrb[0].mxu0
    %v1985 = vadd.f32 %v1792, %v1984
    %1986 = vmatprep.mubr.bf16.mxu0 %v762
    %1987 = vmatmul.mubr.bf16.gmra.mrb[0].mxu0 %v761
    %v1988 = vpop.f32.mrb[0].mxu0
    %v1989 = vadd.f32 %v1796, %v1988
    %v1990 = vpop.f32.mrb[0].mxu0
    %v1991 = vadd.f32 %v1798, %v1990
    %v1992 = vpop.f32.mrb[0].mxu0
    %v1993 = vadd.f32 %v1800, %v1992
    %v1994 = vpop.f32.mrb[0].mxu0
    %v1995 = vadd.f32 %v1802, %v1994
    %1996 = vmatprep.mubr.bf16.mxu0 %v769
    %1997 = vmatmul.mubr.bf16.gmra.mrb[0].mxu0 %v768
    %v1998 = vpop.f32.mrb[0].mxu0
    %v1999 = vadd.f32 %v1806, %v1998
    %v2000 = vpop.f32.mrb[0].mxu0
    %v2001 = vadd.f32 %v1808, %v2000
    %v2002 = vpop.f32.mrb[0].mxu0
    %v2003 = vadd.f32 %v1810, %v2002
    %v2004 = vpop.f32.mrb[0].mxu0
    %v2005 = vadd.f32 %v1812, %v2004
    %2006 = vmatprep.mubr.bf16.mxu0 %v776
    %2007 = vmatmul.mubr.bf16.gmra.mrb[0].mxu0 %v775
    %v2008 = vpop.f32.mrb[0].mxu0
    %v2009 = vadd.f32 %v1816, %v2008
    %v2010 = vpop.f32.mrb[0].mxu0
    %v2011 = vadd.f32 %v1818, %v2010
    %v2012 = vpop.f32.mrb[0].mxu0
    %v2013 = vadd.f32 %v1820, %v2012
    %v2014 = vpop.f32.mrb[0].mxu0
    %v2015 = vadd.f32 %v1822, %v2014
    %2016 = vmatprep.mubr.bf16.mxu0 %v783
    %2017 = vmatmul.mubr.bf16.gmra.mrb[0].mxu0 %v782
    %v2018 = vpop.f32.mrb[0].mxu0
    %v2019 = vadd.f32 %v1826, %v2018
    %v2020 = vpop.f32.mrb[0].mxu0
    %v2021 = vadd.f32 %v1828, %v2020
    %v2022 = vpop.f32.mrb[0].mxu0
    %v2023 = vadd.f32 %v1830, %v2022
    %v2024 = vpop.f32.mrb[0].mxu0
    %v2025 = vadd.f32 %v1832, %v2024
    %2026 = vmatprep.mubr.bf16.mxu0 %v790
    %2027 = vmatmul.mubr.bf16.gmra.mrb[0].mxu0 %v789
    %v2028 = vpop.f32.mrb[0].mxu0
    %v2029 = vadd.f32 %v1836, %v2028
    %v2030 = vpop.f32.mrb[0].mxu0
    %v2031 = vadd.f32 %v1838, %v2030
    %v2032 = vpop.f32.mrb[0].mxu0
    %v2033 = vadd.f32 %v1840, %v2032
    %v2034 = vpop.f32.mrb[0].mxu0
    %v2035 = vadd.f32 %v1842, %v2034
    %2036 = vmatprep.mubr.bf16.mxu0 %v797
    %2037 = vmatmul.mubr.bf16.gmra.mrb[0].mxu0 %v796
    %v2038 = vpop.f32.mrb[0].mxu0
    %v2039 = vadd.f32 %v1846, %v2038
    %v2040 = vpop.f32.mrb[0].mxu0
    %v2041 = vadd.f32 %v1848, %v2040
    %v2042 = vpop.f32.mrb[0].mxu0
    %v2043 = vadd.f32 %v1850, %v2042
    %v2044 = vpop.f32.mrb[0].mxu0
    %v2045 = vadd.f32 %v1852, %v2044
    %2046 = vmatprep.mubr.bf16.mxu0 %v804
    %2047 = vmatmul.mubr.bf16.gmra.mrb[0].mxu0 %v803
    %v2048 = vpop.f32.mrb[0].mxu0
    %v2049 = vadd.f32 %v1856, %v2048
    %v2050 = vpop.f32.mrb[0].mxu0
    %v2051 = vadd.f32 %v1858, %v2050
    %v2052 = vpop.f32.mrb[0].mxu0
    %v2053 = vadd.f32 %v1860, %v2052
    %v2054 = vpop.f32.mrb[0].mxu0
    %v2055 = vadd.f32 %v1862, %v2054
    %2056 = vdwg.mxu0
    %2057 = vmatprep.subr.bf16.mxu0 %v1351
    %2058 = vmatpush1.bf16.msra.mxu0 %v1350
    %2059 = vmatprep.subr.bf16.mxu0 %v1353
    %2060 = vmatpush1.bf16.msra.mxu0 %v1352
    %2061 = vmatprep.subr.bf16.mxu0 %v1355
    %2062 = vmatpush1.bf16.msra.mxu0 %v1354
    %2063 = vmatprep.subr.bf16.mxu0 %v1357
    %2064 = vmatpush1.bf16.msra.mxu0 %v1356
    %2065 = vmatprep.subr.bf16.mxu0 %v1359
    %2066 = vmatpush1.bf16.msra.mxu0 %v1358
    %2067 = vmatprep.subr.bf16.mxu0 %v1361
    %2068 = vmatpush1.bf16.msra.mxu0 %v1360
    %2069 = vmatprep.subr.bf16.mxu0 %v1363
    %2070 = vmatpush1.bf16.msra.mxu0 %v1362
    %2071 = vmatprep.subr.bf16.mxu0 %v1365
    %2072 = vmatpush1.bf16.msra.mxu0 %v1364
    %2073 = vmatprep.subr.bf16.mxu0 0
    %2074 = vmatpush1.bf16.msra.mxu0 0
    %2075 = vmatprep.subr.bf16.mxu0 0
    %2076 = vmatpush1.bf16.msra.mxu0 0
    %2077 = vmatprep.subr.bf16.mxu0 0
    %2078 = vmatpush1.bf16.msra.mxu0 0
    %2079 = vmatprep.subr.bf16.mxu0 0
    %2080 = vmatpush1.bf16.msra.mxu0 0
    %2081 = vmatprep.subr.bf16.mxu0 0
    %2082 = vmatpush1.bf16.msra.mxu0 0
    %2083 = vmatprep.subr.bf16.mxu0 0
    %2084 = vmatpush1.bf16.msra.mxu0 0
    %2085 = vmatprep.subr.bf16.mxu0 0
    %2086 = vmatpush1.bf16.msra.mxu0 0
    %2087 = vmatprep.subr.bf16.mxu0 0
    %2088 = vmatpush1.bf16.msra.mxu0 0
    %2089 = vmatprep.mubr.bf16.mxu0 0
    %2090 = vmatmul.mubr.bf16.gmra.mrb[0].mxu0 %v700
    %v2091 = vpop.f32.mrb[0].mxu0
    %v2092 = vadd.f32 %v1899, %v2091
    %v2093 = vpop.f32.mrb[0].mxu0
    %v2094 = vadd.f32 %v1901, %v2093
    %v2095 = vpop.f32.mrb[0].mxu0
    %v2096 = vadd.f32 %v1903, %v2095
    %v2097 = vpop.f32.mrb[0].mxu0
    %v2098 = vadd.f32 %v1905, %v2097
    %2099 = vmatprep.mubr.bf16.mxu0 0
    %2100 = vmatmul.mubr.bf16.gmra.mrb[0].mxu0 %v707
    %v2101 = vpop.f32.mrb[0].mxu0
    %v2102 = vadd.f32 %v1909, %v2101
    %v2103 = vpop.f32.mrb[0].mxu0
    %v2104 = vadd.f32 %v1911, %v2103
    %v2105 = vpop.f32.mrb[0].mxu0
    %v2106 = vadd.f32 %v1913, %v2105
    %v2107 = vpop.f32.mrb[0].mxu0
    %v2108 = vadd.f32 %v1915, %v2107
    %2109 = vmatprep.mubr.bf16.mxu0 0
    %2110 = vmatmul.mubr.bf16.gmra.mrb[0].mxu0 %v714
    %v2111 = vpop.f32.mrb[0].mxu0
    %v2112 = vadd.f32 %v1919, %v2111
    %v2113 = vpop.f32.mrb[0].mxu0
    %v2114 = vadd.f32 %v1921, %v2113
    %v2115 = vpop.f32.mrb[0].mxu0
    %v2116 = vadd.f32 %v1923, %v2115
    %v2117 = vpop.f32.mrb[0].mxu0
    %v2118 = vadd.f32 %v1925, %v2117
    %2119 = vmatprep.mubr.bf16.mxu0 0
    %2120 = vmatmul.mubr.bf16.gmra.mrb[0].mxu0 %v721
    %v2121 = vpop.f32.mrb[0].mxu0
    %v2122 = vadd.f32 %v1929, %v2121
    %v2123 = vpop.f32.mrb[0].mxu0
    %v2124 = vadd.f32 %v1931, %v2123
    %v2125 = vpop.f32.mrb[0].mxu0
    %v2126 = vadd.f32 %v1933, %v2125
    %v2127 = vpop.f32.mrb[0].mxu0
    %v2128 = vadd.f32 %v1935, %v2127
    %2129 = vmatprep.mubr.bf16.mxu0 0
    %2130 = vmatmul.mubr.bf16.gmra.mrb[0].mxu0 %v728
    %v2131 = vpop.f32.mrb[0].mxu0
    %v2132 = vadd.f32 %v1939, %v2131
    %v2133 = vpop.f32.mrb[0].mxu0
    %v2134 = vadd.f32 %v1941, %v2133
    %v2135 = vpop.f32.mrb[0].mxu0
    %v2136 = vadd.f32 %v1943, %v2135
    %v2137 = vpop.f32.mrb[0].mxu0
    %v2138 = vadd.f32 %v1945, %v2137
    %2139 = vmatprep.mubr.bf16.mxu0 0
    %2140 = vmatmul.mubr.bf16.gmra.mrb[0].mxu0 %v735
    %v2141 = vpop.f32.mrb[0].mxu0
    %v2142 = vadd.f32 %v1949, %v2141
    %v2143 = vpop.f32.mrb[0].mxu0
    %v2144 = vadd.f32 %v1951, %v2143
    %v2145 = vpop.f32.mrb[0].mxu0
    %v2146 = vadd.f32 %v1953, %v2145
    %v2147 = vpop.f32.mrb[0].mxu0
    %v2148 = vadd.f32 %v1955, %v2147
    %2149 = vmatprep.mubr.bf16.mxu0 0
    %2150 = vmatmul.mubr.bf16.gmra.mrb[0].mxu0 %v742
    %v2151 = vpop.f32.mrb[0].mxu0
    %v2152 = vadd.f32 %v1959, %v2151
    %v2153 = vpop.f32.mrb[0].mxu0
    %v2154 = vadd.f32 %v1961, %v2153
    %v2155 = vpop.f32.mrb[0].mxu0
    %v2156 = vadd.f32 %v1963, %v2155
    %v2157 = vpop.f32.mrb[0].mxu0
    %v2158 = vadd.f32 %v1965, %v2157
    %2159 = vmatprep.mubr.bf16.mxu0 0
    %2160 = vmatmul.mubr.bf16.gmra.mrb[0].mxu0 %v749
    %v2161 = vpop.f32.mrb[0].mxu0
    %v2162 = vadd.f32 %v1969, %v2161
    %v2163 = vpop.f32.mrb[0].mxu0
    %v2164 = vadd.f32 %v1971, %v2163
    %v2165 = vpop.f32.mrb[0].mxu0
    %v2166 = vadd.f32 %v1973, %v2165
    %v2167 = vpop.f32.mrb[0].mxu0
    %v2168 = vadd.f32 %v1975, %v2167
    %2169 = vmatprep.mubr.bf16.mxu0 0
    %2170 = vmatmul.mubr.bf16.gmra.mrb[0].mxu0 %v756
    %v2171 = vpop.f32.mrb[0].mxu0
    %v2172 = vadd.f32 %v1979, %v2171
    %v2173 = vpop.f32.mrb[0].mxu0
    %v2174 = vadd.f32 %v1981, %v2173
    %v2175 = vpop.f32.mrb[0].mxu0
    %v2176 = vadd.f32 %v1983, %v2175
    %v2177 = vpop.f32.mrb[0].mxu0
    %v2178 = vadd.f32 %v1985, %v2177
    %2179 = vmatprep.mubr.bf16.mxu0 0
    %2180 = vmatmul.mubr.bf16.gmra.mrb[0].mxu0 %v763
    %v2181 = vpop.f32.mrb[0].mxu0
    %v2182 = vadd.f32 %v1989, %v2181
    %v2183 = vpop.f32.mrb[0].mxu0
    %v2184 = vadd.f32 %v1991, %v2183
    %v2185 = vpop.f32.mrb[0].mxu0
    %v2186 = vadd.f32 %v1993, %v2185
    %v2187 = vpop.f32.mrb[0].mxu0
    %v2188 = vadd.f32 %v1995, %v2187
    %2189 = vmatprep.mubr.bf16.mxu0 0
    %2190 = vmatmul.mubr.bf16.gmra.mrb[0].mxu0 %v770
    %v2191 = vpop.f32.mrb[0].mxu0
    %v2192 = vadd.f32 %v1999, %v2191
    %v2193 = vpop.f32.mrb[0].mxu0
    %v2194 = vadd.f32 %v2001, %v2193
    %v2195 = vpop.f32.mrb[0].mxu0
    %v2196 = vadd.f32 %v2003, %v2195
    %v2197 = vpop.f32.mrb[0].mxu0
    %v2198 = vadd.f32 %v2005, %v2197
    %2199 = vmatprep.mubr.bf16.mxu0 0
    %2200 = vmatmul.mubr.bf16.gmra.mrb[0].mxu0 %v777
    %v2201 = vpop.f32.mrb[0].mxu0
    %v2202 = vadd.f32 %v2009, %v2201
    %v2203 = vpop.f32.mrb[0].mxu0
    %v2204 = vadd.f32 %v2011, %v2203
    %v2205 = vpop.f32.mrb[0].mxu0
    %v2206 = vadd.f32 %v2013, %v2205
    %v2207 = vpop.f32.mrb[0].mxu0
    %v2208 = vadd.f32 %v2015, %v2207
    %2209 = vmatprep.mubr.bf16.mxu0 0
    %2210 = vmatmul.mubr.bf16.gmra.mrb[0].mxu0 %v784
    %v2211 = vpop.f32.mrb[0].mxu0
    %v2212 = vadd.f32 %v2019, %v2211
    %v2213 = vpop.f32.mrb[0].mxu0
    %v2214 = vadd.f32 %v2021, %v2213
    %v2215 = vpop.f32.mrb[0].mxu0
    %v2216 = vadd.f32 %v2023, %v2215
    %v2217 = vpop.f32.mrb[0].mxu0
    %v2218 = vadd.f32 %v2025, %v2217
    %2219 = vmatprep.mubr.bf16.mxu0 0
    %2220 = vmatmul.mubr.bf16.gmra.mrb[0].mxu0 %v791
    %v2221 = vpop.f32.mrb[0].mxu0
    %v2222 = vadd.f32 %v2029, %v2221
    %v2223 = vpop.f32.mrb[0].mxu0
    %v2224 = vadd.f32 %v2031, %v2223
    %v2225 = vpop.f32.mrb[0].mxu0
    %v2226 = vadd.f32 %v2033, %v2225
    %v2227 = vpop.f32.mrb[0].mxu0
    %v2228 = vadd.f32 %v2035, %v2227
    %2229 = vmatprep.mubr.bf16.mxu0 0
    %2230 = vmatmul.mubr.bf16.gmra.mrb[0].mxu0 %v798
    %v2231 = vpop.f32.mrb[0].mxu0
    %v2232 = vadd.f32 %v2039, %v2231
    %v2233 = vpop.f32.mrb[0].mxu0
    %v2234 = vadd.f32 %v2041, %v2233
    %v2235 = vpop.f32.mrb[0].mxu0
    %v2236 = vadd.f32 %v2043, %v2235
    %v2237 = vpop.f32.mrb[0].mxu0
    %v2238 = vadd.f32 %v2045, %v2237
    %2239 = vmatprep.mubr.bf16.mxu0 0
    %2240 = vmatmul.mubr.bf16.gmra.mrb[0].mxu0 %v805
    %v2241 = vpop.f32.mrb[0].mxu0
    %v2242 = vadd.f32 %v2049, %v2241
    %v2243 = vpop.f32.mrb[0].mxu0
    %v2244 = vadd.f32 %v2051, %v2243
    %v2245 = vpop.f32.mrb[0].mxu0
    %v2246 = vadd.f32 %v2053, %v2245
    %v2247 = vpop.f32.mrb[0].mxu0
    %v2248 = vadd.f32 %v2055, %v2247
    %2249 = vdwg.mxu0
    %v2250 = vmax.f32 %v2092, 0.0
    %v2251 = vmax.f32 %v2094, 0.0
    %v2252 = vmax.f32 %v2096, 0.0
    %v2253 = vmax.f32 %v2098, 0.0
    %v2254 = vmax.f32 %v2102, 0.0
    %v2255 = vmax.f32 %v2104, 0.0
    %v2256 = vmax.f32 %v2106, 0.0
    %v2257 = vmax.f32 %v2108, 0.0
    %v2258 = vmax.f32 %v2112, 0.0
    %v2259 = vmax.f32 %v2114, 0.0
    %v2260 = vmax.f32 %v2116, 0.0
    %v2261 = vmax.f32 %v2118, 0.0
    %v2262 = vmax.f32 %v2122, 0.0
    %v2263 = vmax.f32 %v2124, 0.0
    %v2264 = vmax.f32 %v2126, 0.0
    %v2265 = vmax.f32 %v2128, 0.0
    %v2266 = vmax.f32 %v2132, 0.0
    %v2267 = vmax.f32 %v2134, 0.0
    %v2268 = vmax.f32 %v2136, 0.0
    %v2269 = vmax.f32 %v2138, 0.0
    %v2270 = vmax.f32 %v2142, 0.0
    %v2271 = vmax.f32 %v2144, 0.0
    %v2272 = vmax.f32 %v2146, 0.0
    %v2273 = vmax.f32 %v2148, 0.0
    %v2274 = vmax.f32 %v2152, 0.0
    %v2275 = vmax.f32 %v2154, 0.0
    %v2276 = vmax.f32 %v2156, 0.0
    %v2277 = vmax.f32 %v2158, 0.0
    %v2278 = vmax.f32 %v2162, 0.0
    %v2279 = vmax.f32 %v2164, 0.0
    %v2280 = vmax.f32 %v2166, 0.0
    %v2281 = vmax.f32 %v2168, 0.0
    %v2282 = vmax.f32 %v2172, 0.0
    %v2283 = vmax.f32 %v2174, 0.0
    %v2284 = vmax.f32 %v2176, 0.0
    %v2285 = vmax.f32 %v2178, 0.0
    %v2286 = vmax.f32 %v2182, 0.0
    %v2287 = vmax.f32 %v2184, 0.0
    %v2288 = vmax.f32 %v2186, 0.0
    %v2289 = vmax.f32 %v2188, 0.0
    %v2290 = vmax.f32 %v2192, 0.0
    %v2291 = vmax.f32 %v2194, 0.0
    %v2292 = vmax.f32 %v2196, 0.0
    %v2293 = vmax.f32 %v2198, 0.0
    %v2294 = vmax.f32 %v2202, 0.0
    %v2295 = vmax.f32 %v2204, 0.0
    %v2296 = vmax.f32 %v2206, 0.0
    %v2297 = vmax.f32 %v2208, 0.0
    %v2298 = vmax.f32 %v2212, 0.0
    %v2299 = vmax.f32 %v2214, 0.0
    %v2300 = vmax.f32 %v2216, 0.0
    %v2301 = vmax.f32 %v2218, 0.0
    %v2302 = vmax.f32 %v2222, 0.0
    %v2303 = vmax.f32 %v2224, 0.0
    %v2304 = vmax.f32 %v2226, 0.0
    %v2305 = vmax.f32 %v2228, 0.0
    %v2306 = vmax.f32 %v2232, 0.0
    %v2307 = vmax.f32 %v2234, 0.0
    %v2308 = vmax.f32 %v2236, 0.0
    %v2309 = vmax.f32 %v2238, 0.0
    %v2310 = vmax.f32 %v2242, 0.0
    %v2311 = vmax.f32 %v2244, 0.0
    %v2312 = vmax.f32 %v2246, 0.0
    %v2313 = vmax.f32 %v2248, 0.0
    %s2314 = sxor.u32 %s89, 1374496513
    %v2315 = vlaneseq
    %v2316 = vshrl.u32 %v2315, 7
    %v2317 = vadd.s32 %v2316, 8
    %v2318 = vadd.s32 %v2316, 16
    %v2319 = vadd.s32 %v2316, 24
    %v2320 = vadd.s32 %v2316, 32
    %v2321 = vadd.s32 %v2316, 40
    %v2322 = vadd.s32 %v2316, 48
    %v2323 = vadd.s32 %v2316, 56
    %v2324 = vadd.s32 %v2316, 64
    %v2325 = vadd.s32 %v2316, 72
    %v2326 = vadd.s32 %v2316, 80
    %v2327 = vadd.s32 %v2316, 88
    %v2328 = vadd.s32 %v2316, 96
    %v2329 = vadd.s32 %v2316, 104
    %v2330 = vadd.s32 %v2316, 112
    %v2331 = vadd.s32 %v2316, 120
    %v2332 = vadd.s32 %v2316, 128
    %v2333 = vadd.s32 %v2316, 136
    %v2334 = vadd.s32 %v2316, 144
    %v2335 = vadd.s32 %v2316, 152
    %v2336 = vadd.s32 %v2316, 160
    %v2337 = vadd.s32 %v2316, 168
    %v2338 = vadd.s32 %v2316, 176
    %v2339 = vadd.s32 %v2316, 184
    %v2340 = vadd.s32 %v2316, 192
    %v2341 = vadd.s32 %v2316, 200
    %v2342 = vadd.s32 %v2316, 208
    %v2343 = vadd.s32 %v2316, 216
    %v2344 = vadd.s32 %v2316, 224
    %v2345 = vadd.s32 %v2316, 232
    %v2346 = vadd.s32 %v2316, 240
    %v2347 = vadd.s32 %v2316, 248
    %v2348 = vlaneseq
    %v2349 = vand.u32 %v2348, 127
    %v2350 = vadd.s32 %v2349, 128
    %v2351 = vmul.u32 %v2316, 256
    %v2352 = vmul.u32 %v2317, 256
    %v2353 = vmul.u32 %v2318, 256
    %v2354 = vmul.u32 %v2319, 256
    %v2355 = vmul.u32 %v2320, 256
    %v2356 = vmul.u32 %v2321, 256
    %v2357 = vmul.u32 %v2322, 256
    %v2358 = vmul.u32 %v2323, 256
    %v2359 = vmul.u32 %v2324, 256
    %v2360 = vmul.u32 %v2325, 256
    %v2361 = vmul.u32 %v2326, 256
    %v2362 = vmul.u32 %v2327, 256
    %v2363 = vmul.u32 %v2328, 256
    %v2364 = vmul.u32 %v2329, 256
    %v2365 = vmul.u32 %v2330, 256
    %v2366 = vmul.u32 %v2331, 256
    %v2367 = vmul.u32 %v2332, 256
    %v2368 = vmul.u32 %v2333, 256
    %v2369 = vmul.u32 %v2334, 256
    %v2370 = vmul.u32 %v2335, 256
    %v2371 = vmul.u32 %v2336, 256
    %v2372 = vmul.u32 %v2337, 256
    %v2373 = vmul.u32 %v2338, 256
    %v2374 = vmul.u32 %v2339, 256
    %v2375 = vmul.u32 %v2340, 256
    %v2376 = vmul.u32 %v2341, 256
    %v2377 = vmul.u32 %v2342, 256
    %v2378 = vmul.u32 %v2343, 256
    %v2379 = vmul.u32 %v2344, 256
    %v2380 = vmul.u32 %v2345, 256
    %v2381 = vmul.u32 %v2346, 256
    %v2382 = vmul.u32 %v2347, 256
    %v2383 = vadd.s32 %v2351, %v2349
    %v2384 = vadd.s32 %v2351, %v2350
    %v2385 = vadd.s32 %v2352, %v2349
    %v2386 = vadd.s32 %v2352, %v2350
    %v2387 = vadd.s32 %v2353, %v2349
    %v2388 = vadd.s32 %v2353, %v2350
    %v2389 = vadd.s32 %v2354, %v2349
    %v2390 = vadd.s32 %v2354, %v2350
    %v2391 = vadd.s32 %v2355, %v2349
    %v2392 = vadd.s32 %v2355, %v2350
    %v2393 = vadd.s32 %v2356, %v2349
    %v2394 = vadd.s32 %v2356, %v2350
    %v2395 = vadd.s32 %v2357, %v2349
    %v2396 = vadd.s32 %v2357, %v2350
    %v2397 = vadd.s32 %v2358, %v2349
    %v2398 = vadd.s32 %v2358, %v2350
    %v2399 = vadd.s32 %v2359, %v2349
    %v2400 = vadd.s32 %v2359, %v2350
    %v2401 = vadd.s32 %v2360, %v2349
    %v2402 = vadd.s32 %v2360, %v2350
    %v2403 = vadd.s32 %v2361, %v2349
    %v2404 = vadd.s32 %v2361, %v2350
    %v2405 = vadd.s32 %v2362, %v2349
    %v2406 = vadd.s32 %v2362, %v2350
    %v2407 = vadd.s32 %v2363, %v2349
    %v2408 = vadd.s32 %v2363, %v2350
    %v2409 = vadd.s32 %v2364, %v2349
    %v2410 = vadd.s32 %v2364, %v2350
    %v2411 = vadd.s32 %v2365, %v2349
    %v2412 = vadd.s32 %v2365, %v2350
    %v2413 = vadd.s32 %v2366, %v2349
    %v2414 = vadd.s32 %v2366, %v2350
    %v2415 = vadd.s32 %v2367, %v2349
    %v2416 = vadd.s32 %v2367, %v2350
    %v2417 = vadd.s32 %v2368, %v2349
    %v2418 = vadd.s32 %v2368, %v2350
    %v2419 = vadd.s32 %v2369, %v2349
    %v2420 = vadd.s32 %v2369, %v2350
    %v2421 = vadd.s32 %v2370, %v2349
    %v2422 = vadd.s32 %v2370, %v2350
    %v2423 = vadd.s32 %v2371, %v2349
    %v2424 = vadd.s32 %v2371, %v2350
    %v2425 = vadd.s32 %v2372, %v2349
    %v2426 = vadd.s32 %v2372, %v2350
    %v2427 = vadd.s32 %v2373, %v2349
    %v2428 = vadd.s32 %v2373, %v2350
    %v2429 = vadd.s32 %v2374, %v2349
    %v2430 = vadd.s32 %v2374, %v2350
    %v2431 = vadd.s32 %v2375, %v2349
    %v2432 = vadd.s32 %v2375, %v2350
    %v2433 = vadd.s32 %v2376, %v2349
    %v2434 = vadd.s32 %v2376, %v2350
    %v2435 = vadd.s32 %v2377, %v2349
    %v2436 = vadd.s32 %v2377, %v2350
    %v2437 = vadd.s32 %v2378, %v2349
    %v2438 = vadd.s32 %v2378, %v2350
    %v2439 = vadd.s32 %v2379, %v2349
    %v2440 = vadd.s32 %v2379, %v2350
    %v2441 = vadd.s32 %v2380, %v2349
    %v2442 = vadd.s32 %v2380, %v2350
    %v2443 = vadd.s32 %v2381, %v2349
    %v2444 = vadd.s32 %v2381, %v2350
    %v2445 = vadd.s32 %v2382, %v2349
    %v2446 = vadd.s32 %v2382, %v2350
    %s2447 = smul.u32 %s2314, 2654435769
    %v2448 = vstv %s2447
    %v2449 = vadd.s32 %v2383, %v2448
    %v2450 = vadd.s32 %v2384, %v2448
    %v2451 = vadd.s32 %v2385, %v2448
    %v2452 = vadd.s32 %v2386, %v2448
    %v2453 = vadd.s32 %v2387, %v2448
    %v2454 = vadd.s32 %v2388, %v2448
    %v2455 = vadd.s32 %v2389, %v2448
    %v2456 = vadd.s32 %v2390, %v2448
    %v2457 = vadd.s32 %v2391, %v2448
    %v2458 = vadd.s32 %v2392, %v2448
    %v2459 = vadd.s32 %v2393, %v2448
    %v2460 = vadd.s32 %v2394, %v2448
    %v2461 = vadd.s32 %v2395, %v2448
    %v2462 = vadd.s32 %v2396, %v2448
    %v2463 = vadd.s32 %v2397, %v2448
    %v2464 = vadd.s32 %v2398, %v2448
    %v2465 = vadd.s32 %v2399, %v2448
    %v2466 = vadd.s32 %v2400, %v2448
    %v2467 = vadd.s32 %v2401, %v2448
    %v2468 = vadd.s32 %v2402, %v2448
    %v2469 = vadd.s32 %v2403, %v2448
    %v2470 = vadd.s32 %v2404, %v2448
    %v2471 = vadd.s32 %v2405, %v2448
    %v2472 = vadd.s32 %v2406, %v2448
    %v2473 = vadd.s32 %v2407, %v2448
    %v2474 = vadd.s32 %v2408, %v2448
    %v2475 = vadd.s32 %v2409, %v2448
    %v2476 = vadd.s32 %v2410, %v2448
    %v2477 = vadd.s32 %v2411, %v2448
    %v2478 = vadd.s32 %v2412, %v2448
    %v2479 = vadd.s32 %v2413, %v2448
    %v2480 = vadd.s32 %v2414, %v2448
    %v2481 = vadd.s32 %v2415, %v2448
    %v2482 = vadd.s32 %v2416, %v2448
    %v2483 = vadd.s32 %v2417, %v2448
    %v2484 = vadd.s32 %v2418, %v2448
    %v2485 = vadd.s32 %v2419, %v2448
    %v2486 = vadd.s32 %v2420, %v2448
    %v2487 = vadd.s32 %v2421, %v2448
    %v2488 = vadd.s32 %v2422, %v2448
    %v2489 = vadd.s32 %v2423, %v2448
    %v2490 = vadd.s32 %v2424, %v2448
    %v2491 = vadd.s32 %v2425, %v2448
    %v2492 = vadd.s32 %v2426, %v2448
    %v2493 = vadd.s32 %v2427, %v2448
    %v2494 = vadd.s32 %v2428, %v2448
    %v2495 = vadd.s32 %v2429, %v2448
    %v2496 = vadd.s32 %v2430, %v2448
    %v2497 = vadd.s32 %v2431, %v2448
    %v2498 = vadd.s32 %v2432, %v2448
    %v2499 = vadd.s32 %v2433, %v2448
    %v2500 = vadd.s32 %v2434, %v2448
    %v2501 = vadd.s32 %v2435, %v2448
    %v2502 = vadd.s32 %v2436, %v2448
    %v2503 = vadd.s32 %v2437, %v2448
    %v2504 = vadd.s32 %v2438, %v2448
    %v2505 = vadd.s32 %v2439, %v2448
    %v2506 = vadd.s32 %v2440, %v2448
    %v2507 = vadd.s32 %v2441, %v2448
    %v2508 = vadd.s32 %v2442, %v2448
    %v2509 = vadd.s32 %v2443, %v2448
    %v2510 = vadd.s32 %v2444, %v2448
    %v2511 = vadd.s32 %v2445, %v2448
    %v2512 = vadd.s32 %v2446, %v2448
    %v2513 = vshrl.u32 %v2449, 16
    %v2514 = vshrl.u32 %v2450, 16
    %v2515 = vshrl.u32 %v2451, 16
    %v2516 = vshrl.u32 %v2452, 16
    %v2517 = vshrl.u32 %v2453, 16
    %v2518 = vshrl.u32 %v2454, 16
    %v2519 = vshrl.u32 %v2455, 16
    %v2520 = vshrl.u32 %v2456, 16
    %v2521 = vshrl.u32 %v2457, 16
    %v2522 = vshrl.u32 %v2458, 16
    %v2523 = vshrl.u32 %v2459, 16
    %v2524 = vshrl.u32 %v2460, 16
    %v2525 = vshrl.u32 %v2461, 16
    %v2526 = vshrl.u32 %v2462, 16
    %v2527 = vshrl.u32 %v2463, 16
    %v2528 = vshrl.u32 %v2464, 16
    %v2529 = vshrl.u32 %v2465, 16
    %v2530 = vshrl.u32 %v2466, 16
    %v2531 = vshrl.u32 %v2467, 16
    %v2532 = vshrl.u32 %v2468, 16
    %v2533 = vshrl.u32 %v2469, 16
    %v2534 = vshrl.u32 %v2470, 16
    %v2535 = vshrl.u32 %v2471, 16
    %v2536 = vshrl.u32 %v2472, 16
    %v2537 = vshrl.u32 %v2473, 16
    %v2538 = vshrl.u32 %v2474, 16
    %v2539 = vshrl.u32 %v2475, 16
    %v2540 = vshrl.u32 %v2476, 16
    %v2541 = vshrl.u32 %v2477, 16
    %v2542 = vshrl.u32 %v2478, 16
    %v2543 = vshrl.u32 %v2479, 16
    %v2544 = vshrl.u32 %v2480, 16
    %v2545 = vshrl.u32 %v2481, 16
    %v2546 = vshrl.u32 %v2482, 16
    %v2547 = vshrl.u32 %v2483, 16
    %v2548 = vshrl.u32 %v2484, 16
    %v2549 = vshrl.u32 %v2485, 16
    %v2550 = vshrl.u32 %v2486, 16
    %v2551 = vshrl.u32 %v2487, 16
    %v2552 = vshrl.u32 %v2488, 16
    %v2553 = vshrl.u32 %v2489, 16
    %v2554 = vshrl.u32 %v2490, 16
    %v2555 = vshrl.u32 %v2491, 16
    %v2556 = vshrl.u32 %v2492, 16
    %v2557 = vshrl.u32 %v2493, 16
    %v2558 = vshrl.u32 %v2494, 16
    %v2559 = vshrl.u32 %v2495, 16
    %v2560 = vshrl.u32 %v2496, 16
    %v2561 = vshrl.u32 %v2497, 16
    %v2562 = vshrl.u32 %v2498, 16
    %v2563 = vshrl.u32 %v2499, 16
    %v2564 = vshrl.u32 %v2500, 16
    %v2565 = vshrl.u32 %v2501, 16
    %v2566 = vshrl.u32 %v2502, 16
    %v2567 = vshrl.u32 %v2503, 16
    %v2568 = vshrl.u32 %v2504, 16
    %v2569 = vshrl.u32 %v2505, 16
    %v2570 = vshrl.u32 %v2506, 16
    %v2571 = vshrl.u32 %v2507, 16
    %v2572 = vshrl.u32 %v2508, 16
    %v2573 = vshrl.u32 %v2509, 16
    %v2574 = vshrl.u32 %v2510, 16
    %v2575 = vshrl.u32 %v2511, 16
    %v2576 = vshrl.u32 %v2512, 16
    %v2577 = vxor.u32 %v2449, %v2513
    %v2578 = vxor.u32 %v2450, %v2514
    %v2579 = vxor.u32 %v2451, %v2515
    %v2580 = vxor.u32 %v2452, %v2516
    %v2581 = vxor.u32 %v2453, %v2517
    %v2582 = vxor.u32 %v2454, %v2518
    %v2583 = vxor.u32 %v2455, %v2519
    %v2584 = vxor.u32 %v2456, %v2520
    %v2585 = vxor.u32 %v2457, %v2521
    %v2586 = vxor.u32 %v2458, %v2522
    %v2587 = vxor.u32 %v2459, %v2523
    %v2588 = vxor.u32 %v2460, %v2524
    %v2589 = vxor.u32 %v2461, %v2525
    %v2590 = vxor.u32 %v2462, %v2526
    %v2591 = vxor.u32 %v2463, %v2527
    %v2592 = vxor.u32 %v2464, %v2528
    %v2593 = vxor.u32 %v2465, %v2529
    %v2594 = vxor.u32 %v2466, %v2530
    %v2595 = vxor.u32 %v2467, %v2531
    %v2596 = vxor.u32 %v2468, %v2532
    %v2597 = vxor.u32 %v2469, %v2533
    %v2598 = vxor.u32 %v2470, %v2534
    %v2599 = vxor.u32 %v2471, %v2535
    %v2600 = vxor.u32 %v2472, %v2536
    %v2601 = vxor.u32 %v2473, %v2537
    %v2602 = vxor.u32 %v2474, %v2538
    %v2603 = vxor.u32 %v2475, %v2539
    %v2604 = vxor.u32 %v2476, %v2540
    %v2605 = vxor.u32 %v2477, %v2541
    %v2606 = vxor.u32 %v2478, %v2542
    %v2607 = vxor.u32 %v2479, %v2543
    %v2608 = vxor.u32 %v2480, %v2544
    %v2609 = vxor.u32 %v2481, %v2545
    %v2610 = vxor.u32 %v2482, %v2546
    %v2611 = vxor.u32 %v2483, %v2547
    %v2612 = vxor.u32 %v2484, %v2548
    %v2613 = vxor.u32 %v2485, %v2549
    %v2614 = vxor.u32 %v2486, %v2550
    %v2615 = vxor.u32 %v2487, %v2551
    %v2616 = vxor.u32 %v2488, %v2552
    %v2617 = vxor.u32 %v2489, %v2553
    %v2618 = vxor.u32 %v2490, %v2554
    %v2619 = vxor.u32 %v2491, %v2555
    %v2620 = vxor.u32 %v2492, %v2556
    %v2621 = vxor.u32 %v2493, %v2557
    %v2622 = vxor.u32 %v2494, %v2558
    %v2623 = vxor.u32 %v2495, %v2559
    %v2624 = vxor.u32 %v2496, %v2560
    %v2625 = vxor.u32 %v2497, %v2561
    %v2626 = vxor.u32 %v2498, %v2562
    %v2627 = vxor.u32 %v2499, %v2563
    %v2628 = vxor.u32 %v2500, %v2564
    %v2629 = vxor.u32 %v2501, %v2565
    %v2630 = vxor.u32 %v2502, %v2566
    %v2631 = vxor.u32 %v2503, %v2567
    %v2632 = vxor.u32 %v2504, %v2568
    %v2633 = vxor.u32 %v2505, %v2569
    %v2634 = vxor.u32 %v2506, %v2570
    %v2635 = vxor.u32 %v2507, %v2571
    %v2636 = vxor.u32 %v2508, %v2572
    %v2637 = vxor.u32 %v2509, %v2573
    %v2638 = vxor.u32 %v2510, %v2574
    %v2639 = vxor.u32 %v2511, %v2575
    %v2640 = vxor.u32 %v2512, %v2576
    %v2641 = vmul.u32 %v2577, 2146121005
    %v2642 = vmul.u32 %v2578, 2146121005
    %v2643 = vmul.u32 %v2579, 2146121005
    %v2644 = vmul.u32 %v2580, 2146121005
    %v2645 = vmul.u32 %v2581, 2146121005
    %v2646 = vmul.u32 %v2582, 2146121005
    %v2647 = vmul.u32 %v2583, 2146121005
    %v2648 = vmul.u32 %v2584, 2146121005
    %v2649 = vmul.u32 %v2585, 2146121005
    %v2650 = vmul.u32 %v2586, 2146121005
    %v2651 = vmul.u32 %v2587, 2146121005
    %v2652 = vmul.u32 %v2588, 2146121005
    %v2653 = vmul.u32 %v2589, 2146121005
    %v2654 = vmul.u32 %v2590, 2146121005
    %v2655 = vmul.u32 %v2591, 2146121005
    %v2656 = vmul.u32 %v2592, 2146121005
    %v2657 = vmul.u32 %v2593, 2146121005
    %v2658 = vmul.u32 %v2594, 2146121005
    %v2659 = vmul.u32 %v2595, 2146121005
    %v2660 = vmul.u32 %v2596, 2146121005
    %v2661 = vmul.u32 %v2597, 2146121005
    %v2662 = vmul.u32 %v2598, 2146121005
    %v2663 = vmul.u32 %v2599, 2146121005
    %v2664 = vmul.u32 %v2600, 2146121005
    %v2665 = vmul.u32 %v2601, 2146121005
    %v2666 = vmul.u32 %v2602, 2146121005
    %v2667 = vmul.u32 %v2603, 2146121005
    %v2668 = vmul.u32 %v2604, 2146121005
    %v2669 = vmul.u32 %v2605, 2146121005
    %v2670 = vmul.u32 %v2606, 2146121005
    %v2671 = vmul.u32 %v2607, 2146121005
    %v2672 = vmul.u32 %v2608, 2146121005
    %v2673 = vmul.u32 %v2609, 2146121005
    %v2674 = vmul.u32 %v2610, 2146121005
    %v2675 = vmul.u32 %v2611, 2146121005
    %v2676 = vmul.u32 %v2612, 2146121005
    %v2677 = vmul.u32 %v2613, 2146121005
    %v2678 = vmul.u32 %v2614, 2146121005
    %v2679 = vmul.u32 %v2615, 2146121005
    %v2680 = vmul.u32 %v2616, 2146121005
    %v2681 = vmul.u32 %v2617, 2146121005
    %v2682 = vmul.u32 %v2618, 2146121005
    %v2683 = vmul.u32 %v2619, 2146121005
    %v2684 = vmul.u32 %v2620, 2146121005
    %v2685 = vmul.u32 %v2621, 2146121005
    %v2686 = vmul.u32 %v2622, 2146121005
    %v2687 = vmul.u32 %v2623, 2146121005
    %v2688 = vmul.u32 %v2624, 2146121005
    %v2689 = vmul.u32 %v2625, 2146121005
    %v2690 = vmul.u32 %v2626, 2146121005
    %v2691 = vmul.u32 %v2627, 2146121005
    %v2692 = vmul.u32 %v2628, 2146121005
    %v2693 = vmul.u32 %v2629, 2146121005
    %v2694 = vmul.u32 %v2630, 2146121005
    %v2695 = vmul.u32 %v2631, 2146121005
    %v2696 = vmul.u32 %v2632, 2146121005
    %v2697 = vmul.u32 %v2633, 2146121005
    %v2698 = vmul.u32 %v2634, 2146121005
    %v2699 = vmul.u32 %v2635, 2146121005
    %v2700 = vmul.u32 %v2636, 2146121005
    %v2701 = vmul.u32 %v2637, 2146121005
    %v2702 = vmul.u32 %v2638, 2146121005
    %v2703 = vmul.u32 %v2639, 2146121005
    %v2704 = vmul.u32 %v2640, 2146121005
    %v2705 = vshrl.u32 %v2641, 15
    %v2706 = vshrl.u32 %v2642, 15
    %v2707 = vshrl.u32 %v2643, 15
    %v2708 = vshrl.u32 %v2644, 15
    %v2709 = vshrl.u32 %v2645, 15
    %v2710 = vshrl.u32 %v2646, 15
    %v2711 = vshrl.u32 %v2647, 15
    %v2712 = vshrl.u32 %v2648, 15
    %v2713 = vshrl.u32 %v2649, 15
    %v2714 = vshrl.u32 %v2650, 15
    %v2715 = vshrl.u32 %v2651, 15
    %v2716 = vshrl.u32 %v2652, 15
    %v2717 = vshrl.u32 %v2653, 15
    %v2718 = vshrl.u32 %v2654, 15
    %v2719 = vshrl.u32 %v2655, 15
    %v2720 = vshrl.u32 %v2656, 15
    %v2721 = vshrl.u32 %v2657, 15
    %v2722 = vshrl.u32 %v2658, 15
    %v2723 = vshrl.u32 %v2659, 15
    %v2724 = vshrl.u32 %v2660, 15
    %v2725 = vshrl.u32 %v2661, 15
    %v2726 = vshrl.u32 %v2662, 15
    %v2727 = vshrl.u32 %v2663, 15
    %v2728 = vshrl.u32 %v2664, 15
    %v2729 = vshrl.u32 %v2665, 15
    %v2730 = vshrl.u32 %v2666, 15
    %v2731 = vshrl.u32 %v2667, 15
    %v2732 = vshrl.u32 %v2668, 15
    %v2733 = vshrl.u32 %v2669, 15
    %v2734 = vshrl.u32 %v2670, 15
    %v2735 = vshrl.u32 %v2671, 15
    %v2736 = vshrl.u32 %v2672, 15
    %v2737 = vshrl.u32 %v2673, 15
    %v2738 = vshrl.u32 %v2674, 15
    %v2739 = vshrl.u32 %v2675, 15
    %v2740 = vshrl.u32 %v2676, 15
    %v2741 = vshrl.u32 %v2677, 15
    %v2742 = vshrl.u32 %v2678, 15
    %v2743 = vshrl.u32 %v2679, 15
    %v2744 = vshrl.u32 %v2680, 15
    %v2745 = vshrl.u32 %v2681, 15
    %v2746 = vshrl.u32 %v2682, 15
    %v2747 = vshrl.u32 %v2683, 15
    %v2748 = vshrl.u32 %v2684, 15
    %v2749 = vshrl.u32 %v2685, 15
    %v2750 = vshrl.u32 %v2686, 15
    %v2751 = vshrl.u32 %v2687, 15
    %v2752 = vshrl.u32 %v2688, 15
    %v2753 = vshrl.u32 %v2689, 15
    %v2754 = vshrl.u32 %v2690, 15
    %v2755 = vshrl.u32 %v2691, 15
    %v2756 = vshrl.u32 %v2692, 15
    %v2757 = vshrl.u32 %v2693, 15
    %v2758 = vshrl.u32 %v2694, 15
    %v2759 = vshrl.u32 %v2695, 15
    %v2760 = vshrl.u32 %v2696, 15
    %v2761 = vshrl.u32 %v2697, 15
    %v2762 = vshrl.u32 %v2698, 15
    %v2763 = vshrl.u32 %v2699, 15
    %v2764 = vshrl.u32 %v2700, 15
    %v2765 = vshrl.u32 %v2701, 15
    %v2766 = vshrl.u32 %v2702, 15
    %v2767 = vshrl.u32 %v2703, 15
    %v2768 = vshrl.u32 %v2704, 15
    %v2769 = vxor.u32 %v2641, %v2705
    %v2770 = vxor.u32 %v2642, %v2706
    %v2771 = vxor.u32 %v2643, %v2707
    %v2772 = vxor.u32 %v2644, %v2708
    %v2773 = vxor.u32 %v2645, %v2709
    %v2774 = vxor.u32 %v2646, %v2710
    %v2775 = vxor.u32 %v2647, %v2711
    %v2776 = vxor.u32 %v2648, %v2712
    %v2777 = vxor.u32 %v2649, %v2713
    %v2778 = vxor.u32 %v2650, %v2714
    %v2779 = vxor.u32 %v2651, %v2715
    %v2780 = vxor.u32 %v2652, %v2716
    %v2781 = vxor.u32 %v2653, %v2717
    %v2782 = vxor.u32 %v2654, %v2718
    %v2783 = vxor.u32 %v2655, %v2719
    %v2784 = vxor.u32 %v2656, %v2720
    %v2785 = vxor.u32 %v2657, %v2721
    %v2786 = vxor.u32 %v2658, %v2722
    %v2787 = vxor.u32 %v2659, %v2723
    %v2788 = vxor.u32 %v2660, %v2724
    %v2789 = vxor.u32 %v2661, %v2725
    %v2790 = vxor.u32 %v2662, %v2726
    %v2791 = vxor.u32 %v2663, %v2727
    %v2792 = vxor.u32 %v2664, %v2728
    %v2793 = vxor.u32 %v2665, %v2729
    %v2794 = vxor.u32 %v2666, %v2730
    %v2795 = vxor.u32 %v2667, %v2731
    %v2796 = vxor.u32 %v2668, %v2732
    %v2797 = vxor.u32 %v2669, %v2733
    %v2798 = vxor.u32 %v2670, %v2734
    %v2799 = vxor.u32 %v2671, %v2735
    %v2800 = vxor.u32 %v2672, %v2736
    %v2801 = vxor.u32 %v2673, %v2737
    %v2802 = vxor.u32 %v2674, %v2738
    %v2803 = vxor.u32 %v2675, %v2739
    %v2804 = vxor.u32 %v2676, %v2740
    %v2805 = vxor.u32 %v2677, %v2741
    %v2806 = vxor.u32 %v2678, %v2742
    %v2807 = vxor.u32 %v2679, %v2743
    %v2808 = vxor.u32 %v2680, %v2744
    %v2809 = vxor.u32 %v2681, %v2745
    %v2810 = vxor.u32 %v2682, %v2746
    %v2811 = vxor.u32 %v2683, %v2747
    %v2812 = vxor.u32 %v2684, %v2748
    %v2813 = vxor.u32 %v2685, %v2749
    %v2814 = vxor.u32 %v2686, %v2750
    %v2815 = vxor.u32 %v2687, %v2751
    %v2816 = vxor.u32 %v2688, %v2752
    %v2817 = vxor.u32 %v2689, %v2753
    %v2818 = vxor.u32 %v2690, %v2754
    %v2819 = vxor.u32 %v2691, %v2755
    %v2820 = vxor.u32 %v2692, %v2756
    %v2821 = vxor.u32 %v2693, %v2757
    %v2822 = vxor.u32 %v2694, %v2758
    %v2823 = vxor.u32 %v2695, %v2759
    %v2824 = vxor.u32 %v2696, %v2760
    %v2825 = vxor.u32 %v2697, %v2761
    %v2826 = vxor.u32 %v2698, %v2762
    %v2827 = vxor.u32 %v2699, %v2763
    %v2828 = vxor.u32 %v2700, %v2764
    %v2829 = vxor.u32 %v2701, %v2765
    %v2830 = vxor.u32 %v2702, %v2766
    %v2831 = vxor.u32 %v2703, %v2767
    %v2832 = vxor.u32 %v2704, %v2768
    %v2833 = vmul.u32 %v2769, 2221713035
    %v2834 = vmul.u32 %v2770, 2221713035
    %v2835 = vmul.u32 %v2771, 2221713035
    %v2836 = vmul.u32 %v2772, 2221713035
    %v2837 = vmul.u32 %v2773, 2221713035
    %v2838 = vmul.u32 %v2774, 2221713035
    %v2839 = vmul.u32 %v2775, 2221713035
    %v2840 = vmul.u32 %v2776, 2221713035
    %v2841 = vmul.u32 %v2777, 2221713035
    %v2842 = vmul.u32 %v2778, 2221713035
    %v2843 = vmul.u32 %v2779, 2221713035
    %v2844 = vmul.u32 %v2780, 2221713035
    %v2845 = vmul.u32 %v2781, 2221713035
    %v2846 = vmul.u32 %v2782, 2221713035
    %v2847 = vmul.u32 %v2783, 2221713035
    %v2848 = vmul.u32 %v2784, 2221713035
    %v2849 = vmul.u32 %v2785, 2221713035
    %v2850 = vmul.u32 %v2786, 2221713035
    %v2851 = vmul.u32 %v2787, 2221713035
    %v2852 = vmul.u32 %v2788, 2221713035
    %v2853 = vmul.u32 %v2789, 2221713035
    %v2854 = vmul.u32 %v2790, 2221713035
    %v2855 = vmul.u32 %v2791, 2221713035
    %v2856 = vmul.u32 %v2792, 2221713035
    %v2857 = vmul.u32 %v2793, 2221713035
    %v2858 = vmul.u32 %v2794, 2221713035
    %v2859 = vmul.u32 %v2795, 2221713035
    %v2860 = vmul.u32 %v2796, 2221713035
    %v2861 = vmul.u32 %v2797, 2221713035
    %v2862 = vmul.u32 %v2798, 2221713035
    %v2863 = vmul.u32 %v2799, 2221713035
    %v2864 = vmul.u32 %v2800, 2221713035
    %v2865 = vmul.u32 %v2801, 2221713035
    %v2866 = vmul.u32 %v2802, 2221713035
    %v2867 = vmul.u32 %v2803, 2221713035
    %v2868 = vmul.u32 %v2804, 2221713035
    %v2869 = vmul.u32 %v2805, 2221713035
    %v2870 = vmul.u32 %v2806, 2221713035
    %v2871 = vmul.u32 %v2807, 2221713035
    %v2872 = vmul.u32 %v2808, 2221713035
    %v2873 = vmul.u32 %v2809, 2221713035
    %v2874 = vmul.u32 %v2810, 2221713035
    %v2875 = vmul.u32 %v2811, 2221713035
    %v2876 = vmul.u32 %v2812, 2221713035
    %v2877 = vmul.u32 %v2813, 2221713035
    %v2878 = vmul.u32 %v2814, 2221713035
    %v2879 = vmul.u32 %v2815, 2221713035
    %v2880 = vmul.u32 %v2816, 2221713035
    %v2881 = vmul.u32 %v2817, 2221713035
    %v2882 = vmul.u32 %v2818, 2221713035
    %v2883 = vmul.u32 %v2819, 2221713035
    %v2884 = vmul.u32 %v2820, 2221713035
    %v2885 = vmul.u32 %v2821, 2221713035
    %v2886 = vmul.u32 %v2822, 2221713035
    %v2887 = vmul.u32 %v2823, 2221713035
    %v2888 = vmul.u32 %v2824, 2221713035
    %v2889 = vmul.u32 %v2825, 2221713035
    %v2890 = vmul.u32 %v2826, 2221713035
    %v2891 = vmul.u32 %v2827, 2221713035
    %v2892 = vmul.u32 %v2828, 2221713035
    %v2893 = vmul.u32 %v2829, 2221713035
    %v2894 = vmul.u32 %v2830, 2221713035
    %v2895 = vmul.u32 %v2831, 2221713035
    %v2896 = vmul.u32 %v2832, 2221713035
    %v2897 = vshrl.u32 %v2833, 16
    %v2898 = vshrl.u32 %v2834, 16
    %v2899 = vshrl.u32 %v2835, 16
    %v2900 = vshrl.u32 %v2836, 16
    %v2901 = vshrl.u32 %v2837, 16
    %v2902 = vshrl.u32 %v2838, 16
    %v2903 = vshrl.u32 %v2839, 16
    %v2904 = vshrl.u32 %v2840, 16
    %v2905 = vshrl.u32 %v2841, 16
    %v2906 = vshrl.u32 %v2842, 16
    %v2907 = vshrl.u32 %v2843, 16
    %v2908 = vshrl.u32 %v2844, 16
    %v2909 = vshrl.u32 %v2845, 16
    %v2910 = vshrl.u32 %v2846, 16
    %v2911 = vshrl.u32 %v2847, 16
    %v2912 = vshrl.u32 %v2848, 16
    %v2913 = vshrl.u32 %v2849, 16
    %v2914 = vshrl.u32 %v2850, 16
    %v2915 = vshrl.u32 %v2851, 16
    %v2916 = vshrl.u32 %v2852, 16
    %v2917 = vshrl.u32 %v2853, 16
    %v2918 = vshrl.u32 %v2854, 16
    %v2919 = vshrl.u32 %v2855, 16
    %v2920 = vshrl.u32 %v2856, 16
    %v2921 = vshrl.u32 %v2857, 16
    %v2922 = vshrl.u32 %v2858, 16
    %v2923 = vshrl.u32 %v2859, 16
    %v2924 = vshrl.u32 %v2860, 16
    %v2925 = vshrl.u32 %v2861, 16
    %v2926 = vshrl.u32 %v2862, 16
    %v2927 = vshrl.u32 %v2863, 16
    %v2928 = vshrl.u32 %v2864, 16
    %v2929 = vshrl.u32 %v2865, 16
    %v2930 = vshrl.u32 %v2866, 16
    %v2931 = vshrl.u32 %v2867, 16
    %v2932 = vshrl.u32 %v2868, 16
    %v2933 = vshrl.u32 %v2869, 16
    %v2934 = vshrl.u32 %v2870, 16
    %v2935 = vshrl.u32 %v2871, 16
    %v2936 = vshrl.u32 %v2872, 16
    %v2937 = vshrl.u32 %v2873, 16
    %v2938 = vshrl.u32 %v2874, 16
    %v2939 = vshrl.u32 %v2875, 16
    %v2940 = vshrl.u32 %v2876, 16
    %v2941 = vshrl.u32 %v2877, 16
    %v2942 = vshrl.u32 %v2878, 16
    %v2943 = vshrl.u32 %v2879, 16
    %v2944 = vshrl.u32 %v2880, 16
    %v2945 = vshrl.u32 %v2881, 16
    %v2946 = vshrl.u32 %v2882, 16
    %v2947 = vshrl.u32 %v2883, 16
    %v2948 = vshrl.u32 %v2884, 16
    %v2949 = vshrl.u32 %v2885, 16
    %v2950 = vshrl.u32 %v2886, 16
    %v2951 = vshrl.u32 %v2887, 16
    %v2952 = vshrl.u32 %v2888, 16
    %v2953 = vshrl.u32 %v2889, 16
    %v2954 = vshrl.u32 %v2890, 16
    %v2955 = vshrl.u32 %v2891, 16
    %v2956 = vshrl.u32 %v2892, 16
    %v2957 = vshrl.u32 %v2893, 16
    %v2958 = vshrl.u32 %v2894, 16
    %v2959 = vshrl.u32 %v2895, 16
    %v2960 = vshrl.u32 %v2896, 16
    %v2961 = vxor.u32 %v2833, %v2897
    %v2962 = vxor.u32 %v2834, %v2898
    %v2963 = vxor.u32 %v2835, %v2899
    %v2964 = vxor.u32 %v2836, %v2900
    %v2965 = vxor.u32 %v2837, %v2901
    %v2966 = vxor.u32 %v2838, %v2902
    %v2967 = vxor.u32 %v2839, %v2903
    %v2968 = vxor.u32 %v2840, %v2904
    %v2969 = vxor.u32 %v2841, %v2905
    %v2970 = vxor.u32 %v2842, %v2906
    %v2971 = vxor.u32 %v2843, %v2907
    %v2972 = vxor.u32 %v2844, %v2908
    %v2973 = vxor.u32 %v2845, %v2909
    %v2974 = vxor.u32 %v2846, %v2910
    %v2975 = vxor.u32 %v2847, %v2911
    %v2976 = vxor.u32 %v2848, %v2912
    %v2977 = vxor.u32 %v2849, %v2913
    %v2978 = vxor.u32 %v2850, %v2914
    %v2979 = vxor.u32 %v2851, %v2915
    %v2980 = vxor.u32 %v2852, %v2916
    %v2981 = vxor.u32 %v2853, %v2917
    %v2982 = vxor.u32 %v2854, %v2918
    %v2983 = vxor.u32 %v2855, %v2919
    %v2984 = vxor.u32 %v2856, %v2920
    %v2985 = vxor.u32 %v2857, %v2921
    %v2986 = vxor.u32 %v2858, %v2922
    %v2987 = vxor.u32 %v2859, %v2923
    %v2988 = vxor.u32 %v2860, %v2924
    %v2989 = vxor.u32 %v2861, %v2925
    %v2990 = vxor.u32 %v2862, %v2926
    %v2991 = vxor.u32 %v2863, %v2927
    %v2992 = vxor.u32 %v2864, %v2928
    %v2993 = vxor.u32 %v2865, %v2929
    %v2994 = vxor.u32 %v2866, %v2930
    %v2995 = vxor.u32 %v2867, %v2931
    %v2996 = vxor.u32 %v2868, %v2932
    %v2997 = vxor.u32 %v2869, %v2933
    %v2998 = vxor.u32 %v2870, %v2934
    %v2999 = vxor.u32 %v2871, %v2935
    %v3000 = vxor.u32 %v2872, %v2936
    %v3001 = vxor.u32 %v2873, %v2937
    %v3002 = vxor.u32 %v2874, %v2938
    %v3003 = vxor.u32 %v2875, %v2939
    %v3004 = vxor.u32 %v2876, %v2940
    %v3005 = vxor.u32 %v2877, %v2941
    %v3006 = vxor.u32 %v2878, %v2942
    %v3007 = vxor.u32 %v2879, %v2943
    %v3008 = vxor.u32 %v2880, %v2944
    %v3009 = vxor.u32 %v2881, %v2945
    %v3010 = vxor.u32 %v2882, %v2946
    %v3011 = vxor.u32 %v2883, %v2947
    %v3012 = vxor.u32 %v2884, %v2948
    %v3013 = vxor.u32 %v2885, %v2949
    %v3014 = vxor.u32 %v2886, %v2950
    %v3015 = vxor.u32 %v2887, %v2951
    %v3016 = vxor.u32 %v2888, %v2952
    %v3017 = vxor.u32 %v2889, %v2953
    %v3018 = vxor.u32 %v2890, %v2954
    %v3019 = vxor.u32 %v2891, %v2955
    %v3020 = vxor.u32 %v2892, %v2956
    %v3021 = vxor.u32 %v2893, %v2957
    %v3022 = vxor.u32 %v2894, %v2958
    %v3023 = vxor.u32 %v2895, %v2959
    %v3024 = vxor.u32 %v2896, %v2960
    %vm3025 = vcmp.ge.u32.totalorder %v2961, 858993459
    %vm3026 = vcmp.ge.u32.totalorder %v2962, 858993459
    %vm3027 = vcmp.ge.u32.totalorder %v2963, 858993459
    %vm3028 = vcmp.ge.u32.totalorder %v2964, 858993459
    %vm3029 = vcmp.ge.u32.totalorder %v2965, 858993459
    %vm3030 = vcmp.ge.u32.totalorder %v2966, 858993459
    %vm3031 = vcmp.ge.u32.totalorder %v2967, 858993459
    %vm3032 = vcmp.ge.u32.totalorder %v2968, 858993459
    %vm3033 = vcmp.ge.u32.totalorder %v2969, 858993459
    %vm3034 = vcmp.ge.u32.totalorder %v2970, 858993459
    %vm3035 = vcmp.ge.u32.totalorder %v2971, 858993459
    %vm3036 = vcmp.ge.u32.totalorder %v2972, 858993459
    %vm3037 = vcmp.ge.u32.totalorder %v2973, 858993459
    %vm3038 = vcmp.ge.u32.totalorder %v2974, 858993459
    %vm3039 = vcmp.ge.u32.totalorder %v2975, 858993459
    %vm3040 = vcmp.ge.u32.totalorder %v2976, 858993459
    %vm3041 = vcmp.ge.u32.totalorder %v2977, 858993459
    %vm3042 = vcmp.ge.u32.totalorder %v2978, 858993459
    %vm3043 = vcmp.ge.u32.totalorder %v2979, 858993459
    %vm3044 = vcmp.ge.u32.totalorder %v2980, 858993459
    %vm3045 = vcmp.ge.u32.totalorder %v2981, 858993459
    %vm3046 = vcmp.ge.u32.totalorder %v2982, 858993459
    %vm3047 = vcmp.ge.u32.totalorder %v2983, 858993459
    %vm3048 = vcmp.ge.u32.totalorder %v2984, 858993459
    %vm3049 = vcmp.ge.u32.totalorder %v2985, 858993459
    %vm3050 = vcmp.ge.u32.totalorder %v2986, 858993459
    %vm3051 = vcmp.ge.u32.totalorder %v2987, 858993459
    %vm3052 = vcmp.ge.u32.totalorder %v2988, 858993459
    %vm3053 = vcmp.ge.u32.totalorder %v2989, 858993459
    %vm3054 = vcmp.ge.u32.totalorder %v2990, 858993459
    %vm3055 = vcmp.ge.u32.totalorder %v2991, 858993459
    %vm3056 = vcmp.ge.u32.totalorder %v2992, 858993459
    %vm3057 = vcmp.ge.u32.totalorder %v2993, 858993459
    %vm3058 = vcmp.ge.u32.totalorder %v2994, 858993459
    %vm3059 = vcmp.ge.u32.totalorder %v2995, 858993459
    %vm3060 = vcmp.ge.u32.totalorder %v2996, 858993459
    %vm3061 = vcmp.ge.u32.totalorder %v2997, 858993459
    %vm3062 = vcmp.ge.u32.totalorder %v2998, 858993459
    %vm3063 = vcmp.ge.u32.totalorder %v2999, 858993459
    %vm3064 = vcmp.ge.u32.totalorder %v3000, 858993459
    %vm3065 = vcmp.ge.u32.totalorder %v3001, 858993459
    %vm3066 = vcmp.ge.u32.totalorder %v3002, 858993459
    %vm3067 = vcmp.ge.u32.totalorder %v3003, 858993459
    %vm3068 = vcmp.ge.u32.totalorder %v3004, 858993459
    %vm3069 = vcmp.ge.u32.totalorder %v3005, 858993459
    %vm3070 = vcmp.ge.u32.totalorder %v3006, 858993459
    %vm3071 = vcmp.ge.u32.totalorder %v3007, 858993459
    %vm3072 = vcmp.ge.u32.totalorder %v3008, 858993459
    %vm3073 = vcmp.ge.u32.totalorder %v3009, 858993459
    %vm3074 = vcmp.ge.u32.totalorder %v3010, 858993459
    %vm3075 = vcmp.ge.u32.totalorder %v3011, 858993459
    %vm3076 = vcmp.ge.u32.totalorder %v3012, 858993459
    %vm3077 = vcmp.ge.u32.totalorder %v3013, 858993459
    %vm3078 = vcmp.ge.u32.totalorder %v3014, 858993459
    %vm3079 = vcmp.ge.u32.totalorder %v3015, 858993459
    %vm3080 = vcmp.ge.u32.totalorder %v3016, 858993459
    %vm3081 = vcmp.ge.u32.totalorder %v3017, 858993459
    %vm3082 = vcmp.ge.u32.totalorder %v3018, 858993459
    %vm3083 = vcmp.ge.u32.totalorder %v3019, 858993459
    %vm3084 = vcmp.ge.u32.totalorder %v3020, 858993459
    %vm3085 = vcmp.ge.u32.totalorder %v3021, 858993459
    %vm3086 = vcmp.ge.u32.totalorder %v3022, 858993459
    %vm3087 = vcmp.ge.u32.totalorder %v3023, 858993459
    %vm3088 = vcmp.ge.u32.totalorder %v3024, 858993459
    %v3089 = vmul.f32 %v2250, 1.25
    %v3090 = vmul.f32 %v2251, 1.25
    %v3091 = vmul.f32 %v2252, 1.25
    %v3092 = vmul.f32 %v2253, 1.25
    %v3093 = vmul.f32 %v2254, 1.25
    %v3094 = vmul.f32 %v2255, 1.25
    %v3095 = vmul.f32 %v2256, 1.25
    %v3096 = vmul.f32 %v2257, 1.25
    %v3097 = vmul.f32 %v2258, 1.25
    %v3098 = vmul.f32 %v2259, 1.25
    %v3099 = vmul.f32 %v2260, 1.25
    %v3100 = vmul.f32 %v2261, 1.25
    %v3101 = vmul.f32 %v2262, 1.25
    %v3102 = vmul.f32 %v2263, 1.25
    %v3103 = vmul.f32 %v2264, 1.25
    %v3104 = vmul.f32 %v2265, 1.25
    %v3105 = vmul.f32 %v2266, 1.25
    %v3106 = vmul.f32 %v2267, 1.25
    %v3107 = vmul.f32 %v2268, 1.25
    %v3108 = vmul.f32 %v2269, 1.25
    %v3109 = vmul.f32 %v2270, 1.25
    %v3110 = vmul.f32 %v2271, 1.25
    %v3111 = vmul.f32 %v2272, 1.25
    %v3112 = vmul.f32 %v2273, 1.25
    %v3113 = vmul.f32 %v2274, 1.25
    %v3114 = vmul.f32 %v2275, 1.25
    %v3115 = vmul.f32 %v2276, 1.25
    %v3116 = vmul.f32 %v2277, 1.25
    %v3117 = vmul.f32 %v2278, 1.25
    %v3118 = vmul.f32 %v2279, 1.25
    %v3119 = vmul.f32 %v2280, 1.25
    %v3120 = vmul.f32 %v2281, 1.25
    %v3121 = vmul.f32 %v2282, 1.25
    %v3122 = vmul.f32 %v2283, 1.25
    %v3123 = vmul.f32 %v2284, 1.25
    %v3124 = vmul.f32 %v2285, 1.25
    %v3125 = vmul.f32 %v2286, 1.25
    %v3126 = vmul.f32 %v2287, 1.25
    %v3127 = vmul.f32 %v2288, 1.25
    %v3128 = vmul.f32 %v2289, 1.25
    %v3129 = vmul.f32 %v2290, 1.25
    %v3130 = vmul.f32 %v2291, 1.25
    %v3131 = vmul.f32 %v2292, 1.25
    %v3132 = vmul.f32 %v2293, 1.25
    %v3133 = vmul.f32 %v2294, 1.25
    %v3134 = vmul.f32 %v2295, 1.25
    %v3135 = vmul.f32 %v2296, 1.25
    %v3136 = vmul.f32 %v2297, 1.25
    %v3137 = vmul.f32 %v2298, 1.25
    %v3138 = vmul.f32 %v2299, 1.25
    %v3139 = vmul.f32 %v2300, 1.25
    %v3140 = vmul.f32 %v2301, 1.25
    %v3141 = vmul.f32 %v2302, 1.25
    %v3142 = vmul.f32 %v2303, 1.25
    %v3143 = vmul.f32 %v2304, 1.25
    %v3144 = vmul.f32 %v2305, 1.25
    %v3145 = vmul.f32 %v2306, 1.25
    %v3146 = vmul.f32 %v2307, 1.25
    %v3147 = vmul.f32 %v2308, 1.25
    %v3148 = vmul.f32 %v2309, 1.25
    %v3149 = vmul.f32 %v2310, 1.25
    %v3150 = vmul.f32 %v2311, 1.25
    %v3151 = vmul.f32 %v2312, 1.25
    %v3152 = vmul.f32 %v2313, 1.25
    %v3153 = vsel %vm3025, %v3089, 0.0
    %v3154 = vsel %vm3026, %v3090, 0.0
    %v3155 = vsel %vm3027, %v3091, 0.0
    %v3156 = vsel %vm3028, %v3092, 0.0
    %v3157 = vsel %vm3029, %v3093, 0.0
    %v3158 = vsel %vm3030, %v3094, 0.0
    %v3159 = vsel %vm3031, %v3095, 0.0
    %v3160 = vsel %vm3032, %v3096, 0.0
    %v3161 = vsel %vm3033, %v3097, 0.0
    %v3162 = vsel %vm3034, %v3098, 0.0
    %v3163 = vsel %vm3035, %v3099, 0.0
    %v3164 = vsel %vm3036, %v3100, 0.0
    %v3165 = vsel %vm3037, %v3101, 0.0
    %v3166 = vsel %vm3038, %v3102, 0.0
    %v3167 = vsel %vm3039, %v3103, 0.0
    %v3168 = vsel %vm3040, %v3104, 0.0
    %v3169 = vsel %vm3041, %v3105, 0.0
    %v3170 = vsel %vm3042, %v3106, 0.0
    %v3171 = vsel %vm3043, %v3107, 0.0
    %v3172 = vsel %vm3044, %v3108, 0.0
    %v3173 = vsel %vm3045, %v3109, 0.0
    %v3174 = vsel %vm3046, %v3110, 0.0
    %v3175 = vsel %vm3047, %v3111, 0.0
    %v3176 = vsel %vm3048, %v3112, 0.0
    %v3177 = vsel %vm3049, %v3113, 0.0
    %v3178 = vsel %vm3050, %v3114, 0.0
    %v3179 = vsel %vm3051, %v3115, 0.0
    %v3180 = vsel %vm3052, %v3116, 0.0
    %v3181 = vsel %vm3053, %v3117, 0.0
    %v3182 = vsel %vm3054, %v3118, 0.0
    %v3183 = vsel %vm3055, %v3119, 0.0
    %v3184 = vsel %vm3056, %v3120, 0.0
    %v3185 = vsel %vm3057, %v3121, 0.0
    %v3186 = vsel %vm3058, %v3122, 0.0
    %v3187 = vsel %vm3059, %v3123, 0.0
    %v3188 = vsel %vm3060, %v3124, 0.0
    %v3189 = vsel %vm3061, %v3125, 0.0
    %v3190 = vsel %vm3062, %v3126, 0.0
    %v3191 = vsel %vm3063, %v3127, 0.0
    %v3192 = vsel %vm3064, %v3128, 0.0
    %v3193 = vsel %vm3065, %v3129, 0.0
    %v3194 = vsel %vm3066, %v3130, 0.0
    %v3195 = vsel %vm3067, %v3131, 0.0
    %v3196 = vsel %vm3068, %v3132, 0.0
    %v3197 = vsel %vm3069, %v3133, 0.0
    %v3198 = vsel %vm3070, %v3134, 0.0
    %v3199 = vsel %vm3071, %v3135, 0.0
    %v3200 = vsel %vm3072, %v3136, 0.0
    %v3201 = vsel %vm3073, %v3137, 0.0
    %v3202 = vsel %vm3074, %v3138, 0.0
    %v3203 = vsel %vm3075, %v3139, 0.0
    %v3204 = vsel %vm3076, %v3140, 0.0
    %v3205 = vsel %vm3077, %v3141, 0.0
    %v3206 = vsel %vm3078, %v3142, 0.0
    %v3207 = vsel %vm3079, %v3143, 0.0
    %v3208 = vsel %vm3080, %v3144, 0.0
    %v3209 = vsel %vm3081, %v3145, 0.0
    %v3210 = vsel %vm3082, %v3146, 0.0
    %v3211 = vsel %vm3083, %v3147, 0.0
    %v3212 = vsel %vm3084, %v3148, 0.0
    %v3213 = vsel %vm3085, %v3149, 0.0
    %v3214 = vsel %vm3086, %v3150, 0.0
    %v3215 = vsel %vm3087, %v3151, 0.0
    %v3216 = vsel %vm3088, %v3152, 0.0
    %v3217 = vpack.c.bf16 %v3155, %v3153
    %v3218 = vpack.c.bf16 %v3156, %v3154
    %v3219 = vpack.c.bf16 %v3159, %v3157
    %v3220 = vpack.c.bf16 %v3160, %v3158
    %v3221 = vpack.c.bf16 %v3163, %v3161
    %v3222 = vpack.c.bf16 %v3164, %v3162
    %v3223 = vpack.c.bf16 %v3167, %v3165
    %v3224 = vpack.c.bf16 %v3168, %v3166
    %v3225 = vpack.c.bf16 %v3171, %v3169
    %v3226 = vpack.c.bf16 %v3172, %v3170
    %v3227 = vpack.c.bf16 %v3175, %v3173
    %v3228 = vpack.c.bf16 %v3176, %v3174
    %v3229 = vpack.c.bf16 %v3179, %v3177
    %v3230 = vpack.c.bf16 %v3180, %v3178
    %v3231 = vpack.c.bf16 %v3183, %v3181
    %v3232 = vpack.c.bf16 %v3184, %v3182
    %v3233 = vpack.c.bf16 %v3187, %v3185
    %v3234 = vpack.c.bf16 %v3188, %v3186
    %v3235 = vpack.c.bf16 %v3191, %v3189
    %v3236 = vpack.c.bf16 %v3192, %v3190
    %v3237 = vpack.c.bf16 %v3195, %v3193
    %v3238 = vpack.c.bf16 %v3196, %v3194
    %v3239 = vpack.c.bf16 %v3199, %v3197
    %v3240 = vpack.c.bf16 %v3200, %v3198
    %v3241 = vpack.c.bf16 %v3203, %v3201
    %v3242 = vpack.c.bf16 %v3204, %v3202
    %v3243 = vpack.c.bf16 %v3207, %v3205
    %v3244 = vpack.c.bf16 %v3208, %v3206
    %v3245 = vpack.c.bf16 %v3211, %v3209
    %v3246 = vpack.c.bf16 %v3212, %v3210
    %v3247 = vpack.c.bf16 %v3215, %v3213
    %v3248 = vpack.c.bf16 %v3216, %v3214
    %v3249 = vld [vmem:[#allocation8] sm:$0xff]
    %v3250 = vld [vmem:[#allocation8 + $0x8] sm:$0xff]
    %v3251 = vld [vmem:[#allocation8 + $0x10] sm:$0xff]
    %v3252 = vld [vmem:[#allocation8 + $0x18] sm:$0xff]
    %v3253 = vld [vmem:[#allocation8 + $0x20] sm:$0xff]
    %v3254 = vld [vmem:[#allocation8 + $0x28] sm:$0xff]
    %v3255 = vld [vmem:[#allocation8 + $0x30] sm:$0xff]
    %v3256 = vld [vmem:[#allocation8 + $0x38] sm:$0xff]
    %v3257 = vld [vmem:[#allocation8 + $0x40] sm:$0xff]
    %v3258 = vld [vmem:[#allocation8 + $0x48] sm:$0xff]
    %v3259 = vld [vmem:[#allocation8 + $0x50] sm:$0xff]
    %v3260 = vld [vmem:[#allocation8 + $0x58] sm:$0xff]
    %v3261 = vld [vmem:[#allocation8 + $0x60] sm:$0xff]
    %v3262 = vld [vmem:[#allocation8 + $0x68] sm:$0xff]
    %v3263 = vld [vmem:[#allocation8 + $0x70] sm:$0xff]
    %v3264 = vld [vmem:[#allocation8 + $0x78] sm:$0xff]
    %v3265 = vld [vmem:[#allocation8 + $0x80] sm:$0xff]
    %v3266 = vld [vmem:[#allocation8 + $0x88] sm:$0xff]
    %v3267 = vld [vmem:[#allocation8 + $0x90] sm:$0xff]
    %v3268 = vld [vmem:[#allocation8 + $0x98] sm:$0xff]
    %v3269 = vld [vmem:[#allocation8 + $0xa0] sm:$0xff]
    %v3270 = vld [vmem:[#allocation8 + $0xa8] sm:$0xff]
    %v3271 = vld [vmem:[#allocation8 + $0xb0] sm:$0xff]
    %v3272 = vld [vmem:[#allocation8 + $0xb8] sm:$0xff]
    %v3273 = vld [vmem:[#allocation8 + $0xc0] sm:$0xff]
    %v3274 = vld [vmem:[#allocation8 + $0xc8] sm:$0xff]
    %v3275 = vld [vmem:[#allocation8 + $0xd0] sm:$0xff]
    %v3276 = vld [vmem:[#allocation8 + $0xd8] sm:$0xff]
    %v3277 = vld [vmem:[#allocation8 + $0xe0] sm:$0xff]
    %v3278 = vld [vmem:[#allocation8 + $0xe8] sm:$0xff]
    %v3279 = vld [vmem:[#allocation8 + $0xf0] sm:$0xff]
    %v3280 = vld [vmem:[#allocation8 + $0xf8] sm:$0xff]
    %v3281 = vld [vmem:[%s5] sm:$0x3]
    %v3283 = vlaneseq
    %v3284 = vshrl.u32 %v3283, 7
    %v3285 = vsub.s32 0, %v3284
    %v3286 = vrot.slane %v3281, %v3285
    %v3287 = vlaneseq
    %v3288 = vshrl.u32 %v3287, 7
    %v3289 = vsub.s32 1, %v3288
    %v3290 = vrot.slane %v3281, %v3289
    %v3325 = vunpack.c.l.b16 %v3249
    %v3326 = vunpack.c.h.b16 %v3249
    %v3327 = vunpack.c.l.b16 %v3250
    %v3328 = vunpack.c.h.b16 %v3250
    %v3329 = vunpack.c.l.b16 %v3251
    %v3330 = vunpack.c.h.b16 %v3251
    %v3331 = vunpack.c.l.b16 %v3252
    %v3332 = vunpack.c.h.b16 %v3252
    %v3333 = vunpack.c.l.b16 %v3253
    %v3334 = vunpack.c.h.b16 %v3253
    %v3335 = vunpack.c.l.b16 %v3254
    %v3336 = vunpack.c.h.b16 %v3254
    %v3337 = vunpack.c.l.b16 %v3255
    %v3338 = vunpack.c.h.b16 %v3255
    %v3339 = vunpack.c.l.b16 %v3256
    %v3340 = vunpack.c.h.b16 %v3256
    %v3341 = vunpack.c.l.b16 %v3257
    %v3342 = vunpack.c.h.b16 %v3257
    %v3343 = vunpack.c.l.b16 %v3258
    %v3344 = vunpack.c.h.b16 %v3258
    %v3345 = vunpack.c.l.b16 %v3259
    %v3346 = vunpack.c.h.b16 %v3259
    %v3347 = vunpack.c.l.b16 %v3260
    %v3348 = vunpack.c.h.b16 %v3260
    %v3349 = vunpack.c.l.b16 %v3261
    %v3350 = vunpack.c.h.b16 %v3261
    %v3351 = vunpack.c.l.b16 %v3262
    %v3352 = vunpack.c.h.b16 %v3262
    %v3353 = vunpack.c.l.b16 %v3263
    %v3354 = vunpack.c.h.b16 %v3263
    %v3355 = vunpack.c.l.b16 %v3264
    %v3356 = vunpack.c.h.b16 %v3264
    %v3357 = vunpack.c.l.b16 %v3265
    %v3358 = vunpack.c.h.b16 %v3265
    %v3359 = vunpack.c.l.b16 %v3266
    %v3360 = vunpack.c.h.b16 %v3266
    %v3361 = vunpack.c.l.b16 %v3267
    %v3362 = vunpack.c.h.b16 %v3267
    %v3363 = vunpack.c.l.b16 %v3268
    %v3364 = vunpack.c.h.b16 %v3268
    %v3365 = vunpack.c.l.b16 %v3269
    %v3366 = vunpack.c.h.b16 %v3269
    %v3367 = vunpack.c.l.b16 %v3270
    %v3368 = vunpack.c.h.b16 %v3270
    %v3369 = vunpack.c.l.b16 %v3271
    %v3370 = vunpack.c.h.b16 %v3271
    %v3371 = vunpack.c.l.b16 %v3272
    %v3372 = vunpack.c.h.b16 %v3272
    %v3373 = vunpack.c.l.b16 %v3273
    %v3374 = vunpack.c.h.b16 %v3273
    %v3375 = vunpack.c.l.b16 %v3274
    %v3376 = vunpack.c.h.b16 %v3274
    %v3377 = vunpack.c.l.b16 %v3275
    %v3378 = vunpack.c.h.b16 %v3275
    %v3379 = vunpack.c.l.b16 %v3276
    %v3380 = vunpack.c.h.b16 %v3276
    %v3381 = vunpack.c.l.b16 %v3277
    %v3382 = vunpack.c.h.b16 %v3277
    %v3383 = vunpack.c.l.b16 %v3278
    %v3384 = vunpack.c.h.b16 %v3278
    %v3385 = vunpack.c.l.b16 %v3279
    %v3386 = vunpack.c.h.b16 %v3279
    %v3387 = vunpack.c.l.b16 %v3280
    %v3388 = vunpack.c.h.b16 %v3280
    %v3389 = vpack.c.b16 %v3327, %v3325
    %v3390 = vpack.c.b16 %v3328, %v3326
    %v3391 = vpack.c.b16 %v3331, %v3329
    %v3392 = vpack.c.b16 %v3332, %v3330
    %v3393 = vpack.c.b16 %v3335, %v3333
    %v3394 = vpack.c.b16 %v3336, %v3334
    %v3395 = vpack.c.b16 %v3339, %v3337
    %v3396 = vpack.c.b16 %v3340, %v3338
    %v3397 = vpack.c.b16 %v3343, %v3341
    %v3398 = vpack.c.b16 %v3344, %v3342
    %v3399 = vpack.c.b16 %v3347, %v3345
    %v3400 = vpack.c.b16 %v3348, %v3346
    %v3401 = vpack.c.b16 %v3351, %v3349
    %v3402 = vpack.c.b16 %v3352, %v3350
    %v3403 = vpack.c.b16 %v3355, %v3353
    %v3404 = vpack.c.b16 %v3356, %v3354
    %v3405 = vpack.c.b16 %v3359, %v3357
    %v3406 = vpack.c.b16 %v3360, %v3358
    %v3407 = vpack.c.b16 %v3363, %v3361
    %v3408 = vpack.c.b16 %v3364, %v3362
    %v3409 = vpack.c.b16 %v3367, %v3365
    %v3410 = vpack.c.b16 %v3368, %v3366
    %v3411 = vpack.c.b16 %v3371, %v3369
    %v3412 = vpack.c.b16 %v3372, %v3370
    %v3413 = vpack.c.b16 %v3375, %v3373
    %v3414 = vpack.c.b16 %v3376, %v3374
    %v3415 = vpack.c.b16 %v3379, %v3377
    %v3416 = vpack.c.b16 %v3380, %v3378
    %v3417 = vpack.c.b16 %v3383, %v3381
    %v3418 = vpack.c.b16 %v3384, %v3382
    %v3419 = vpack.c.b16 %v3387, %v3385
    %v3420 = vpack.c.b16 %v3388, %v3386
    %3453 = vmatprep.subr.bf16.mxu0 %v3390
    %3454 = vmatpush1.bf16.msra.mxu0 %v3389
    %3455 = vmatprep.subr.bf16.mxu0 %v3392
    %3456 = vmatpush1.bf16.msra.mxu0 %v3391
    %3457 = vmatprep.subr.bf16.mxu0 %v3394
    %3458 = vmatpush1.bf16.msra.mxu0 %v3393
    %3459 = vmatprep.subr.bf16.mxu0 %v3396
    %3460 = vmatpush1.bf16.msra.mxu0 %v3395
    %3461 = vmatprep.subr.bf16.mxu0 %v3398
    %3462 = vmatpush1.bf16.msra.mxu0 %v3397
    %3463 = vmatprep.subr.bf16.mxu0 %v3400
    %3464 = vmatpush1.bf16.msra.mxu0 %v3399
    %3465 = vmatprep.subr.bf16.mxu0 %v3402
    %3466 = vmatpush1.bf16.msra.mxu0 %v3401
    %3467 = vmatprep.subr.bf16.mxu0 %v3404
    %3468 = vmatpush1.bf16.msra.mxu0 %v3403
    %3469 = vmatprep.subr.bf16.mxu0 %v3406
    %3470 = vmatpush1.bf16.msra.mxu0 %v3405
    %3471 = vmatprep.subr.bf16.mxu0 %v3408
    %3472 = vmatpush1.bf16.msra.mxu0 %v3407
    %3473 = vmatprep.subr.bf16.mxu0 %v3410
    %3474 = vmatpush1.bf16.msra.mxu0 %v3409
    %3475 = vmatprep.subr.bf16.mxu0 %v3412
    %3476 = vmatpush1.bf16.msra.mxu0 %v3411
    %3477 = vmatprep.subr.bf16.mxu0 %v3414
    %3478 = vmatpush1.bf16.msra.mxu0 %v3413
    %3479 = vmatprep.subr.bf16.mxu0 %v3416
    %3480 = vmatpush1.bf16.msra.mxu0 %v3415
    %3481 = vmatprep.subr.bf16.mxu0 %v3418
    %3482 = vmatpush1.bf16.msra.mxu0 %v3417
    %3483 = vmatprep.subr.bf16.mxu0 %v3420
    %3484 = vmatpush1.bf16.msra.mxu0 %v3419
    %3485 = vmatprep.mubr.bf16.mxu0 %v3218
    %3486 = vmatmul.mubr.bf16.gmra.mrb[0].mxu0 %v3217
    %v3487 = vpop.f32.mrb[0].mxu0
    %v3488 = vadd.f32 %v3286, %v3487
    %v3489 = vpop.f32.mrb[0].mxu0
    %v3490 = vadd.f32 %v3290, %v3489
    %v3491 = vpop.f32.mrb[0].mxu0
    %v3492 = vadd.f32 %v3286, %v3491
    %v3493 = vpop.f32.mrb[0].mxu0
    %v3494 = vadd.f32 %v3290, %v3493
    %3495 = vmatprep.mubr.bf16.mxu0 %v3220
    %3496 = vmatmul.mubr.bf16.gmra.mrb[0].mxu0 %v3219
    %v3497 = vpop.f32.mrb[0].mxu0
    %v3498 = vadd.f32 %v3286, %v3497
    %v3499 = vpop.f32.mrb[0].mxu0
    %v3500 = vadd.f32 %v3290, %v3499
    %v3501 = vpop.f32.mrb[0].mxu0
    %v3502 = vadd.f32 %v3286, %v3501
    %v3503 = vpop.f32.mrb[0].mxu0
    %v3504 = vadd.f32 %v3290, %v3503
    %3505 = vmatprep.mubr.bf16.mxu0 %v3222
    %3506 = vmatmul.mubr.bf16.gmra.mrb[0].mxu0 %v3221
    %v3507 = vpop.f32.mrb[0].mxu0
    %v3508 = vadd.f32 %v3286, %v3507
    %v3509 = vpop.f32.mrb[0].mxu0
    %v3510 = vadd.f32 %v3290, %v3509
    %v3511 = vpop.f32.mrb[0].mxu0
    %v3512 = vadd.f32 %v3286, %v3511
    %v3513 = vpop.f32.mrb[0].mxu0
    %v3514 = vadd.f32 %v3290, %v3513
    %3515 = vmatprep.mubr.bf16.mxu0 %v3224
    %3516 = vmatmul.mubr.bf16.gmra.mrb[0].mxu0 %v3223
    %v3517 = vpop.f32.mrb[0].mxu0
    %v3518 = vadd.f32 %v3286, %v3517
    %v3519 = vpop.f32.mrb[0].mxu0
    %v3520 = vadd.f32 %v3290, %v3519
    %v3521 = vpop.f32.mrb[0].mxu0
    %v3522 = vadd.f32 %v3286, %v3521
    %v3523 = vpop.f32.mrb[0].mxu0
    %v3524 = vadd.f32 %v3290, %v3523
    %3525 = vmatprep.mubr.bf16.mxu0 %v3226
    %3526 = vmatmul.mubr.bf16.gmra.mrb[0].mxu0 %v3225
    %v3527 = vpop.f32.mrb[0].mxu0
    %v3528 = vadd.f32 %v3286, %v3527
    %v3529 = vpop.f32.mrb[0].mxu0
    %v3530 = vadd.f32 %v3290, %v3529
    %v3531 = vpop.f32.mrb[0].mxu0
    %v3532 = vadd.f32 %v3286, %v3531
    %v3533 = vpop.f32.mrb[0].mxu0
    %v3534 = vadd.f32 %v3290, %v3533
    %3535 = vmatprep.mubr.bf16.mxu0 %v3228
    %3536 = vmatmul.mubr.bf16.gmra.mrb[0].mxu0 %v3227
    %v3537 = vpop.f32.mrb[0].mxu0
    %v3538 = vadd.f32 %v3286, %v3537
    %v3539 = vpop.f32.mrb[0].mxu0
    %v3540 = vadd.f32 %v3290, %v3539
    %v3541 = vpop.f32.mrb[0].mxu0
    %v3542 = vadd.f32 %v3286, %v3541
    %v3543 = vpop.f32.mrb[0].mxu0
    %v3544 = vadd.f32 %v3290, %v3543
    %3545 = vmatprep.mubr.bf16.mxu0 %v3230
    %3546 = vmatmul.mubr.bf16.gmra.mrb[0].mxu0 %v3229
    %v3547 = vpop.f32.mrb[0].mxu0
    %v3548 = vadd.f32 %v3286, %v3547
    %v3549 = vpop.f32.mrb[0].mxu0
    %v3550 = vadd.f32 %v3290, %v3549
    %v3551 = vpop.f32.mrb[0].mxu0
    %v3552 = vadd.f32 %v3286, %v3551
    %v3553 = vpop.f32.mrb[0].mxu0
    %v3554 = vadd.f32 %v3290, %v3553
    %3555 = vmatprep.mubr.bf16.mxu0 %v3232
    %3556 = vmatmul.mubr.bf16.gmra.mrb[0].mxu0 %v3231
    %v3557 = vpop.f32.mrb[0].mxu0
    %v3558 = vadd.f32 %v3286, %v3557
    %v3559 = vpop.f32.mrb[0].mxu0
    %v3560 = vadd.f32 %v3290, %v3559
    %v3561 = vpop.f32.mrb[0].mxu0
    %v3562 = vadd.f32 %v3286, %v3561
    %v3563 = vpop.f32.mrb[0].mxu0
    %v3564 = vadd.f32 %v3290, %v3563
    %3565 = vmatprep.mubr.bf16.mxu0 %v3234
    %3566 = vmatmul.mubr.bf16.gmra.mrb[0].mxu0 %v3233
    %v3567 = vpop.f32.mrb[0].mxu0
    %v3568 = vadd.f32 %v3286, %v3567
    %v3569 = vpop.f32.mrb[0].mxu0
    %v3570 = vadd.f32 %v3290, %v3569
    %v3571 = vpop.f32.mrb[0].mxu0
    %v3572 = vadd.f32 %v3286, %v3571
    %v3573 = vpop.f32.mrb[0].mxu0
    %v3574 = vadd.f32 %v3290, %v3573
    %3575 = vmatprep.mubr.bf16.mxu0 %v3236
    %3576 = vmatmul.mubr.bf16.gmra.mrb[0].mxu0 %v3235
    %v3577 = vpop.f32.mrb[0].mxu0
    %v3578 = vadd.f32 %v3286, %v3577
    %v3579 = vpop.f32.mrb[0].mxu0
    %v3580 = vadd.f32 %v3290, %v3579
    %v3581 = vpop.f32.mrb[0].mxu0
    %v3582 = vadd.f32 %v3286, %v3581
    %v3583 = vpop.f32.mrb[0].mxu0
    %v3584 = vadd.f32 %v3290, %v3583
    %3585 = vmatprep.mubr.bf16.mxu0 %v3238
    %3586 = vmatmul.mubr.bf16.gmra.mrb[0].mxu0 %v3237
    %v3587 = vpop.f32.mrb[0].mxu0
    %v3588 = vadd.f32 %v3286, %v3587
    %v3589 = vpop.f32.mrb[0].mxu0
    %v3590 = vadd.f32 %v3290, %v3589
    %v3591 = vpop.f32.mrb[0].mxu0
    %v3592 = vadd.f32 %v3286, %v3591
    %v3593 = vpop.f32.mrb[0].mxu0
    %v3594 = vadd.f32 %v3290, %v3593
    %3595 = vmatprep.mubr.bf16.mxu0 %v3240
    %3596 = vmatmul.mubr.bf16.gmra.mrb[0].mxu0 %v3239
    %v3597 = vpop.f32.mrb[0].mxu0
    %v3598 = vadd.f32 %v3286, %v3597
    %v3599 = vpop.f32.mrb[0].mxu0
    %v3600 = vadd.f32 %v3290, %v3599
    %v3601 = vpop.f32.mrb[0].mxu0
    %v3602 = vadd.f32 %v3286, %v3601
    %v3603 = vpop.f32.mrb[0].mxu0
    %v3604 = vadd.f32 %v3290, %v3603
    %3605 = vmatprep.mubr.bf16.mxu0 %v3242
    %3606 = vmatmul.mubr.bf16.gmra.mrb[0].mxu0 %v3241
    %v3607 = vpop.f32.mrb[0].mxu0
    %v3608 = vadd.f32 %v3286, %v3607
    %v3609 = vpop.f32.mrb[0].mxu0
    %v3610 = vadd.f32 %v3290, %v3609
    %v3611 = vpop.f32.mrb[0].mxu0
    %v3612 = vadd.f32 %v3286, %v3611
    %v3613 = vpop.f32.mrb[0].mxu0
    %v3614 = vadd.f32 %v3290, %v3613
    %3615 = vmatprep.mubr.bf16.mxu0 %v3244
    %3616 = vmatmul.mubr.bf16.gmra.mrb[0].mxu0 %v3243
    %v3617 = vpop.f32.mrb[0].mxu0
    %v3618 = vadd.f32 %v3286, %v3617
    %v3619 = vpop.f32.mrb[0].mxu0
    %v3620 = vadd.f32 %v3290, %v3619
    %v3621 = vpop.f32.mrb[0].mxu0
    %v3622 = vadd.f32 %v3286, %v3621
    %v3623 = vpop.f32.mrb[0].mxu0
    %v3624 = vadd.f32 %v3290, %v3623
    %3625 = vmatprep.mubr.bf16.mxu0 %v3246
    %3626 = vmatmul.mubr.bf16.gmra.mrb[0].mxu0 %v3245
    %v3627 = vpop.f32.mrb[0].mxu0
    %v3628 = vadd.f32 %v3286, %v3627
    %v3629 = vpop.f32.mrb[0].mxu0
    %v3630 = vadd.f32 %v3290, %v3629
    %v3631 = vpop.f32.mrb[0].mxu0
    %v3632 = vadd.f32 %v3286, %v3631
    %v3633 = vpop.f32.mrb[0].mxu0
    %v3634 = vadd.f32 %v3290, %v3633
    %3635 = vmatprep.mubr.bf16.mxu0 %v3248
    %3636 = vmatmul.mubr.bf16.gmra.mrb[0].mxu0 %v3247
    %v3637 = vpop.f32.mrb[0].mxu0
    %v3638 = vadd.f32 %v3286, %v3637
    %v3639 = vpop.f32.mrb[0].mxu0
    %v3640 = vadd.f32 %v3290, %v3639
    %v3641 = vpop.f32.mrb[0].mxu0
    %v3642 = vadd.f32 %v3286, %v3641
    %v3643 = vpop.f32.mrb[0].mxu0
    %v3644 = vadd.f32 %v3290, %v3643
    %3645 = vdwg.mxu0
    %v3646 = vmax.f32 %v3488, 0.0
    %v3647 = vmax.f32 %v3490, 0.0
    %v3648 = vmax.f32 %v3492, 0.0
    %v3649 = vmax.f32 %v3494, 0.0
    %v3650 = vmax.f32 %v3498, 0.0
    %v3651 = vmax.f32 %v3500, 0.0
    %v3652 = vmax.f32 %v3502, 0.0
    %v3653 = vmax.f32 %v3504, 0.0
    %v3654 = vmax.f32 %v3508, 0.0
    %v3655 = vmax.f32 %v3510, 0.0
    %v3656 = vmax.f32 %v3512, 0.0
    %v3657 = vmax.f32 %v3514, 0.0
    %v3658 = vmax.f32 %v3518, 0.0
    %v3659 = vmax.f32 %v3520, 0.0
    %v3660 = vmax.f32 %v3522, 0.0
    %v3661 = vmax.f32 %v3524, 0.0
    %v3662 = vmax.f32 %v3528, 0.0
    %v3663 = vmax.f32 %v3530, 0.0
    %v3664 = vmax.f32 %v3532, 0.0
    %v3665 = vmax.f32 %v3534, 0.0
    %v3666 = vmax.f32 %v3538, 0.0
    %v3667 = vmax.f32 %v3540, 0.0
    %v3668 = vmax.f32 %v3542, 0.0
    %v3669 = vmax.f32 %v3544, 0.0
    %v3670 = vmax.f32 %v3548, 0.0
    %v3671 = vmax.f32 %v3550, 0.0
    %v3672 = vmax.f32 %v3552, 0.0
    %v3673 = vmax.f32 %v3554, 0.0
    %v3674 = vmax.f32 %v3558, 0.0
    %v3675 = vmax.f32 %v3560, 0.0
    %v3676 = vmax.f32 %v3562, 0.0
    %v3677 = vmax.f32 %v3564, 0.0
    %v3678 = vmax.f32 %v3568, 0.0
    %v3679 = vmax.f32 %v3570, 0.0
    %v3680 = vmax.f32 %v3572, 0.0
    %v3681 = vmax.f32 %v3574, 0.0
    %v3682 = vmax.f32 %v3578, 0.0
    %v3683 = vmax.f32 %v3580, 0.0
    %v3684 = vmax.f32 %v3582, 0.0
    %v3685 = vmax.f32 %v3584, 0.0
    %v3686 = vmax.f32 %v3588, 0.0
    %v3687 = vmax.f32 %v3590, 0.0
    %v3688 = vmax.f32 %v3592, 0.0
    %v3689 = vmax.f32 %v3594, 0.0
    %v3690 = vmax.f32 %v3598, 0.0
    %v3691 = vmax.f32 %v3600, 0.0
    %v3692 = vmax.f32 %v3602, 0.0
    %v3693 = vmax.f32 %v3604, 0.0
    %v3694 = vmax.f32 %v3608, 0.0
    %v3695 = vmax.f32 %v3610, 0.0
    %v3696 = vmax.f32 %v3612, 0.0
    %v3697 = vmax.f32 %v3614, 0.0
    %v3698 = vmax.f32 %v3618, 0.0
    %v3699 = vmax.f32 %v3620, 0.0
    %v3700 = vmax.f32 %v3622, 0.0
    %v3701 = vmax.f32 %v3624, 0.0
    %v3702 = vmax.f32 %v3628, 0.0
    %v3703 = vmax.f32 %v3630, 0.0
    %v3704 = vmax.f32 %v3632, 0.0
    %v3705 = vmax.f32 %v3634, 0.0
    %v3706 = vmax.f32 %v3638, 0.0
    %v3707 = vmax.f32 %v3640, 0.0
    %v3708 = vmax.f32 %v3642, 0.0
    %v3709 = vmax.f32 %v3644, 0.0
    %s3710 = sxor.u32 %s89, 2748931611
    %s3711 = smul.u32 %s3710, 2654435769
    %v3712 = vstv %s3711
    %v3713 = vadd.s32 %v2383, %v3712
    %v3714 = vadd.s32 %v2384, %v3712
    %v3715 = vadd.s32 %v2385, %v3712
    %v3716 = vadd.s32 %v2386, %v3712
    %v3717 = vadd.s32 %v2387, %v3712
    %v3718 = vadd.s32 %v2388, %v3712
    %v3719 = vadd.s32 %v2389, %v3712
    %v3720 = vadd.s32 %v2390, %v3712
    %v3721 = vadd.s32 %v2391, %v3712
    %v3722 = vadd.s32 %v2392, %v3712
    %v3723 = vadd.s32 %v2393, %v3712
    %v3724 = vadd.s32 %v2394, %v3712
    %v3725 = vadd.s32 %v2395, %v3712
    %v3726 = vadd.s32 %v2396, %v3712
    %v3727 = vadd.s32 %v2397, %v3712
    %v3728 = vadd.s32 %v2398, %v3712
    %v3729 = vadd.s32 %v2399, %v3712
    %v3730 = vadd.s32 %v2400, %v3712
    %v3731 = vadd.s32 %v2401, %v3712
    %v3732 = vadd.s32 %v2402, %v3712
    %v3733 = vadd.s32 %v2403, %v3712
    %v3734 = vadd.s32 %v2404, %v3712
    %v3735 = vadd.s32 %v2405, %v3712
    %v3736 = vadd.s32 %v2406, %v3712
    %v3737 = vadd.s32 %v2407, %v3712
    %v3738 = vadd.s32 %v2408, %v3712
    %v3739 = vadd.s32 %v2409, %v3712
    %v3740 = vadd.s32 %v2410, %v3712
    %v3741 = vadd.s32 %v2411, %v3712
    %v3742 = vadd.s32 %v2412, %v3712
    %v3743 = vadd.s32 %v2413, %v3712
    %v3744 = vadd.s32 %v2414, %v3712
    %v3745 = vadd.s32 %v2415, %v3712
    %v3746 = vadd.s32 %v2416, %v3712
    %v3747 = vadd.s32 %v2417, %v3712
    %v3748 = vadd.s32 %v2418, %v3712
    %v3749 = vadd.s32 %v2419, %v3712
    %v3750 = vadd.s32 %v2420, %v3712
    %v3751 = vadd.s32 %v2421, %v3712
    %v3752 = vadd.s32 %v2422, %v3712
    %v3753 = vadd.s32 %v2423, %v3712
    %v3754 = vadd.s32 %v2424, %v3712
    %v3755 = vadd.s32 %v2425, %v3712
    %v3756 = vadd.s32 %v2426, %v3712
    %v3757 = vadd.s32 %v2427, %v3712
    %v3758 = vadd.s32 %v2428, %v3712
    %v3759 = vadd.s32 %v2429, %v3712
    %v3760 = vadd.s32 %v2430, %v3712
    %v3761 = vadd.s32 %v2431, %v3712
    %v3762 = vadd.s32 %v2432, %v3712
    %v3763 = vadd.s32 %v2433, %v3712
    %v3764 = vadd.s32 %v2434, %v3712
    %v3765 = vadd.s32 %v2435, %v3712
    %v3766 = vadd.s32 %v2436, %v3712
    %v3767 = vadd.s32 %v2437, %v3712
    %v3768 = vadd.s32 %v2438, %v3712
    %v3769 = vadd.s32 %v2439, %v3712
    %v3770 = vadd.s32 %v2440, %v3712
    %v3771 = vadd.s32 %v2441, %v3712
    %v3772 = vadd.s32 %v2442, %v3712
    %v3773 = vadd.s32 %v2443, %v3712
    %v3774 = vadd.s32 %v2444, %v3712
    %v3775 = vadd.s32 %v2445, %v3712
    %v3776 = vadd.s32 %v2446, %v3712
    %v3777 = vshrl.u32 %v3713, 16
    %v3778 = vshrl.u32 %v3714, 16
    %v3779 = vshrl.u32 %v3715, 16
    %v3780 = vshrl.u32 %v3716, 16
    %v3781 = vshrl.u32 %v3717, 16
    %v3782 = vshrl.u32 %v3718, 16
    %v3783 = vshrl.u32 %v3719, 16
    %v3784 = vshrl.u32 %v3720, 16
    %v3785 = vshrl.u32 %v3721, 16
    %v3786 = vshrl.u32 %v3722, 16
    %v3787 = vshrl.u32 %v3723, 16
    %v3788 = vshrl.u32 %v3724, 16
    %v3789 = vshrl.u32 %v3725, 16
    %v3790 = vshrl.u32 %v3726, 16
    %v3791 = vshrl.u32 %v3727, 16
    %v3792 = vshrl.u32 %v3728, 16
    %v3793 = vshrl.u32 %v3729, 16
    %v3794 = vshrl.u32 %v3730, 16
    %v3795 = vshrl.u32 %v3731, 16
    %v3796 = vshrl.u32 %v3732, 16
    %v3797 = vshrl.u32 %v3733, 16
    %v3798 = vshrl.u32 %v3734, 16
    %v3799 = vshrl.u32 %v3735, 16
    %v3800 = vshrl.u32 %v3736, 16
    %v3801 = vshrl.u32 %v3737, 16
    %v3802 = vshrl.u32 %v3738, 16
    %v3803 = vshrl.u32 %v3739, 16
    %v3804 = vshrl.u32 %v3740, 16
    %v3805 = vshrl.u32 %v3741, 16
    %v3806 = vshrl.u32 %v3742, 16
    %v3807 = vshrl.u32 %v3743, 16
    %v3808 = vshrl.u32 %v3744, 16
    %v3809 = vshrl.u32 %v3745, 16
    %v3810 = vshrl.u32 %v3746, 16
    %v3811 = vshrl.u32 %v3747, 16
    %v3812 = vshrl.u32 %v3748, 16
    %v3813 = vshrl.u32 %v3749, 16
    %v3814 = vshrl.u32 %v3750, 16
    %v3815 = vshrl.u32 %v3751, 16
    %v3816 = vshrl.u32 %v3752, 16
    %v3817 = vshrl.u32 %v3753, 16
    %v3818 = vshrl.u32 %v3754, 16
    %v3819 = vshrl.u32 %v3755, 16
    %v3820 = vshrl.u32 %v3756, 16
    %v3821 = vshrl.u32 %v3757, 16
    %v3822 = vshrl.u32 %v3758, 16
    %v3823 = vshrl.u32 %v3759, 16
    %v3824 = vshrl.u32 %v3760, 16
    %v3825 = vshrl.u32 %v3761, 16
    %v3826 = vshrl.u32 %v3762, 16
    %v3827 = vshrl.u32 %v3763, 16
    %v3828 = vshrl.u32 %v3764, 16
    %v3829 = vshrl.u32 %v3765, 16
    %v3830 = vshrl.u32 %v3766, 16
    %v3831 = vshrl.u32 %v3767, 16
    %v3832 = vshrl.u32 %v3768, 16
    %v3833 = vshrl.u32 %v3769, 16
    %v3834 = vshrl.u32 %v3770, 16
    %v3835 = vshrl.u32 %v3771, 16
    %v3836 = vshrl.u32 %v3772, 16
    %v3837 = vshrl.u32 %v3773, 16
    %v3838 = vshrl.u32 %v3774, 16
    %v3839 = vshrl.u32 %v3775, 16
    %v3840 = vshrl.u32 %v3776, 16
    %v3841 = vxor.u32 %v3713, %v3777
    %v3842 = vxor.u32 %v3714, %v3778
    %v3843 = vxor.u32 %v3715, %v3779
    %v3844 = vxor.u32 %v3716, %v3780
    %v3845 = vxor.u32 %v3717, %v3781
    %v3846 = vxor.u32 %v3718, %v3782
    %v3847 = vxor.u32 %v3719, %v3783
    %v3848 = vxor.u32 %v3720, %v3784
    %v3849 = vxor.u32 %v3721, %v3785
    %v3850 = vxor.u32 %v3722, %v3786
    %v3851 = vxor.u32 %v3723, %v3787
    %v3852 = vxor.u32 %v3724, %v3788
    %v3853 = vxor.u32 %v3725, %v3789
    %v3854 = vxor.u32 %v3726, %v3790
    %v3855 = vxor.u32 %v3727, %v3791
    %v3856 = vxor.u32 %v3728, %v3792
    %v3857 = vxor.u32 %v3729, %v3793
    %v3858 = vxor.u32 %v3730, %v3794
    %v3859 = vxor.u32 %v3731, %v3795
    %v3860 = vxor.u32 %v3732, %v3796
    %v3861 = vxor.u32 %v3733, %v3797
    %v3862 = vxor.u32 %v3734, %v3798
    %v3863 = vxor.u32 %v3735, %v3799
    %v3864 = vxor.u32 %v3736, %v3800
    %v3865 = vxor.u32 %v3737, %v3801
    %v3866 = vxor.u32 %v3738, %v3802
    %v3867 = vxor.u32 %v3739, %v3803
    %v3868 = vxor.u32 %v3740, %v3804
    %v3869 = vxor.u32 %v3741, %v3805
    %v3870 = vxor.u32 %v3742, %v3806
    %v3871 = vxor.u32 %v3743, %v3807
    %v3872 = vxor.u32 %v3744, %v3808
    %v3873 = vxor.u32 %v3745, %v3809
    %v3874 = vxor.u32 %v3746, %v3810
    %v3875 = vxor.u32 %v3747, %v3811
    %v3876 = vxor.u32 %v3748, %v3812
    %v3877 = vxor.u32 %v3749, %v3813
    %v3878 = vxor.u32 %v3750, %v3814
    %v3879 = vxor.u32 %v3751, %v3815
    %v3880 = vxor.u32 %v3752, %v3816
    %v3881 = vxor.u32 %v3753, %v3817
    %v3882 = vxor.u32 %v3754, %v3818
    %v3883 = vxor.u32 %v3755, %v3819
    %v3884 = vxor.u32 %v3756, %v3820
    %v3885 = vxor.u32 %v3757, %v3821
    %v3886 = vxor.u32 %v3758, %v3822
    %v3887 = vxor.u32 %v3759, %v3823
    %v3888 = vxor.u32 %v3760, %v3824
    %v3889 = vxor.u32 %v3761, %v3825
    %v3890 = vxor.u32 %v3762, %v3826
    %v3891 = vxor.u32 %v3763, %v3827
    %v3892 = vxor.u32 %v3764, %v3828
    %v3893 = vxor.u32 %v3765, %v3829
    %v3894 = vxor.u32 %v3766, %v3830
    %v3895 = vxor.u32 %v3767, %v3831
    %v3896 = vxor.u32 %v3768, %v3832
    %v3897 = vxor.u32 %v3769, %v3833
    %v3898 = vxor.u32 %v3770, %v3834
    %v3899 = vxor.u32 %v3771, %v3835
    %v3900 = vxor.u32 %v3772, %v3836
    %v3901 = vxor.u32 %v3773, %v3837
    %v3902 = vxor.u32 %v3774, %v3838
    %v3903 = vxor.u32 %v3775, %v3839
    %v3904 = vxor.u32 %v3776, %v3840
    %v3905 = vmul.u32 %v3841, 2146121005
    %v3906 = vmul.u32 %v3842, 2146121005
    %v3907 = vmul.u32 %v3843, 2146121005
    %v3908 = vmul.u32 %v3844, 2146121005
    %v3909 = vmul.u32 %v3845, 2146121005
    %v3910 = vmul.u32 %v3846, 2146121005
    %v3911 = vmul.u32 %v3847, 2146121005
    %v3912 = vmul.u32 %v3848, 2146121005
    %v3913 = vmul.u32 %v3849, 2146121005
    %v3914 = vmul.u32 %v3850, 2146121005
    %v3915 = vmul.u32 %v3851, 2146121005
    %v3916 = vmul.u32 %v3852, 2146121005
    %v3917 = vmul.u32 %v3853, 2146121005
    %v3918 = vmul.u32 %v3854, 2146121005
    %v3919 = vmul.u32 %v3855, 2146121005
    %v3920 = vmul.u32 %v3856, 2146121005
    %v3921 = vmul.u32 %v3857, 2146121005
    %v3922 = vmul.u32 %v3858, 2146121005
    %v3923 = vmul.u32 %v3859, 2146121005
    %v3924 = vmul.u32 %v3860, 2146121005
    %v3925 = vmul.u32 %v3861, 2146121005
    %v3926 = vmul.u32 %v3862, 2146121005
    %v3927 = vmul.u32 %v3863, 2146121005
    %v3928 = vmul.u32 %v3864, 2146121005
    %v3929 = vmul.u32 %v3865, 2146121005
    %v3930 = vmul.u32 %v3866, 2146121005
    %v3931 = vmul.u32 %v3867, 2146121005
    %v3932 = vmul.u32 %v3868, 2146121005
    %v3933 = vmul.u32 %v3869, 2146121005
    %v3934 = vmul.u32 %v3870, 2146121005
    %v3935 = vmul.u32 %v3871, 2146121005
    %v3936 = vmul.u32 %v3872, 2146121005
    %v3937 = vmul.u32 %v3873, 2146121005
    %v3938 = vmul.u32 %v3874, 2146121005
    %v3939 = vmul.u32 %v3875, 2146121005
    %v3940 = vmul.u32 %v3876, 2146121005
    %v3941 = vmul.u32 %v3877, 2146121005
    %v3942 = vmul.u32 %v3878, 2146121005
    %v3943 = vmul.u32 %v3879, 2146121005
    %v3944 = vmul.u32 %v3880, 2146121005
    %v3945 = vmul.u32 %v3881, 2146121005
    %v3946 = vmul.u32 %v3882, 2146121005
    %v3947 = vmul.u32 %v3883, 2146121005
    %v3948 = vmul.u32 %v3884, 2146121005
    %v3949 = vmul.u32 %v3885, 2146121005
    %v3950 = vmul.u32 %v3886, 2146121005
    %v3951 = vmul.u32 %v3887, 2146121005
    %v3952 = vmul.u32 %v3888, 2146121005
    %v3953 = vmul.u32 %v3889, 2146121005
    %v3954 = vmul.u32 %v3890, 2146121005
    %v3955 = vmul.u32 %v3891, 2146121005
    %v3956 = vmul.u32 %v3892, 2146121005
    %v3957 = vmul.u32 %v3893, 2146121005
    %v3958 = vmul.u32 %v3894, 2146121005
    %v3959 = vmul.u32 %v3895, 2146121005
    %v3960 = vmul.u32 %v3896, 2146121005
    %v3961 = vmul.u32 %v3897, 2146121005
    %v3962 = vmul.u32 %v3898, 2146121005
    %v3963 = vmul.u32 %v3899, 2146121005
    %v3964 = vmul.u32 %v3900, 2146121005
    %v3965 = vmul.u32 %v3901, 2146121005
    %v3966 = vmul.u32 %v3902, 2146121005
    %v3967 = vmul.u32 %v3903, 2146121005
    %v3968 = vmul.u32 %v3904, 2146121005
    %v3969 = vshrl.u32 %v3905, 15
    %v3970 = vshrl.u32 %v3906, 15
    %v3971 = vshrl.u32 %v3907, 15
    %v3972 = vshrl.u32 %v3908, 15
    %v3973 = vshrl.u32 %v3909, 15
    %v3974 = vshrl.u32 %v3910, 15
    %v3975 = vshrl.u32 %v3911, 15
    %v3976 = vshrl.u32 %v3912, 15
    %v3977 = vshrl.u32 %v3913, 15
    %v3978 = vshrl.u32 %v3914, 15
    %v3979 = vshrl.u32 %v3915, 15
    %v3980 = vshrl.u32 %v3916, 15
    %v3981 = vshrl.u32 %v3917, 15
    %v3982 = vshrl.u32 %v3918, 15
    %v3983 = vshrl.u32 %v3919, 15
    %v3984 = vshrl.u32 %v3920, 15
    %v3985 = vshrl.u32 %v3921, 15
    %v3986 = vshrl.u32 %v3922, 15
    %v3987 = vshrl.u32 %v3923, 15
    %v3988 = vshrl.u32 %v3924, 15
    %v3989 = vshrl.u32 %v3925, 15
    %v3990 = vshrl.u32 %v3926, 15
    %v3991 = vshrl.u32 %v3927, 15
    %v3992 = vshrl.u32 %v3928, 15
    %v3993 = vshrl.u32 %v3929, 15
    %v3994 = vshrl.u32 %v3930, 15
    %v3995 = vshrl.u32 %v3931, 15
    %v3996 = vshrl.u32 %v3932, 15
    %v3997 = vshrl.u32 %v3933, 15
    %v3998 = vshrl.u32 %v3934, 15
    %v3999 = vshrl.u32 %v3935, 15
    %v4000 = vshrl.u32 %v3936, 15
    %v4001 = vshrl.u32 %v3937, 15
    %v4002 = vshrl.u32 %v3938, 15
    %v4003 = vshrl.u32 %v3939, 15
    %v4004 = vshrl.u32 %v3940, 15
    %v4005 = vshrl.u32 %v3941, 15
    %v4006 = vshrl.u32 %v3942, 15
    %v4007 = vshrl.u32 %v3943, 15
    %v4008 = vshrl.u32 %v3944, 15
    %v4009 = vshrl.u32 %v3945, 15
    %v4010 = vshrl.u32 %v3946, 15
    %v4011 = vshrl.u32 %v3947, 15
    %v4012 = vshrl.u32 %v3948, 15
    %v4013 = vshrl.u32 %v3949, 15
    %v4014 = vshrl.u32 %v3950, 15
    %v4015 = vshrl.u32 %v3951, 15
    %v4016 = vshrl.u32 %v3952, 15
    %v4017 = vshrl.u32 %v3953, 15
    %v4018 = vshrl.u32 %v3954, 15
    %v4019 = vshrl.u32 %v3955, 15
    %v4020 = vshrl.u32 %v3956, 15
    %v4021 = vshrl.u32 %v3957, 15
    %v4022 = vshrl.u32 %v3958, 15
    %v4023 = vshrl.u32 %v3959, 15
    %v4024 = vshrl.u32 %v3960, 15
    %v4025 = vshrl.u32 %v3961, 15
    %v4026 = vshrl.u32 %v3962, 15
    %v4027 = vshrl.u32 %v3963, 15
    %v4028 = vshrl.u32 %v3964, 15
    %v4029 = vshrl.u32 %v3965, 15
    %v4030 = vshrl.u32 %v3966, 15
    %v4031 = vshrl.u32 %v3967, 15
    %v4032 = vshrl.u32 %v3968, 15
    %v4033 = vxor.u32 %v3905, %v3969
    %v4034 = vxor.u32 %v3906, %v3970
    %v4035 = vxor.u32 %v3907, %v3971
    %v4036 = vxor.u32 %v3908, %v3972
    %v4037 = vxor.u32 %v3909, %v3973
    %v4038 = vxor.u32 %v3910, %v3974
    %v4039 = vxor.u32 %v3911, %v3975
    %v4040 = vxor.u32 %v3912, %v3976
    %v4041 = vxor.u32 %v3913, %v3977
    %v4042 = vxor.u32 %v3914, %v3978
    %v4043 = vxor.u32 %v3915, %v3979
    %v4044 = vxor.u32 %v3916, %v3980
    %v4045 = vxor.u32 %v3917, %v3981
    %v4046 = vxor.u32 %v3918, %v3982
    %v4047 = vxor.u32 %v3919, %v3983
    %v4048 = vxor.u32 %v3920, %v3984
    %v4049 = vxor.u32 %v3921, %v3985
    %v4050 = vxor.u32 %v3922, %v3986
    %v4051 = vxor.u32 %v3923, %v3987
    %v4052 = vxor.u32 %v3924, %v3988
    %v4053 = vxor.u32 %v3925, %v3989
    %v4054 = vxor.u32 %v3926, %v3990
    %v4055 = vxor.u32 %v3927, %v3991
    %v4056 = vxor.u32 %v3928, %v3992
    %v4057 = vxor.u32 %v3929, %v3993
    %v4058 = vxor.u32 %v3930, %v3994
    %v4059 = vxor.u32 %v3931, %v3995
    %v4060 = vxor.u32 %v3932, %v3996
    %v4061 = vxor.u32 %v3933, %v3997
    %v4062 = vxor.u32 %v3934, %v3998
    %v4063 = vxor.u32 %v3935, %v3999
    %v4064 = vxor.u32 %v3936, %v4000
    %v4065 = vxor.u32 %v3937, %v4001
    %v4066 = vxor.u32 %v3938, %v4002
    %v4067 = vxor.u32 %v3939, %v4003
    %v4068 = vxor.u32 %v3940, %v4004
    %v4069 = vxor.u32 %v3941, %v4005
    %v4070 = vxor.u32 %v3942, %v4006
    %v4071 = vxor.u32 %v3943, %v4007
    %v4072 = vxor.u32 %v3944, %v4008
    %v4073 = vxor.u32 %v3945, %v4009
    %v4074 = vxor.u32 %v3946, %v4010
    %v4075 = vxor.u32 %v3947, %v4011
    %v4076 = vxor.u32 %v3948, %v4012
    %v4077 = vxor.u32 %v3949, %v4013
    %v4078 = vxor.u32 %v3950, %v4014
    %v4079 = vxor.u32 %v3951, %v4015
    %v4080 = vxor.u32 %v3952, %v4016
    %v4081 = vxor.u32 %v3953, %v4017
    %v4082 = vxor.u32 %v3954, %v4018
    %v4083 = vxor.u32 %v3955, %v4019
    %v4084 = vxor.u32 %v3956, %v4020
    %v4085 = vxor.u32 %v3957, %v4021
    %v4086 = vxor.u32 %v3958, %v4022
    %v4087 = vxor.u32 %v3959, %v4023
    %v4088 = vxor.u32 %v3960, %v4024
    %v4089 = vxor.u32 %v3961, %v4025
    %v4090 = vxor.u32 %v3962, %v4026
    %v4091 = vxor.u32 %v3963, %v4027
    %v4092 = vxor.u32 %v3964, %v4028
    %v4093 = vxor.u32 %v3965, %v4029
    %v4094 = vxor.u32 %v3966, %v4030
    %v4095 = vxor.u32 %v3967, %v4031
    %v4096 = vxor.u32 %v3968, %v4032
    %v4097 = vmul.u32 %v4033, 2221713035
    %v4098 = vmul.u32 %v4034, 2221713035
    %v4099 = vmul.u32 %v4035, 2221713035
    %v4100 = vmul.u32 %v4036, 2221713035
    %v4101 = vmul.u32 %v4037, 2221713035
    %v4102 = vmul.u32 %v4038, 2221713035
    %v4103 = vmul.u32 %v4039, 2221713035
    %v4104 = vmul.u32 %v4040, 2221713035
    %v4105 = vmul.u32 %v4041, 2221713035
    %v4106 = vmul.u32 %v4042, 2221713035
    %v4107 = vmul.u32 %v4043, 2221713035
    %v4108 = vmul.u32 %v4044, 2221713035
    %v4109 = vmul.u32 %v4045, 2221713035
    %v4110 = vmul.u32 %v4046, 2221713035
    %v4111 = vmul.u32 %v4047, 2221713035
    %v4112 = vmul.u32 %v4048, 2221713035
    %v4113 = vmul.u32 %v4049, 2221713035
    %v4114 = vmul.u32 %v4050, 2221713035
    %v4115 = vmul.u32 %v4051, 2221713035
    %v4116 = vmul.u32 %v4052, 2221713035
    %v4117 = vmul.u32 %v4053, 2221713035
    %v4118 = vmul.u32 %v4054, 2221713035
    %v4119 = vmul.u32 %v4055, 2221713035
    %v4120 = vmul.u32 %v4056, 2221713035
    %v4121 = vmul.u32 %v4057, 2221713035
    %v4122 = vmul.u32 %v4058, 2221713035
    %v4123 = vmul.u32 %v4059, 2221713035
    %v4124 = vmul.u32 %v4060, 2221713035
    %v4125 = vmul.u32 %v4061, 2221713035
    %v4126 = vmul.u32 %v4062, 2221713035
    %v4127 = vmul.u32 %v4063, 2221713035
    %v4128 = vmul.u32 %v4064, 2221713035
    %v4129 = vmul.u32 %v4065, 2221713035
    %v4130 = vmul.u32 %v4066, 2221713035
    %v4131 = vmul.u32 %v4067, 2221713035
    %v4132 = vmul.u32 %v4068, 2221713035
    %v4133 = vmul.u32 %v4069, 2221713035
    %v4134 = vmul.u32 %v4070, 2221713035
    %v4135 = vmul.u32 %v4071, 2221713035
    %v4136 = vmul.u32 %v4072, 2221713035
    %v4137 = vmul.u32 %v4073, 2221713035
    %v4138 = vmul.u32 %v4074, 2221713035
    %v4139 = vmul.u32 %v4075, 2221713035
    %v4140 = vmul.u32 %v4076, 2221713035
    %v4141 = vmul.u32 %v4077, 2221713035
    %v4142 = vmul.u32 %v4078, 2221713035
    %v4143 = vmul.u32 %v4079, 2221713035
    %v4144 = vmul.u32 %v4080, 2221713035
    %v4145 = vmul.u32 %v4081, 2221713035
    %v4146 = vmul.u32 %v4082, 2221713035
    %v4147 = vmul.u32 %v4083, 2221713035
    %v4148 = vmul.u32 %v4084, 2221713035
    %v4149 = vmul.u32 %v4085, 2221713035
    %v4150 = vmul.u32 %v4086, 2221713035
    %v4151 = vmul.u32 %v4087, 2221713035
    %v4152 = vmul.u32 %v4088, 2221713035
    %v4153 = vmul.u32 %v4089, 2221713035
    %v4154 = vmul.u32 %v4090, 2221713035
    %v4155 = vmul.u32 %v4091, 2221713035
    %v4156 = vmul.u32 %v4092, 2221713035
    %v4157 = vmul.u32 %v4093, 2221713035
    %v4158 = vmul.u32 %v4094, 2221713035
    %v4159 = vmul.u32 %v4095, 2221713035
    %v4160 = vmul.u32 %v4096, 2221713035
    %v4161 = vshrl.u32 %v4097, 16
    %v4162 = vshrl.u32 %v4098, 16
    %v4163 = vshrl.u32 %v4099, 16
    %v4164 = vshrl.u32 %v4100, 16
    %v4165 = vshrl.u32 %v4101, 16
    %v4166 = vshrl.u32 %v4102, 16
    %v4167 = vshrl.u32 %v4103, 16
    %v4168 = vshrl.u32 %v4104, 16
    %v4169 = vshrl.u32 %v4105, 16
    %v4170 = vshrl.u32 %v4106, 16
    %v4171 = vshrl.u32 %v4107, 16
    %v4172 = vshrl.u32 %v4108, 16
    %v4173 = vshrl.u32 %v4109, 16
    %v4174 = vshrl.u32 %v4110, 16
    %v4175 = vshrl.u32 %v4111, 16
    %v4176 = vshrl.u32 %v4112, 16
    %v4177 = vshrl.u32 %v4113, 16
    %v4178 = vshrl.u32 %v4114, 16
    %v4179 = vshrl.u32 %v4115, 16
    %v4180 = vshrl.u32 %v4116, 16
    %v4181 = vshrl.u32 %v4117, 16
    %v4182 = vshrl.u32 %v4118, 16
    %v4183 = vshrl.u32 %v4119, 16
    %v4184 = vshrl.u32 %v4120, 16
    %v4185 = vshrl.u32 %v4121, 16
    %v4186 = vshrl.u32 %v4122, 16
    %v4187 = vshrl.u32 %v4123, 16
    %v4188 = vshrl.u32 %v4124, 16
    %v4189 = vshrl.u32 %v4125, 16
    %v4190 = vshrl.u32 %v4126, 16
    %v4191 = vshrl.u32 %v4127, 16
    %v4192 = vshrl.u32 %v4128, 16
    %v4193 = vshrl.u32 %v4129, 16
    %v4194 = vshrl.u32 %v4130, 16
    %v4195 = vshrl.u32 %v4131, 16
    %v4196 = vshrl.u32 %v4132, 16
    %v4197 = vshrl.u32 %v4133, 16
    %v4198 = vshrl.u32 %v4134, 16
    %v4199 = vshrl.u32 %v4135, 16
    %v4200 = vshrl.u32 %v4136, 16
    %v4201 = vshrl.u32 %v4137, 16
    %v4202 = vshrl.u32 %v4138, 16
    %v4203 = vshrl.u32 %v4139, 16
    %v4204 = vshrl.u32 %v4140, 16
    %v4205 = vshrl.u32 %v4141, 16
    %v4206 = vshrl.u32 %v4142, 16
    %v4207 = vshrl.u32 %v4143, 16
    %v4208 = vshrl.u32 %v4144, 16
    %v4209 = vshrl.u32 %v4145, 16
    %v4210 = vshrl.u32 %v4146, 16
    %v4211 = vshrl.u32 %v4147, 16
    %v4212 = vshrl.u32 %v4148, 16
    %v4213 = vshrl.u32 %v4149, 16
    %v4214 = vshrl.u32 %v4150, 16
    %v4215 = vshrl.u32 %v4151, 16
    %v4216 = vshrl.u32 %v4152, 16
    %v4217 = vshrl.u32 %v4153, 16
    %v4218 = vshrl.u32 %v4154, 16
    %v4219 = vshrl.u32 %v4155, 16
    %v4220 = vshrl.u32 %v4156, 16
    %v4221 = vshrl.u32 %v4157, 16
    %v4222 = vshrl.u32 %v4158, 16
    %v4223 = vshrl.u32 %v4159, 16
    %v4224 = vshrl.u32 %v4160, 16
    %v4225 = vxor.u32 %v4097, %v4161
    %v4226 = vxor.u32 %v4098, %v4162
    %v4227 = vxor.u32 %v4099, %v4163
    %v4228 = vxor.u32 %v4100, %v4164
    %v4229 = vxor.u32 %v4101, %v4165
    %v4230 = vxor.u32 %v4102, %v4166
    %v4231 = vxor.u32 %v4103, %v4167
    %v4232 = vxor.u32 %v4104, %v4168
    %v4233 = vxor.u32 %v4105, %v4169
    %v4234 = vxor.u32 %v4106, %v4170
    %v4235 = vxor.u32 %v4107, %v4171
    %v4236 = vxor.u32 %v4108, %v4172
    %v4237 = vxor.u32 %v4109, %v4173
    %v4238 = vxor.u32 %v4110, %v4174
    %v4239 = vxor.u32 %v4111, %v4175
    %v4240 = vxor.u32 %v4112, %v4176
    %v4241 = vxor.u32 %v4113, %v4177
    %v4242 = vxor.u32 %v4114, %v4178
    %v4243 = vxor.u32 %v4115, %v4179
    %v4244 = vxor.u32 %v4116, %v4180
    %v4245 = vxor.u32 %v4117, %v4181
    %v4246 = vxor.u32 %v4118, %v4182
    %v4247 = vxor.u32 %v4119, %v4183
    %v4248 = vxor.u32 %v4120, %v4184
    %v4249 = vxor.u32 %v4121, %v4185
    %v4250 = vxor.u32 %v4122, %v4186
    %v4251 = vxor.u32 %v4123, %v4187
    %v4252 = vxor.u32 %v4124, %v4188
    %v4253 = vxor.u32 %v4125, %v4189
    %v4254 = vxor.u32 %v4126, %v4190
    %v4255 = vxor.u32 %v4127, %v4191
    %v4256 = vxor.u32 %v4128, %v4192
    %v4257 = vxor.u32 %v4129, %v4193
    %v4258 = vxor.u32 %v4130, %v4194
    %v4259 = vxor.u32 %v4131, %v4195
    %v4260 = vxor.u32 %v4132, %v4196
    %v4261 = vxor.u32 %v4133, %v4197
    %v4262 = vxor.u32 %v4134, %v4198
    %v4263 = vxor.u32 %v4135, %v4199
    %v4264 = vxor.u32 %v4136, %v4200
    %v4265 = vxor.u32 %v4137, %v4201
    %v4266 = vxor.u32 %v4138, %v4202
    %v4267 = vxor.u32 %v4139, %v4203
    %v4268 = vxor.u32 %v4140, %v4204
    %v4269 = vxor.u32 %v4141, %v4205
    %v4270 = vxor.u32 %v4142, %v4206
    %v4271 = vxor.u32 %v4143, %v4207
    %v4272 = vxor.u32 %v4144, %v4208
    %v4273 = vxor.u32 %v4145, %v4209
    %v4274 = vxor.u32 %v4146, %v4210
    %v4275 = vxor.u32 %v4147, %v4211
    %v4276 = vxor.u32 %v4148, %v4212
    %v4277 = vxor.u32 %v4149, %v4213
    %v4278 = vxor.u32 %v4150, %v4214
    %v4279 = vxor.u32 %v4151, %v4215
    %v4280 = vxor.u32 %v4152, %v4216
    %v4281 = vxor.u32 %v4153, %v4217
    %v4282 = vxor.u32 %v4154, %v4218
    %v4283 = vxor.u32 %v4155, %v4219
    %v4284 = vxor.u32 %v4156, %v4220
    %v4285 = vxor.u32 %v4157, %v4221
    %v4286 = vxor.u32 %v4158, %v4222
    %v4287 = vxor.u32 %v4159, %v4223
    %v4288 = vxor.u32 %v4160, %v4224
    %vm4289 = vcmp.ge.u32.totalorder %v4225, 2147483648
    %vm4290 = vcmp.ge.u32.totalorder %v4226, 2147483648
    %vm4291 = vcmp.ge.u32.totalorder %v4227, 2147483648
    %vm4292 = vcmp.ge.u32.totalorder %v4228, 2147483648
    %vm4293 = vcmp.ge.u32.totalorder %v4229, 2147483648
    %vm4294 = vcmp.ge.u32.totalorder %v4230, 2147483648
    %vm4295 = vcmp.ge.u32.totalorder %v4231, 2147483648
    %vm4296 = vcmp.ge.u32.totalorder %v4232, 2147483648
    %vm4297 = vcmp.ge.u32.totalorder %v4233, 2147483648
    %vm4298 = vcmp.ge.u32.totalorder %v4234, 2147483648
    %vm4299 = vcmp.ge.u32.totalorder %v4235, 2147483648
    %vm4300 = vcmp.ge.u32.totalorder %v4236, 2147483648
    %vm4301 = vcmp.ge.u32.totalorder %v4237, 2147483648
    %vm4302 = vcmp.ge.u32.totalorder %v4238, 2147483648
    %vm4303 = vcmp.ge.u32.totalorder %v4239, 2147483648
    %vm4304 = vcmp.ge.u32.totalorder %v4240, 2147483648
    %vm4305 = vcmp.ge.u32.totalorder %v4241, 2147483648
    %vm4306 = vcmp.ge.u32.totalorder %v4242, 2147483648
    %vm4307 = vcmp.ge.u32.totalorder %v4243, 2147483648
    %vm4308 = vcmp.ge.u32.totalorder %v4244, 2147483648
    %vm4309 = vcmp.ge.u32.totalorder %v4245, 2147483648
    %vm4310 = vcmp.ge.u32.totalorder %v4246, 2147483648
    %vm4311 = vcmp.ge.u32.totalorder %v4247, 2147483648
    %vm4312 = vcmp.ge.u32.totalorder %v4248, 2147483648
    %vm4313 = vcmp.ge.u32.totalorder %v4249, 2147483648
    %vm4314 = vcmp.ge.u32.totalorder %v4250, 2147483648
    %vm4315 = vcmp.ge.u32.totalorder %v4251, 2147483648
    %vm4316 = vcmp.ge.u32.totalorder %v4252, 2147483648
    %vm4317 = vcmp.ge.u32.totalorder %v4253, 2147483648
    %vm4318 = vcmp.ge.u32.totalorder %v4254, 2147483648
    %vm4319 = vcmp.ge.u32.totalorder %v4255, 2147483648
    %vm4320 = vcmp.ge.u32.totalorder %v4256, 2147483648
    %vm4321 = vcmp.ge.u32.totalorder %v4257, 2147483648
    %vm4322 = vcmp.ge.u32.totalorder %v4258, 2147483648
    %vm4323 = vcmp.ge.u32.totalorder %v4259, 2147483648
    %vm4324 = vcmp.ge.u32.totalorder %v4260, 2147483648
    %vm4325 = vcmp.ge.u32.totalorder %v4261, 2147483648
    %vm4326 = vcmp.ge.u32.totalorder %v4262, 2147483648
    %vm4327 = vcmp.ge.u32.totalorder %v4263, 2147483648
    %vm4328 = vcmp.ge.u32.totalorder %v4264, 2147483648
    %vm4329 = vcmp.ge.u32.totalorder %v4265, 2147483648
    %vm4330 = vcmp.ge.u32.totalorder %v4266, 2147483648
    %vm4331 = vcmp.ge.u32.totalorder %v4267, 2147483648
    %vm4332 = vcmp.ge.u32.totalorder %v4268, 2147483648
    %vm4333 = vcmp.ge.u32.totalorder %v4269, 2147483648
    %vm4334 = vcmp.ge.u32.totalorder %v4270, 2147483648
    %vm4335 = vcmp.ge.u32.totalorder %v4271, 2147483648
    %vm4336 = vcmp.ge.u32.totalorder %v4272, 2147483648
    %vm4337 = vcmp.ge.u32.totalorder %v4273, 2147483648
    %vm4338 = vcmp.ge.u32.totalorder %v4274, 2147483648
    %vm4339 = vcmp.ge.u32.totalorder %v4275, 2147483648
    %vm4340 = vcmp.ge.u32.totalorder %v4276, 2147483648
    %vm4341 = vcmp.ge.u32.totalorder %v4277, 2147483648
    %vm4342 = vcmp.ge.u32.totalorder %v4278, 2147483648
    %vm4343 = vcmp.ge.u32.totalorder %v4279, 2147483648
    %vm4344 = vcmp.ge.u32.totalorder %v4280, 2147483648
    %vm4345 = vcmp.ge.u32.totalorder %v4281, 2147483648
    %vm4346 = vcmp.ge.u32.totalorder %v4282, 2147483648
    %vm4347 = vcmp.ge.u32.totalorder %v4283, 2147483648
    %vm4348 = vcmp.ge.u32.totalorder %v4284, 2147483648
    %vm4349 = vcmp.ge.u32.totalorder %v4285, 2147483648
    %vm4350 = vcmp.ge.u32.totalorder %v4286, 2147483648
    %vm4351 = vcmp.ge.u32.totalorder %v4287, 2147483648
    %vm4352 = vcmp.ge.u32.totalorder %v4288, 2147483648
    %v4353 = vmul.f32 %v3646, 2.0
    %v4354 = vmul.f32 %v3647, 2.0
    %v4355 = vmul.f32 %v3648, 2.0
    %v4356 = vmul.f32 %v3649, 2.0
    %v4357 = vmul.f32 %v3650, 2.0
    %v4358 = vmul.f32 %v3651, 2.0
    %v4359 = vmul.f32 %v3652, 2.0
    %v4360 = vmul.f32 %v3653, 2.0
    %v4361 = vmul.f32 %v3654, 2.0
    %v4362 = vmul.f32 %v3655, 2.0
    %v4363 = vmul.f32 %v3656, 2.0
    %v4364 = vmul.f32 %v3657, 2.0
    %v4365 = vmul.f32 %v3658, 2.0
    %v4366 = vmul.f32 %v3659, 2.0
    %v4367 = vmul.f32 %v3660, 2.0
    %v4368 = vmul.f32 %v3661, 2.0
    %v4369 = vmul.f32 %v3662, 2.0
    %v4370 = vmul.f32 %v3663, 2.0
    %v4371 = vmul.f32 %v3664, 2.0
    %v4372 = vmul.f32 %v3665, 2.0
    %v4373 = vmul.f32 %v3666, 2.0
    %v4374 = vmul.f32 %v3667, 2.0
    %v4375 = vmul.f32 %v3668, 2.0
    %v4376 = vmul.f32 %v3669, 2.0
    %v4377 = vmul.f32 %v3670, 2.0
    %v4378 = vmul.f32 %v3671, 2.0
    %v4379 = vmul.f32 %v3672, 2.0
    %v4380 = vmul.f32 %v3673, 2.0
    %v4381 = vmul.f32 %v3674, 2.0
    %v4382 = vmul.f32 %v3675, 2.0
    %v4383 = vmul.f32 %v3676, 2.0
    %v4384 = vmul.f32 %v3677, 2.0
    %v4385 = vmul.f32 %v3678, 2.0
    %v4386 = vmul.f32 %v3679, 2.0
    %v4387 = vmul.f32 %v3680, 2.0
    %v4388 = vmul.f32 %v3681, 2.0
    %v4389 = vmul.f32 %v3682, 2.0
    %v4390 = vmul.f32 %v3683, 2.0
    %v4391 = vmul.f32 %v3684, 2.0
    %v4392 = vmul.f32 %v3685, 2.0
    %v4393 = vmul.f32 %v3686, 2.0
    %v4394 = vmul.f32 %v3687, 2.0
    %v4395 = vmul.f32 %v3688, 2.0
    %v4396 = vmul.f32 %v3689, 2.0
    %v4397 = vmul.f32 %v3690, 2.0
    %v4398 = vmul.f32 %v3691, 2.0
    %v4399 = vmul.f32 %v3692, 2.0
    %v4400 = vmul.f32 %v3693, 2.0
    %v4401 = vmul.f32 %v3694, 2.0
    %v4402 = vmul.f32 %v3695, 2.0
    %v4403 = vmul.f32 %v3696, 2.0
    %v4404 = vmul.f32 %v3697, 2.0
    %v4405 = vmul.f32 %v3698, 2.0
    %v4406 = vmul.f32 %v3699, 2.0
    %v4407 = vmul.f32 %v3700, 2.0
    %v4408 = vmul.f32 %v3701, 2.0
    %v4409 = vmul.f32 %v3702, 2.0
    %v4410 = vmul.f32 %v3703, 2.0
    %v4411 = vmul.f32 %v3704, 2.0
    %v4412 = vmul.f32 %v3705, 2.0
    %v4413 = vmul.f32 %v3706, 2.0
    %v4414 = vmul.f32 %v3707, 2.0
    %v4415 = vmul.f32 %v3708, 2.0
    %v4416 = vmul.f32 %v3709, 2.0
    %v4417 = vsel %vm4289, %v4353, 0.0
    %v4418 = vsel %vm4290, %v4354, 0.0
    %v4419 = vsel %vm4291, %v4355, 0.0
    %v4420 = vsel %vm4292, %v4356, 0.0
    %v4421 = vsel %vm4293, %v4357, 0.0
    %v4422 = vsel %vm4294, %v4358, 0.0
    %v4423 = vsel %vm4295, %v4359, 0.0
    %v4424 = vsel %vm4296, %v4360, 0.0
    %v4425 = vsel %vm4297, %v4361, 0.0
    %v4426 = vsel %vm4298, %v4362, 0.0
    %v4427 = vsel %vm4299, %v4363, 0.0
    %v4428 = vsel %vm4300, %v4364, 0.0
    %v4429 = vsel %vm4301, %v4365, 0.0
    %v4430 = vsel %vm4302, %v4366, 0.0
    %v4431 = vsel %vm4303, %v4367, 0.0
    %v4432 = vsel %vm4304, %v4368, 0.0
    %v4433 = vsel %vm4305, %v4369, 0.0
    %v4434 = vsel %vm4306, %v4370, 0.0
    %v4435 = vsel %vm4307, %v4371, 0.0
    %v4436 = vsel %vm4308, %v4372, 0.0
    %v4437 = vsel %vm4309, %v4373, 0.0
    %v4438 = vsel %vm4310, %v4374, 0.0
    %v4439 = vsel %vm4311, %v4375, 0.0
    %v4440 = vsel %vm4312, %v4376, 0.0
    %v4441 = vsel %vm4313, %v4377, 0.0
    %v4442 = vsel %vm4314, %v4378, 0.0
    %v4443 = vsel %vm4315, %v4379, 0.0
    %v4444 = vsel %vm4316, %v4380, 0.0
    %v4445 = vsel %vm4317, %v4381, 0.0
    %v4446 = vsel %vm4318, %v4382, 0.0
    %v4447 = vsel %vm4319, %v4383, 0.0
    %v4448 = vsel %vm4320, %v4384, 0.0
    %v4449 = vsel %vm4321, %v4385, 0.0
    %v4450 = vsel %vm4322, %v4386, 0.0
    %v4451 = vsel %vm4323, %v4387, 0.0
    %v4452 = vsel %vm4324, %v4388, 0.0
    %v4453 = vsel %vm4325, %v4389, 0.0
    %v4454 = vsel %vm4326, %v4390, 0.0
    %v4455 = vsel %vm4327, %v4391, 0.0
    %v4456 = vsel %vm4328, %v4392, 0.0
    %v4457 = vsel %vm4329, %v4393, 0.0
    %v4458 = vsel %vm4330, %v4394, 0.0
    %v4459 = vsel %vm4331, %v4395, 0.0
    %v4460 = vsel %vm4332, %v4396, 0.0
    %v4461 = vsel %vm4333, %v4397, 0.0
    %v4462 = vsel %vm4334, %v4398, 0.0
    %v4463 = vsel %vm4335, %v4399, 0.0
    %v4464 = vsel %vm4336, %v4400, 0.0
    %v4465 = vsel %vm4337, %v4401, 0.0
    %v4466 = vsel %vm4338, %v4402, 0.0
    %v4467 = vsel %vm4339, %v4403, 0.0
    %v4468 = vsel %vm4340, %v4404, 0.0
    %v4469 = vsel %vm4341, %v4405, 0.0
    %v4470 = vsel %vm4342, %v4406, 0.0
    %v4471 = vsel %vm4343, %v4407, 0.0
    %v4472 = vsel %vm4344, %v4408, 0.0
    %v4473 = vsel %vm4345, %v4409, 0.0
    %v4474 = vsel %vm4346, %v4410, 0.0
    %v4475 = vsel %vm4347, %v4411, 0.0
    %v4476 = vsel %vm4348, %v4412, 0.0
    %v4477 = vsel %vm4349, %v4413, 0.0
    %v4478 = vsel %vm4350, %v4414, 0.0
    %v4479 = vsel %vm4351, %v4415, 0.0
    %v4480 = vsel %vm4352, %v4416, 0.0
    %v4481 = vpack.c.bf16 %v4419, %v4417
    %v4482 = vpack.c.bf16 %v4420, %v4418
    %v4483 = vpack.c.bf16 %v4423, %v4421
    %v4484 = vpack.c.bf16 %v4424, %v4422
    %v4485 = vpack.c.bf16 %v4427, %v4425
    %v4486 = vpack.c.bf16 %v4428, %v4426
    %v4487 = vpack.c.bf16 %v4431, %v4429
    %v4488 = vpack.c.bf16 %v4432, %v4430
    %v4489 = vpack.c.bf16 %v4435, %v4433
    %v4490 = vpack.c.bf16 %v4436, %v4434
    %v4491 = vpack.c.bf16 %v4439, %v4437
    %v4492 = vpack.c.bf16 %v4440, %v4438
    %v4493 = vpack.c.bf16 %v4443, %v4441
    %v4494 = vpack.c.bf16 %v4444, %v4442
    %v4495 = vpack.c.bf16 %v4447, %v4445
    %v4496 = vpack.c.bf16 %v4448, %v4446
    %v4497 = vpack.c.bf16 %v4451, %v4449
    %v4498 = vpack.c.bf16 %v4452, %v4450
    %v4499 = vpack.c.bf16 %v4455, %v4453
    %v4500 = vpack.c.bf16 %v4456, %v4454
    %v4501 = vpack.c.bf16 %v4459, %v4457
    %v4502 = vpack.c.bf16 %v4460, %v4458
    %v4503 = vpack.c.bf16 %v4463, %v4461
    %v4504 = vpack.c.bf16 %v4464, %v4462
    %v4505 = vpack.c.bf16 %v4467, %v4465
    %v4506 = vpack.c.bf16 %v4468, %v4466
    %v4507 = vpack.c.bf16 %v4471, %v4469
    %v4508 = vpack.c.bf16 %v4472, %v4470
    %v4509 = vpack.c.bf16 %v4475, %v4473
    %v4510 = vpack.c.bf16 %v4476, %v4474
    %v4511 = vpack.c.bf16 %v4479, %v4477
    %v4512 = vpack.c.bf16 %v4480, %v4478
    %v4513 = vld [vmem:[#allocation9] sm:$0xf]
    %v4514 = vld [vmem:[#allocation9 + $0x4] sm:$0xf]
    %v4515 = vld [vmem:[#allocation9 + $0x8] sm:$0xf]
    %v4516 = vld [vmem:[#allocation9 + $0xc] sm:$0xf]
    %v4517 = vld [vmem:[#allocation9 + $0x10] sm:$0xf]
    %v4518 = vld [vmem:[#allocation9 + $0x14] sm:$0xf]
    %v4519 = vld [vmem:[#allocation9 + $0x18] sm:$0xf]
    %v4520 = vld [vmem:[#allocation9 + $0x1c] sm:$0xf]
    %v4521 = vld [vmem:[#allocation9 + $0x20] sm:$0xf]
    %v4522 = vld [vmem:[#allocation9 + $0x24] sm:$0xf]
    %v4523 = vld [vmem:[#allocation9 + $0x28] sm:$0xf]
    %v4524 = vld [vmem:[#allocation9 + $0x2c] sm:$0xf]
    %v4525 = vld [vmem:[#allocation9 + $0x30] sm:$0xf]
    %v4526 = vld [vmem:[#allocation9 + $0x34] sm:$0xf]
    %v4527 = vld [vmem:[#allocation9 + $0x38] sm:$0xf]
    %v4528 = vld [vmem:[#allocation9 + $0x3c] sm:$0xf]
    %v4529 = vld [vmem:[#allocation9 + $0x40] sm:$0xf]
    %v4530 = vld [vmem:[#allocation9 + $0x44] sm:$0xf]
    %v4531 = vld [vmem:[#allocation9 + $0x48] sm:$0xf]
    %v4532 = vld [vmem:[#allocation9 + $0x4c] sm:$0xf]
    %v4533 = vld [vmem:[#allocation9 + $0x50] sm:$0xf]
    %v4534 = vld [vmem:[#allocation9 + $0x54] sm:$0xf]
    %v4535 = vld [vmem:[#allocation9 + $0x58] sm:$0xf]
    %v4536 = vld [vmem:[#allocation9 + $0x5c] sm:$0xf]
    %v4537 = vld [vmem:[#allocation9 + $0x60] sm:$0xf]
    %v4538 = vld [vmem:[#allocation9 + $0x64] sm:$0xf]
    %v4539 = vld [vmem:[#allocation9 + $0x68] sm:$0xf]
    %v4540 = vld [vmem:[#allocation9 + $0x6c] sm:$0xf]
    %v4541 = vld [vmem:[#allocation9 + $0x70] sm:$0xf]
    %v4542 = vld [vmem:[#allocation9 + $0x74] sm:$0xf]
    %v4543 = vld [vmem:[#allocation9 + $0x78] sm:$0xf]
    %v4544 = vld [vmem:[#allocation9 + $0x7c] sm:$0xf]
    %v4545 = vld [vmem:[%s7] sm:$0x1]
    %v4547 = vlaneseq
    %v4548 = vshrl.u32 %v4547, 7
    %v4549 = vsub.s32 0, %v4548
    %v4550 = vrot.slane %v4545, %v4549
    %v4584 = vunpack.c.l.b16 %v4513
    %v4585 = vunpack.c.l.b16 %v4514
    %v4586 = vunpack.c.l.b16 %v4515
    %v4587 = vunpack.c.l.b16 %v4516
    %v4588 = vunpack.c.l.b16 %v4517
    %v4589 = vunpack.c.l.b16 %v4518
    %v4590 = vunpack.c.l.b16 %v4519
    %v4591 = vunpack.c.l.b16 %v4520
    %v4592 = vunpack.c.l.b16 %v4521
    %v4593 = vunpack.c.l.b16 %v4522
    %v4594 = vunpack.c.l.b16 %v4523
    %v4595 = vunpack.c.l.b16 %v4524
    %v4596 = vunpack.c.l.b16 %v4525
    %v4597 = vunpack.c.l.b16 %v4526
    %v4598 = vunpack.c.l.b16 %v4527
    %v4599 = vunpack.c.l.b16 %v4528
    %v4600 = vunpack.c.l.b16 %v4529
    %v4601 = vunpack.c.l.b16 %v4530
    %v4602 = vunpack.c.l.b16 %v4531
    %v4603 = vunpack.c.l.b16 %v4532
    %v4604 = vunpack.c.l.b16 %v4533
    %v4605 = vunpack.c.l.b16 %v4534
    %v4606 = vunpack.c.l.b16 %v4535
    %v4607 = vunpack.c.l.b16 %v4536
    %v4608 = vunpack.c.l.b16 %v4537
    %v4609 = vunpack.c.l.b16 %v4538
    %v4610 = vunpack.c.l.b16 %v4539
    %v4611 = vunpack.c.l.b16 %v4540
    %v4612 = vunpack.c.l.b16 %v4541
    %v4613 = vunpack.c.l.b16 %v4542
    %v4614 = vunpack.c.l.b16 %v4543
    %v4615 = vunpack.c.l.b16 %v4544
    %v4616 = vpack.c.b16 %v4585, %v4584
    %v4617 = vpack.c.b16 %v4587, %v4586
    %v4618 = vpack.c.b16 %v4589, %v4588
    %v4619 = vpack.c.b16 %v4591, %v4590
    %v4620 = vpack.c.b16 %v4593, %v4592
    %v4621 = vpack.c.b16 %v4595, %v4594
    %v4622 = vpack.c.b16 %v4597, %v4596
    %v4623 = vpack.c.b16 %v4599, %v4598
    %v4624 = vpack.c.b16 %v4601, %v4600
    %v4625 = vpack.c.b16 %v4603, %v4602
    %v4626 = vpack.c.b16 %v4605, %v4604
    %v4627 = vpack.c.b16 %v4607, %v4606
    %v4628 = vpack.c.b16 %v4609, %v4608
    %v4629 = vpack.c.b16 %v4611, %v4610
    %v4630 = vpack.c.b16 %v4613, %v4612
    %v4631 = vpack.c.b16 %v4615, %v4614
    %4648 = vmatprep.subr.bf16.mxu0 0
    %4649 = vmatpush1.bf16.msra.mxu0 %v4616
    %4650 = vmatprep.subr.bf16.mxu0 0
    %4651 = vmatpush1.bf16.msra.mxu0 %v4617
    %4652 = vmatprep.subr.bf16.mxu0 0
    %4653 = vmatpush1.bf16.msra.mxu0 %v4618
    %4654 = vmatprep.subr.bf16.mxu0 0
    %4655 = vmatpush1.bf16.msra.mxu0 %v4619
    %4656 = vmatprep.subr.bf16.mxu0 0
    %4657 = vmatpush1.bf16.msra.mxu0 %v4620
    %4658 = vmatprep.subr.bf16.mxu0 0
    %4659 = vmatpush1.bf16.msra.mxu0 %v4621
    %4660 = vmatprep.subr.bf16.mxu0 0
    %4661 = vmatpush1.bf16.msra.mxu0 %v4622
    %4662 = vmatprep.subr.bf16.mxu0 0
    %4663 = vmatpush1.bf16.msra.mxu0 %v4623
    %4664 = vmatprep.subr.bf16.mxu0 0
    %4665 = vmatpush1.bf16.msra.mxu0 %v4624
    %4666 = vmatprep.subr.bf16.mxu0 0
    %4667 = vmatpush1.bf16.msra.mxu0 %v4625
    %4668 = vmatprep.subr.bf16.mxu0 0
    %4669 = vmatpush1.bf16.msra.mxu0 %v4626
    %4670 = vmatprep.subr.bf16.mxu0 0
    %4671 = vmatpush1.bf16.msra.mxu0 %v4627
    %4672 = vmatprep.subr.bf16.mxu0 0
    %4673 = vmatpush1.bf16.msra.mxu0 %v4628
    %4674 = vmatprep.subr.bf16.mxu0 0
    %4675 = vmatpush1.bf16.msra.mxu0 %v4629
    %4676 = vmatprep.subr.bf16.mxu0 0
    %4677 = vmatpush1.bf16.msra.mxu0 %v4630
    %4678 = vmatprep.subr.bf16.mxu0 0
    %4679 = vmatpush1.bf16.msra.mxu0 %v4631
    %4680 = vmatprep.mubr.bf16.mxu0 %v4482
    %4681 = vmatmul.mubr.bf16.gmra.mrb[0].mxu0 %v4481
    %v4682 = vpop.f32.mrb[0].mxu0
    %v4683 = vadd.f32 %v4550, %v4682
    %v4684 = vpop.f32.mrb[0].mxu0
    %v4685 = vpop.f32.mrb[0].mxu0
    %v4686 = vadd.f32 %v4550, %v4685
    %v4687 = vpop.f32.mrb[0].mxu0
    %4688 = vmatprep.mubr.bf16.mxu0 %v4484
    %4689 = vmatmul.mubr.bf16.gmra.mrb[0].mxu0 %v4483
    %v4690 = vpop.f32.mrb[0].mxu0
    %v4691 = vadd.f32 %v4550, %v4690
    %v4692 = vpop.f32.mrb[0].mxu0
    %v4693 = vpop.f32.mrb[0].mxu0
    %v4694 = vadd.f32 %v4550, %v4693
    %v4695 = vpop.f32.mrb[0].mxu0
    %4696 = vmatprep.mubr.bf16.mxu0 %v4486
    %4697 = vmatmul.mubr.bf16.gmra.mrb[0].mxu0 %v4485
    %v4698 = vpop.f32.mrb[0].mxu0
    %v4699 = vadd.f32 %v4550, %v4698
    %v4700 = vpop.f32.mrb[0].mxu0
    %v4701 = vpop.f32.mrb[0].mxu0
    %v4702 = vadd.f32 %v4550, %v4701
    %v4703 = vpop.f32.mrb[0].mxu0
    %4704 = vmatprep.mubr.bf16.mxu0 %v4488
    %4705 = vmatmul.mubr.bf16.gmra.mrb[0].mxu0 %v4487
    %v4706 = vpop.f32.mrb[0].mxu0
    %v4707 = vadd.f32 %v4550, %v4706
    %v4708 = vpop.f32.mrb[0].mxu0
    %v4709 = vpop.f32.mrb[0].mxu0
    %v4710 = vadd.f32 %v4550, %v4709
    %v4711 = vpop.f32.mrb[0].mxu0
    %4712 = vmatprep.mubr.bf16.mxu0 %v4490
    %4713 = vmatmul.mubr.bf16.gmra.mrb[0].mxu0 %v4489
    %v4714 = vpop.f32.mrb[0].mxu0
    %v4715 = vadd.f32 %v4550, %v4714
    %v4716 = vpop.f32.mrb[0].mxu0
    %v4717 = vpop.f32.mrb[0].mxu0
    %v4718 = vadd.f32 %v4550, %v4717
    %v4719 = vpop.f32.mrb[0].mxu0
    %4720 = vmatprep.mubr.bf16.mxu0 %v4492
    %4721 = vmatmul.mubr.bf16.gmra.mrb[0].mxu0 %v4491
    %v4722 = vpop.f32.mrb[0].mxu0
    %v4723 = vadd.f32 %v4550, %v4722
    %v4724 = vpop.f32.mrb[0].mxu0
    %v4725 = vpop.f32.mrb[0].mxu0
    %v4726 = vadd.f32 %v4550, %v4725
    %v4727 = vpop.f32.mrb[0].mxu0
    %4728 = vmatprep.mubr.bf16.mxu0 %v4494
    %4729 = vmatmul.mubr.bf16.gmra.mrb[0].mxu0 %v4493
    %v4730 = vpop.f32.mrb[0].mxu0
    %v4731 = vadd.f32 %v4550, %v4730
    %v4732 = vpop.f32.mrb[0].mxu0
    %v4733 = vpop.f32.mrb[0].mxu0
    %v4734 = vadd.f32 %v4550, %v4733
    %v4735 = vpop.f32.mrb[0].mxu0
    %4736 = vmatprep.mubr.bf16.mxu0 %v4496
    %4737 = vmatmul.mubr.bf16.gmra.mrb[0].mxu0 %v4495
    %v4738 = vpop.f32.mrb[0].mxu0
    %v4739 = vadd.f32 %v4550, %v4738
    %v4740 = vpop.f32.mrb[0].mxu0
    %v4741 = vpop.f32.mrb[0].mxu0
    %v4742 = vadd.f32 %v4550, %v4741
    %v4743 = vpop.f32.mrb[0].mxu0
    %4744 = vmatprep.mubr.bf16.mxu0 %v4498
    %4745 = vmatmul.mubr.bf16.gmra.mrb[0].mxu0 %v4497
    %v4746 = vpop.f32.mrb[0].mxu0
    %v4747 = vadd.f32 %v4550, %v4746
    %v4748 = vpop.f32.mrb[0].mxu0
    %v4749 = vpop.f32.mrb[0].mxu0
    %v4750 = vadd.f32 %v4550, %v4749
    %v4751 = vpop.f32.mrb[0].mxu0
    %4752 = vmatprep.mubr.bf16.mxu0 %v4500
    %4753 = vmatmul.mubr.bf16.gmra.mrb[0].mxu0 %v4499
    %v4754 = vpop.f32.mrb[0].mxu0
    %v4755 = vadd.f32 %v4550, %v4754
    %v4756 = vpop.f32.mrb[0].mxu0
    %v4757 = vpop.f32.mrb[0].mxu0
    %v4758 = vadd.f32 %v4550, %v4757
    %v4759 = vpop.f32.mrb[0].mxu0
    %4760 = vmatprep.mubr.bf16.mxu0 %v4502
    %4761 = vmatmul.mubr.bf16.gmra.mrb[0].mxu0 %v4501
    %v4762 = vpop.f32.mrb[0].mxu0
    %v4763 = vadd.f32 %v4550, %v4762
    %v4764 = vpop.f32.mrb[0].mxu0
    %v4765 = vpop.f32.mrb[0].mxu0
    %v4766 = vadd.f32 %v4550, %v4765
    %v4767 = vpop.f32.mrb[0].mxu0
    %4768 = vmatprep.mubr.bf16.mxu0 %v4504
    %4769 = vmatmul.mubr.bf16.gmra.mrb[0].mxu0 %v4503
    %v4770 = vpop.f32.mrb[0].mxu0
    %v4771 = vadd.f32 %v4550, %v4770
    %v4772 = vpop.f32.mrb[0].mxu0
    %v4773 = vpop.f32.mrb[0].mxu0
    %v4774 = vadd.f32 %v4550, %v4773
    %v4775 = vpop.f32.mrb[0].mxu0
    %4776 = vmatprep.mubr.bf16.mxu0 %v4506
    %4777 = vmatmul.mubr.bf16.gmra.mrb[0].mxu0 %v4505
    %v4778 = vpop.f32.mrb[0].mxu0
    %v4779 = vadd.f32 %v4550, %v4778
    %v4780 = vpop.f32.mrb[0].mxu0
    %v4781 = vpop.f32.mrb[0].mxu0
    %v4782 = vadd.f32 %v4550, %v4781
    %v4783 = vpop.f32.mrb[0].mxu0
    %4784 = vmatprep.mubr.bf16.mxu0 %v4508
    %4785 = vmatmul.mubr.bf16.gmra.mrb[0].mxu0 %v4507
    %v4786 = vpop.f32.mrb[0].mxu0
    %v4787 = vadd.f32 %v4550, %v4786
    %v4788 = vpop.f32.mrb[0].mxu0
    %v4789 = vpop.f32.mrb[0].mxu0
    %v4790 = vadd.f32 %v4550, %v4789
    %v4791 = vpop.f32.mrb[0].mxu0
    %4792 = vmatprep.mubr.bf16.mxu0 %v4510
    %4793 = vmatmul.mubr.bf16.gmra.mrb[0].mxu0 %v4509
    %v4794 = vpop.f32.mrb[0].mxu0
    %v4795 = vadd.f32 %v4550, %v4794
    %v4796 = vpop.f32.mrb[0].mxu0
    %v4797 = vpop.f32.mrb[0].mxu0
    %v4798 = vadd.f32 %v4550, %v4797
    %v4799 = vpop.f32.mrb[0].mxu0
    %4800 = vmatprep.mubr.bf16.mxu0 %v4512
    %4801 = vmatmul.mubr.bf16.gmra.mrb[0].mxu0 %v4511
    %v4802 = vpop.f32.mrb[0].mxu0
    %v4803 = vadd.f32 %v4550, %v4802
    %v4804 = vpop.f32.mrb[0].mxu0
    %v4805 = vpop.f32.mrb[0].mxu0
    %v4806 = vadd.f32 %v4550, %v4805
    %v4807 = vpop.f32.mrb[0].mxu0
    %4808 = vdwg.mxu0
    %4809 = vst [vmem:[#allocation11] sm:$0xff] %v4683
    %4810 = vst [vmem:[#allocation11 + $0x8] sm:$0xff] %v4686
    %4811 = vst [vmem:[#allocation11 + $0x10] sm:$0xff] %v4691
    %4812 = vst [vmem:[#allocation11 + $0x18] sm:$0xff] %v4694
    %4813 = vst [vmem:[#allocation11 + $0x20] sm:$0xff] %v4699
    %4814 = vst [vmem:[#allocation11 + $0x28] sm:$0xff] %v4702
    %4815 = vst [vmem:[#allocation11 + $0x30] sm:$0xff] %v4707
    %4816 = vst [vmem:[#allocation11 + $0x38] sm:$0xff] %v4710
    %4817 = vst [vmem:[#allocation11 + $0x40] sm:$0xff] %v4715
    %4818 = vst [vmem:[#allocation11 + $0x48] sm:$0xff] %v4718
    %4819 = vst [vmem:[#allocation11 + $0x50] sm:$0xff] %v4723
    %4820 = vst [vmem:[#allocation11 + $0x58] sm:$0xff] %v4726
    %4821 = vst [vmem:[#allocation11 + $0x60] sm:$0xff] %v4731
    %4822 = vst [vmem:[#allocation11 + $0x68] sm:$0xff] %v4734
    %4823 = vst [vmem:[#allocation11 + $0x70] sm:$0xff] %v4739
    %4824 = vst [vmem:[#allocation11 + $0x78] sm:$0xff] %v4742
    %4825 = vst [vmem:[#allocation11 + $0x80] sm:$0xff] %v4747
    %4826 = vst [vmem:[#allocation11 + $0x88] sm:$0xff] %v4750
    %4827 = vst [vmem:[#allocation11 + $0x90] sm:$0xff] %v4755
    %4828 = vst [vmem:[#allocation11 + $0x98] sm:$0xff] %v4758
    %4829 = vst [vmem:[#allocation11 + $0xa0] sm:$0xff] %v4763
    %4830 = vst [vmem:[#allocation11 + $0xa8] sm:$0xff] %v4766
    %4831 = vst [vmem:[#allocation11 + $0xb0] sm:$0xff] %v4771
    %4832 = vst [vmem:[#allocation11 + $0xb8] sm:$0xff] %v4774
    %4833 = vst [vmem:[#allocation11 + $0xc0] sm:$0xff] %v4779
    %4834 = vst [vmem:[#allocation11 + $0xc8] sm:$0xff] %v4782
    %4835 = vst [vmem:[#allocation11 + $0xd0] sm:$0xff] %v4787
    %4836 = vst [vmem:[#allocation11 + $0xd8] sm:$0xff] %v4790
    %4837 = vst [vmem:[#allocation11 + $0xe0] sm:$0xff] %v4795
    %4838 = vst [vmem:[#allocation11 + $0xe8] sm:$0xff] %v4798
    %4839 = vst [vmem:[#allocation11 + $0xf0] sm:$0xff] %v4803
    %4840 = vst [vmem:[#allocation11 + $0xf8] sm:$0xff] %v4806
    // Predicated region
    $region50: #{tpu_custom_call.1} parent=1 // pred_check
      _
    $region51: #{tpu_custom_call.1} parent=1 // pred_check_branch
      %4842 = sbr.rel (0) target = $region53
    $region52: #{tpu_custom_call.1} parent=1 // pred_region
      %s4844 = ssub.s32 4096, 4096
      %4845 = vsyncadd [#allocation5], %s4844
      %s4846 = sshll.u32 [#allocation11], 4
      %s4847 = int_to_ptr.vmem [resolvable:$true] %s4846
      %4852 = dma.vmem_to_hbm [thread:$0]  %s4847, 4096, %s8, [#allocation5], 128, 128, 8
    $region53: #{tpu_custom_call.1} parent=1 // pred_fallthru
      _
    // Predicated region
    $region54: #{tpu_custom_call.1} parent=1 // pred_check
      _
    $region55: #{tpu_custom_call.1} parent=1 // pred_check_branch
      %4854 = sbr.rel (0) target = $region57
    $region56: #{tpu_custom_call.1} parent=1 // pred_region
      %4855 = dma.done [#allocation5], 4096
    $region57: #{tpu_custom_call.1} parent=1 // pred_fallthru
      _
    %4856 = vsyncpa [#allocation4], 1
    %4857 = vsyncpa [#allocation7], 1
    %4858 = vsyncpa [#allocation10], 1
    %4859 = vsyncpa [#allocation5], 1

</llo_original>
